<compile_context>
chip_gen: v5e
topology: v5e:2x2
jax: 0.10.0
libtpu: 0.0.40
codegen_flags: <defaults>
</compile_context>

<pallas_src>
import jax
import jax.numpy as jnp
import numpy as np
from jax import lax
from jax.experimental import pallas as pl
from jax.experimental.pallas import tpu as pltpu


def _round_up(x, m):
    return (x + m - 1) // m * m


def make_lstm_kernel(num_layers, t_blk, b_pad, h_pad):
    Hp = h_pad
    Bp = b_pad

    def kernel(*refs):
        # refs = [x_ref,
        #         (w_ih, w_hh, b) * num_layers,
        #         fc_w, fc_b,
        #         out_ref,
        #         h_scr, c_scr, seq_scr, proj_scr]
        x_ref = refs[0]
        idx = 1
        layer_params = []
        for _ in range(num_layers):
            layer_params.append((refs[idx], refs[idx + 1], refs[idx + 2]))
            idx += 3
        fc_w_ref = refs[idx]
        fc_b_ref = refs[idx + 1]
        out_ref = refs[idx + 2]
        h_scr = refs[idx + 3]      # (L, Bp, Hp) persistent hidden state
        c_scr = refs[idx + 4]      # (L, Bp, Hp) persistent cell state
        seq_scr = refs[idx + 5]    # (T_BLK*Bp, Hp)   current layer's output sequence
        proj_scr = refs[idx + 6]   # (T_BLK*Bp, 4*Hp) hoisted input projection

        g = pl.program_id(0)
        last_layer = num_layers - 1

        @pl.when(g == 0)
        def _init():
            h_scr[...] = jnp.zeros_like(h_scr)
            c_scr[...] = jnp.zeros_like(c_scr)

        for layer, (w_ih_ref, w_hh_ref, b_ref) in enumerate(layer_params):
            # ---- Hoisted input projection: one big GEMM for the whole time block,
            #      bias folded in so the recurrent loop has no broadcast/add of b.
            if layer == 0:
                inp_seq = x_ref[...]           # (T_BLK*Bp, Ip), already flat
            else:
                inp_seq = seq_scr[...]         # previous layer's outputs this block
            proj_scr[...] = (
                jnp.dot(inp_seq, w_ih_ref[...], preferred_element_type=jnp.float32)
                + b_ref[...]
            )

            # Hoist the (read-only) recurrent weight load out of the time loop.
            w_hh = w_hh_ref[...]

            def step(t, carry, layer=layer, w_hh=w_hh):
                row = pl.multiple_of(t * Bp, Bp)
                h_prev = h_scr[layer]
                c_prev = c_scr[layer]
                # Only the small recurrent matmul stays inside the sequential loop.
                gates = proj_scr[pl.ds(row, Bp), :] + jnp.dot(
                    h_prev, w_hh, preferred_element_type=jnp.float32
                )  # (Bp, 4*Hp), PyTorch gate order i, f, g, o; 128-aligned slices.
                i_g = jax.nn.sigmoid(gates[:, 0 * Hp:1 * Hp])
                f_g = jax.nn.sigmoid(gates[:, 1 * Hp:2 * Hp])
                g_g = jnp.tanh(gates[:, 2 * Hp:3 * Hp])
                o_g = jax.nn.sigmoid(gates[:, 3 * Hp:4 * Hp])
                c_new = f_g * c_prev + i_g * g_g
                h_new = o_g * jnp.tanh(c_new)
                h_scr[layer] = h_new
                c_scr[layer] = c_new
                if layer != last_layer:
                    # Only needed to feed the next layer's hoisted projection.
                    seq_scr[pl.ds(row, Bp), :] = h_new
                return carry

            lax.fori_loop(0, t_blk, step, None, unroll=True)

        @pl.when(g == pl.num_programs(0) - 1)
        def _final():
            out_ref[...] = (
                jnp.dot(h_scr[last_layer], fc_w_ref[...],
                        preferred_element_type=jnp.float32)
                + fc_b_ref[...]
            )

    return kernel


def _pad_gate_weight(w, in_pad, H, H_pad):
    """(in_dim, 4H) -> (in_pad, 4*H_pad); each gate block starts at a 128-lane boundary."""
    in_dim = w.shape[0]
    out = jnp.zeros((in_pad, 4 * H_pad), jnp.float32)
    for k in range(4):
        out = out.at[:in_dim, k * H_pad:k * H_pad + H].set(w[:, k * H:(k + 1) * H])
    return out


def _pad_gate_bias(b, H, H_pad):
    out = jnp.zeros((1, 4 * H_pad), jnp.float32)
    for k in range(4):
        out = out.at[:, k * H_pad:k * H_pad + H].set(b[:, k * H:(k + 1) * H])
    return out


def lstm_pallas(x, params, hidden_size, output_size, t_blk=None):
    T, B, I = x.shape
    L = len(params["layers"])
    H = hidden_size

    # Hardware-friendly padding: sublane (8) on batch, lane (128) on feature dims.
    Bp = _round_up(B, 8)
    Hp = _round_up(H, 128)
    Ip = _round_up(I, 128)
    Op = _round_up(output_size, 128)

    if t_blk is None:
        for cand in (32, 16, 8, 4, 2, 1):
            if T % cand == 0:
                t_blk = cand
                break
    assert T % t_blk == 0, "time-block size must divide seq_len"
    n_blk = T // t_blk

    # Zero-pad the input (padded lanes/rows are inert and sliced off afterwards),
    # and flatten (T, Bp, Ip) -> (T*Bp, Ip) so the kernel does no in-VMEM reshape.
    x_p = jnp.zeros((T, Bp, Ip), jnp.float32).at[:, :B, :I].set(x)
    x_flat = x_p.reshape(T * Bp, Ip)

    in_arrays = [x_flat]
    in_specs = [pl.BlockSpec((t_blk * Bp, Ip), lambda g: (g, 0))]
    for l, (w_ih, w_hh, b) in enumerate(params["layers"]):
        in_pad = Ip if l == 0 else Hp
        w_ih_p = _pad_gate_weight(w_ih, in_pad, H, Hp)
        w_hh_p = _pad_gate_weight(w_hh, Hp, H, Hp)
        b_p = _pad_gate_bias(b, H, Hp)
        in_arrays += [w_ih_p, w_hh_p, b_p]
        in_specs += [
            pl.BlockSpec(w_ih_p.shape, lambda g: (0, 0)),
            pl.BlockSpec(w_hh_p.shape, lambda g: (0, 0)),
            pl.BlockSpec(b_p.shape, lambda g: (0, 0)),
        ]
    fc_w_p = jnp.zeros((Hp, Op), jnp.float32).at[:H, :output_size].set(params["fc_w"])
    fc_b_p = jnp.zeros((1, Op), jnp.float32).at[:, :output_size].set(params["fc_b"])
    in_arrays += [fc_w_p, fc_b_p]
    in_specs += [
        pl.BlockSpec(fc_w_p.shape, lambda g: (0, 0)),
        pl.BlockSpec(fc_b_p.shape, lambda g: (0, 0)),
    ]

    kernel = make_lstm_kernel(L, t_blk, Bp, Hp)

    out_p = pl.pallas_call(
        kernel,
        out_shape=jax.ShapeDtypeStruct((Bp, Op), jnp.float32),
        grid_spec=pltpu.PrefetchScalarGridSpec(
            num_scalar_prefetch=0,
            grid=(n_blk,),
            in_specs=in_specs,
            out_specs=pl.BlockSpec((Bp, Op), lambda g: (0, 0)),
            scratch_shapes=[
                pltpu.VMEM((L, Bp, Hp), jnp.float32),            # h state
                pltpu.VMEM((L, Bp, Hp), jnp.float32),            # c state
                pltpu.VMEM((t_blk * Bp, Hp), jnp.float32),       # per-block layer output seq
                pltpu.VMEM((t_blk * Bp, 4 * Hp), jnp.float32),   # hoisted X @ W_ih (+b)
            ],
        ),
        compiler_params=pltpu.CompilerParams(
            dimension_semantics=("arbitrary",),       # sequential recurrence over time blocks
            vmem_limit_bytes=32 * 1024 * 1024,
        ),
    )(*in_arrays)

    return out_p[:B, :output_size]


def lstm_ref(x, params, hidden_size):
    """Pure-JAX reference matching PyTorch nn.LSTM + fc(out[-1]) semantics."""
    T, B, I = x.shape
    L = len(params["layers"])
    H = hidden_size
    h0 = jnp.zeros((L, B, H), jnp.float32)
    c0 = jnp.zeros((L, B, H), jnp.float32)

    def step(carry, x_t):
        h, c = carry
        inp = x_t
        new_h, new_c = [], []
        for l, (w_ih, w_hh, b) in enumerate(params["layers"]):
            gates = inp @ w_ih + h[l] @ w_hh + b
            i_g = jax.nn.sigmoid(gates[:, 0 * H:1 * H])
            f_g = jax.nn.sigmoid(gates[:, 1 * H:2 * H])
            g_g = jnp.tanh(gates[:, 2 * H:3 * H])
            o_g = jax.nn.sigmoid(gates[:, 3 * H:4 * H])
            c_l = f_g * c[l] + i_g * g_g
            h_l = o_g * jnp.tanh(c_l)
            new_h.append(h_l)
            new_c.append(c_l)
            inp = h_l
        return (jnp.stack(new_h), jnp.stack(new_c)), inp

    (_, _), outs = jax.lax.scan(step, (h0, c0), x)
    return outs[-1] @ params["fc_w"] + params["fc_b"]


def init_params(key, input_size, hidden_size, num_layers, output_size):
    """Deterministic init mimicking PyTorch uniform(-1/sqrt(H), 1/sqrt(H))."""
    k = 1.0 / np.sqrt(hidden_size)
    layers = []
    for l in range(num_layers):
        in_dim = input_size if l == 0 else hidden_size
        key, k1, k2, k3, k4 = jax.random.split(key, 5)
        # Stored already transposed for x @ W: (in_dim, 4H) and (H, 4H).
        w_ih = jax.random.uniform(k1, (in_dim, 4 * hidden_size), jnp.float32, -k, k)
        w_hh = jax.random.uniform(k2, (hidden_size, 4 * hidden_size), jnp.float32, -k, k)
        b_ih = jax.random.uniform(k3, (4 * hidden_size,), jnp.float32, -k, k)
        b_hh = jax.random.uniform(k4, (4 * hidden_size,), jnp.float32, -k, k)
        b = (b_ih + b_hh).reshape(1, 4 * hidden_size)
        layers.append((w_ih, w_hh, b))
    key, k5, k6 = jax.random.split(key, 3)
    kf = 1.0 / np.sqrt(hidden_size)
    fc_w = jax.random.uniform(k5, (hidden_size, output_size), jnp.float32, -kf, kf)
    fc_b = jax.random.uniform(k6, (1, output_size), jnp.float32, -kf, kf)
    return {"layers": layers, "fc_w": fc_w, "fc_b": fc_b}


if __name__ == "__main__":
    seq_len = 16
    batch = 4
    input_size = 16
    hidden_size = 32
    num_layers = 2
    output_size = 8

    key = jax.random.PRNGKey(0)
    key, xk = jax.random.split(key)
    x = jax.random.normal(xk, (seq_len, batch, input_size), jnp.float32)
    params = init_params(key, input_size, hidden_size, num_layers, output_size)

    # t_blk=4 -> grid of 4 time blocks; exercises cross-block state carry.
    out = lstm_pallas(x, params, hidden_size, output_size, t_blk=4)
    out = jax.block_until_ready(out)

    ref = jax.block_until_ready(lstm_ref(x, params, hidden_size))
    np.testing.assert_allclose(np.asarray(out), np.asarray(ref), atol=1e-4, rtol=1e-4)

    print("KERNEL_OK")
</pallas_src>

<mosaic_0001>
module attributes {stable_mosaic.version = 11 : i64} {
  func.func @kernel(%arg0: i32, %arg1: memref<32x128xf32, #tpu.memory_space<vmem>>, %arg2: memref<128x512xf32, #tpu.memory_space<vmem>>, %arg3: memref<128x512xf32, #tpu.memory_space<vmem>>, %arg4: memref<1x512xf32, #tpu.memory_space<vmem>>, %arg5: memref<128x512xf32, #tpu.memory_space<vmem>>, %arg6: memref<128x512xf32, #tpu.memory_space<vmem>>, %arg7: memref<1x512xf32, #tpu.memory_space<vmem>>, %arg8: memref<128x128xf32, #tpu.memory_space<vmem>>, %arg9: memref<1x128xf32, #tpu.memory_space<vmem>>, %arg10: memref<8x128xf32, #tpu.memory_space<vmem>>, %arg11: memref<2x8x128xf32, #tpu.memory_space<vmem>>, %arg12: memref<2x8x128xf32, #tpu.memory_space<vmem>>, %arg13: memref<32x128xf32, #tpu.memory_space<vmem>>, %arg14: memref<32x512xf32, #tpu.memory_space<vmem>>) attributes {dimension_semantics = [#tpu.dimension_semantics<arbitrary>], iteration_bounds = array<i64: 4>, scalar_prefetch = 0 : i64, scratch_operands = 4 : i64, tpu.core_type = #tpu.core_type<tc>, window_params = [{transform_indices = @transform_0, window_bounds = array<i64: 32, 128>}, {pipeline_mode = #tpu.pipeline_mode<synchronous>, transform_indices = @transform_1, window_bounds = array<i64: 128, 512>}, {pipeline_mode = #tpu.pipeline_mode<synchronous>, transform_indices = @transform_2, window_bounds = array<i64: 128, 512>}, {pipeline_mode = #tpu.pipeline_mode<synchronous>, transform_indices = @transform_3, window_bounds = array<i64: 1, 512>}, {pipeline_mode = #tpu.pipeline_mode<synchronous>, transform_indices = @transform_4, window_bounds = array<i64: 128, 512>}, {pipeline_mode = #tpu.pipeline_mode<synchronous>, transform_indices = @transform_5, window_bounds = array<i64: 128, 512>}, {pipeline_mode = #tpu.pipeline_mode<synchronous>, transform_indices = @transform_6, window_bounds = array<i64: 1, 512>}, {pipeline_mode = #tpu.pipeline_mode<synchronous>, transform_indices = @transform_7, window_bounds = array<i64: 128, 128>}, {pipeline_mode = #tpu.pipeline_mode<synchronous>, transform_indices = @transform_8, window_bounds = array<i64: 1, 128>}, {pipeline_mode = #tpu.pipeline_mode<synchronous>, transform_indices = @transform_9, window_bounds = array<i64: 8, 128>}]} {
    %c0_i32 = arith.constant 0 : i32
    %0 = arith.cmpi eq, %arg0, %c0_i32 : i32
    %1 = arith.extui %0 : i1 to i32
    %c0_i32_0 = arith.constant 0 : i32
    %2 = arith.cmpi ne, %1, %c0_i32_0 : i32
    scf.if %2 {
      %cst_175 = arith.constant 0.000000e+00 : f32
      %358 = vector.broadcast %cst_175 : f32 to vector<2x8x128xf32>
      %c0_176 = arith.constant 0 : index
      %c0_177 = arith.constant 0 : index
      %c0_178 = arith.constant 0 : index
      %359 = vector.load %arg11[%c0_176, %c0_177, %c0_178] : memref<2x8x128xf32, #tpu.memory_space<vmem>>, vector<2x8x128xf32>
      tpu.vector_store %arg11[%c0_176, %c0_177, %c0_178], %358 {strides = array<i32>} : memref<2x8x128xf32, #tpu.memory_space<vmem>>, vector<2x8x128xf32>,
      %cst_179 = arith.constant 0.000000e+00 : f32
      %360 = vector.broadcast %cst_179 : f32 to vector<2x8x128xf32>
      %c0_180 = arith.constant 0 : index
      %c0_181 = arith.constant 0 : index
      %c0_182 = arith.constant 0 : index
      %361 = vector.load %arg12[%c0_180, %c0_181, %c0_182] : memref<2x8x128xf32, #tpu.memory_space<vmem>>, vector<2x8x128xf32>
      tpu.vector_store %arg12[%c0_180, %c0_181, %c0_182], %360 {strides = array<i32>} : memref<2x8x128xf32, #tpu.memory_space<vmem>>, vector<2x8x128xf32>,
    } else {
    }
    %c0 = arith.constant 0 : index
    %c0_1 = arith.constant 0 : index
    %3 = vector.load %arg1[%c0, %c0_1] : memref<32x128xf32, #tpu.memory_space<vmem>>, vector<32x128xf32>
    %c0_2 = arith.constant 0 : index
    %c0_3 = arith.constant 0 : index
    %4 = vector.load %arg2[%c0_2, %c0_3] : memref<128x512xf32, #tpu.memory_space<vmem>>, vector<128x512xf32>
    %cst = arith.constant dense<0.000000e+00> : vector<32x512xf32>
    %5 = tpu.matmul %3, %4, %cst {dimension_numbers = #tpu.dot_dimension_numbers<[1], [0], [0], [1], [0, 0, 1, 1], [], []>} : vector<32x128xf32>, vector<128x512xf32>, vector<32x512xf32> -> vector<32x512xf32>
    %c0_4 = arith.constant 0 : index
    %c0_5 = arith.constant 0 : index
    %6 = vector.load %arg4[%c0_4, %c0_5] : memref<1x512xf32, #tpu.memory_space<vmem>>, vector<1x512xf32>
    %7 = vector.broadcast %6 : vector<1x512xf32> to vector<32x512xf32>
    %8 = arith.addf %5, %7 : vector<32x512xf32>
    %c0_6 = arith.constant 0 : index
    %c0_7 = arith.constant 0 : index
    %9 = vector.load %arg14[%c0_6, %c0_7] : memref<32x512xf32, #tpu.memory_space<vmem>>, vector<32x512xf32>
    tpu.vector_store %arg14[%c0_6, %c0_7], %8 {strides = array<i32>} : memref<32x512xf32, #tpu.memory_space<vmem>>, vector<32x512xf32>,
    %c0_8 = arith.constant 0 : index
    %c0_9 = arith.constant 0 : index
    %10 = vector.load %arg3[%c0_8, %c0_9] : memref<128x512xf32, #tpu.memory_space<vmem>>, vector<128x512xf32>
    %c0_i32_10 = arith.constant 0 : i32
    %c8_i32 = arith.constant 8 : i32
    %11 = arith.muli %c0_i32_10, %c8_i32 : i32
    %12 = tpu.assume_multiple %11, 8 : i32
    %c0_11 = arith.constant 0 : index
    %c0_12 = arith.constant 0 : index
    %c0_13 = arith.constant 0 : index
    %13 = vector.load %arg11[%c0_11, %c0_12, %c0_13] : memref<2x8x128xf32, #tpu.memory_space<vmem>>, vector<1x8x128xf32>
    %14 = vector.shape_cast %13 : vector<1x8x128xf32> to vector<8x128xf32>
    %c0_14 = arith.constant 0 : index
    %c0_15 = arith.constant 0 : index
    %c0_16 = arith.constant 0 : index
    %15 = vector.load %arg12[%c0_14, %c0_15, %c0_16] : memref<2x8x128xf32, #tpu.memory_space<vmem>>, vector<1x8x128xf32>
    %16 = vector.shape_cast %15 : vector<1x8x128xf32> to vector<8x128xf32>
    %17 = arith.index_cast %12 : i32 to index
    %c0_17 = arith.constant 0 : index
    %18 = vector.load %arg14[%17, %c0_17] : memref<32x512xf32, #tpu.memory_space<vmem>>, vector<8x512xf32>
    %cst_18 = arith.constant dense<0.000000e+00> : vector<8x512xf32>
    %19 = tpu.matmul %14, %10, %cst_18 {dimension_numbers = #tpu.dot_dimension_numbers<[1], [0], [0], [1], [0, 0, 1, 1], [], []>} : vector<8x128xf32>, vector<128x512xf32>, vector<8x512xf32> -> vector<8x512xf32>
    %20 = arith.addf %18, %19 : vector<8x512xf32>
    %21 = vector.extract_strided_slice %20 {offsets = [0, 0], sizes = [8, 128], strides = [1, 1]} : vector<8x512xf32> to vector<8x128xf32>
    %22 = arith.negf %21 : vector<8x128xf32>
    %23 = math.exp %22 : vector<8x128xf32>
    %cst_19 = arith.constant 1.000000e+00 : f32
    %24 = vector.broadcast %cst_19 : f32 to vector<8x128xf32>
    %25 = arith.addf %24, %23 : vector<8x128xf32>
    %26 = arith.divf %24, %25 : vector<8x128xf32>
    %27 = vector.extract_strided_slice %20 {offsets = [0, 128], sizes = [8, 128], strides = [1, 1]} : vector<8x512xf32> to vector<8x128xf32>
    %28 = arith.negf %27 : vector<8x128xf32>
    %29 = math.exp %28 : vector<8x128xf32>
    %cst_20 = arith.constant 1.000000e+00 : f32
    %30 = vector.broadcast %cst_20 : f32 to vector<8x128xf32>
    %31 = arith.addf %30, %29 : vector<8x128xf32>
    %32 = arith.divf %30, %31 : vector<8x128xf32>
    %33 = vector.extract_strided_slice %20 {offsets = [0, 256], sizes = [8, 128], strides = [1, 1]} : vector<8x512xf32> to vector<8x128xf32>
    %34 = math.tanh %33 : vector<8x128xf32>
    %35 = vector.extract_strided_slice %20 {offsets = [0, 384], sizes = [8, 128], strides = [1, 1]} : vector<8x512xf32> to vector<8x128xf32>
    %36 = arith.negf %35 : vector<8x128xf32>
    %37 = math.exp %36 : vector<8x128xf32>
    %cst_21 = arith.constant 1.000000e+00 : f32
    %38 = vector.broadcast %cst_21 : f32 to vector<8x128xf32>
    %39 = arith.addf %38, %37 : vector<8x128xf32>
    %40 = arith.divf %38, %39 : vector<8x128xf32>
    %41 = arith.mulf %32, %16 : vector<8x128xf32>
    %42 = arith.mulf %26, %34 : vector<8x128xf32>
    %43 = arith.addf %41, %42 : vector<8x128xf32>
    %44 = math.tanh %43 : vector<8x128xf32>
    %45 = arith.mulf %40, %44 : vector<8x128xf32>
    %c0_22 = arith.constant 0 : index
    %c0_23 = arith.constant 0 : index
    %c0_24 = arith.constant 0 : index
    %46 = vector.load %arg11[%c0_22, %c0_23, %c0_24] : memref<2x8x128xf32, #tpu.memory_space<vmem>>, vector<1x8x128xf32>
    %47 = vector.shape_cast %46 : vector<1x8x128xf32> to vector<8x128xf32>
    %48 = vector.shape_cast %45 : vector<8x128xf32> to vector<1x8x128xf32>
    tpu.vector_store %arg11[%c0_22, %c0_23, %c0_24], %48 {strides = array<i32>} : memref<2x8x128xf32, #tpu.memory_space<vmem>>, vector<1x8x128xf32>,
    %c0_25 = arith.constant 0 : index
    %c0_26 = arith.constant 0 : index
    %c0_27 = arith.constant 0 : index
    %49 = vector.load %arg12[%c0_25, %c0_26, %c0_27] : memref<2x8x128xf32, #tpu.memory_space<vmem>>, vector<1x8x128xf32>
    %50 = vector.shape_cast %49 : vector<1x8x128xf32> to vector<8x128xf32>
    %51 = vector.shape_cast %43 : vector<8x128xf32> to vector<1x8x128xf32>
    tpu.vector_store %arg12[%c0_25, %c0_26, %c0_27], %51 {strides = array<i32>} : memref<2x8x128xf32, #tpu.memory_space<vmem>>, vector<1x8x128xf32>,
    %52 = arith.index_cast %12 : i32 to index
    %c0_28 = arith.constant 0 : index
    %53 = vector.load %arg13[%52, %c0_28] : memref<32x128xf32, #tpu.memory_space<vmem>>, vector<8x128xf32>
    tpu.vector_store %arg13[%52, %c0_28], %45 {strides = array<i32>} : memref<32x128xf32, #tpu.memory_space<vmem>>, vector<8x128xf32>,
    %c1_i32 = arith.constant 1 : i32
    %c8_i32_29 = arith.constant 8 : i32
    %54 = arith.muli %c1_i32, %c8_i32_29 : i32
    %55 = tpu.assume_multiple %54, 8 : i32
    %c0_30 = arith.constant 0 : index
    %c0_31 = arith.constant 0 : index
    %c0_32 = arith.constant 0 : index
    %56 = vector.load %arg11[%c0_30, %c0_31, %c0_32] : memref<2x8x128xf32, #tpu.memory_space<vmem>>, vector<1x8x128xf32>
    %57 = vector.shape_cast %56 : vector<1x8x128xf32> to vector<8x128xf32>
    %c0_33 = arith.constant 0 : index
    %c0_34 = arith.constant 0 : index
    %c0_35 = arith.constant 0 : index
    %58 = vector.load %arg12[%c0_33, %c0_34, %c0_35] : memref<2x8x128xf32, #tpu.memory_space<vmem>>, vector<1x8x128xf32>
    %59 = vector.shape_cast %58 : vector<1x8x128xf32> to vector<8x128xf32>
    %60 = arith.index_cast %55 : i32 to index
    %c0_36 = arith.constant 0 : index
    %61 = vector.load %arg14[%60, %c0_36] : memref<32x512xf32, #tpu.memory_space<vmem>>, vector<8x512xf32>
    %cst_37 = arith.constant dense<0.000000e+00> : vector<8x512xf32>
    %62 = tpu.matmul %57, %10, %cst_37 {dimension_numbers = #tpu.dot_dimension_numbers<[1], [0], [0], [1], [0, 0, 1, 1], [], []>} : vector<8x128xf32>, vector<128x512xf32>, vector<8x512xf32> -> vector<8x512xf32>
    %63 = arith.addf %61, %62 : vector<8x512xf32>
    %64 = vector.extract_strided_slice %63 {offsets = [0, 0], sizes = [8, 128], strides = [1, 1]} : vector<8x512xf32> to vector<8x128xf32>
    %65 = arith.negf %64 : vector<8x128xf32>
    %66 = math.exp %65 : vector<8x128xf32>
    %cst_38 = arith.constant 1.000000e+00 : f32
    %67 = vector.broadcast %cst_38 : f32 to vector<8x128xf32>
    %68 = arith.addf %67, %66 : vector<8x128xf32>
    %69 = arith.divf %67, %68 : vector<8x128xf32>
    %70 = vector.extract_strided_slice %63 {offsets = [0, 128], sizes = [8, 128], strides = [1, 1]} : vector<8x512xf32> to vector<8x128xf32>
    %71 = arith.negf %70 : vector<8x128xf32>
    %72 = math.exp %71 : vector<8x128xf32>
    %cst_39 = arith.constant 1.000000e+00 : f32
    %73 = vector.broadcast %cst_39 : f32 to vector<8x128xf32>
    %74 = arith.addf %73, %72 : vector<8x128xf32>
    %75 = arith.divf %73, %74 : vector<8x128xf32>
    %76 = vector.extract_strided_slice %63 {offsets = [0, 256], sizes = [8, 128], strides = [1, 1]} : vector<8x512xf32> to vector<8x128xf32>
    %77 = math.tanh %76 : vector<8x128xf32>
    %78 = vector.extract_strided_slice %63 {offsets = [0, 384], sizes = [8, 128], strides = [1, 1]} : vector<8x512xf32> to vector<8x128xf32>
    %79 = arith.negf %78 : vector<8x128xf32>
    %80 = math.exp %79 : vector<8x128xf32>
    %cst_40 = arith.constant 1.000000e+00 : f32
    %81 = vector.broadcast %cst_40 : f32 to vector<8x128xf32>
    %82 = arith.addf %81, %80 : vector<8x128xf32>
    %83 = arith.divf %81, %82 : vector<8x128xf32>
    %84 = arith.mulf %75, %59 : vector<8x128xf32>
    %85 = arith.mulf %69, %77 : vector<8x128xf32>
    %86 = arith.addf %84, %85 : vector<8x128xf32>
    %87 = math.tanh %86 : vector<8x128xf32>
    %88 = arith.mulf %83, %87 : vector<8x128xf32>
    %c0_41 = arith.constant 0 : index
    %c0_42 = arith.constant 0 : index
    %c0_43 = arith.constant 0 : index
    %89 = vector.load %arg11[%c0_41, %c0_42, %c0_43] : memref<2x8x128xf32, #tpu.memory_space<vmem>>, vector<1x8x128xf32>
    %90 = vector.shape_cast %89 : vector<1x8x128xf32> to vector<8x128xf32>
    %91 = vector.shape_cast %88 : vector<8x128xf32> to vector<1x8x128xf32>
    tpu.vector_store %arg11[%c0_41, %c0_42, %c0_43], %91 {strides = array<i32>} : memref<2x8x128xf32, #tpu.memory_space<vmem>>, vector<1x8x128xf32>,
    %c0_44 = arith.constant 0 : index
    %c0_45 = arith.constant 0 : index
    %c0_46 = arith.constant 0 : index
    %92 = vector.load %arg12[%c0_44, %c0_45, %c0_46] : memref<2x8x128xf32, #tpu.memory_space<vmem>>, vector<1x8x128xf32>
    %93 = vector.shape_cast %92 : vector<1x8x128xf32> to vector<8x128xf32>
    %94 = vector.shape_cast %86 : vector<8x128xf32> to vector<1x8x128xf32>
    tpu.vector_store %arg12[%c0_44, %c0_45, %c0_46], %94 {strides = array<i32>} : memref<2x8x128xf32, #tpu.memory_space<vmem>>, vector<1x8x128xf32>,
    %95 = arith.index_cast %55 : i32 to index
    %c0_47 = arith.constant 0 : index
    %96 = vector.load %arg13[%95, %c0_47] : memref<32x128xf32, #tpu.memory_space<vmem>>, vector<8x128xf32>
    tpu.vector_store %arg13[%95, %c0_47], %88 {strides = array<i32>} : memref<32x128xf32, #tpu.memory_space<vmem>>, vector<8x128xf32>,
    %c2_i32 = arith.constant 2 : i32
    %c8_i32_48 = arith.constant 8 : i32
    %97 = arith.muli %c2_i32, %c8_i32_48 : i32
    %98 = tpu.assume_multiple %97, 8 : i32
    %c0_49 = arith.constant 0 : index
    %c0_50 = arith.constant 0 : index
    %c0_51 = arith.constant 0 : index
    %99 = vector.load %arg11[%c0_49, %c0_50, %c0_51] : memref<2x8x128xf32, #tpu.memory_space<vmem>>, vector<1x8x128xf32>
    %100 = vector.shape_cast %99 : vector<1x8x128xf32> to vector<8x128xf32>
    %c0_52 = arith.constant 0 : index
    %c0_53 = arith.constant 0 : index
    %c0_54 = arith.constant 0 : index
    %101 = vector.load %arg12[%c0_52, %c0_53, %c0_54] : memref<2x8x128xf32, #tpu.memory_space<vmem>>, vector<1x8x128xf32>
    %102 = vector.shape_cast %101 : vector<1x8x128xf32> to vector<8x128xf32>
    %103 = arith.index_cast %98 : i32 to index
    %c0_55 = arith.constant 0 : index
    %104 = vector.load %arg14[%103, %c0_55] : memref<32x512xf32, #tpu.memory_space<vmem>>, vector<8x512xf32>
    %cst_56 = arith.constant dense<0.000000e+00> : vector<8x512xf32>
    %105 = tpu.matmul %100, %10, %cst_56 {dimension_numbers = #tpu.dot_dimension_numbers<[1], [0], [0], [1], [0, 0, 1, 1], [], []>} : vector<8x128xf32>, vector<128x512xf32>, vector<8x512xf32> -> vector<8x512xf32>
    %106 = arith.addf %104, %105 : vector<8x512xf32>
    %107 = vector.extract_strided_slice %106 {offsets = [0, 0], sizes = [8, 128], strides = [1, 1]} : vector<8x512xf32> to vector<8x128xf32>
    %108 = arith.negf %107 : vector<8x128xf32>
    %109 = math.exp %108 : vector<8x128xf32>
    %cst_57 = arith.constant 1.000000e+00 : f32
    %110 = vector.broadcast %cst_57 : f32 to vector<8x128xf32>
    %111 = arith.addf %110, %109 : vector<8x128xf32>
    %112 = arith.divf %110, %111 : vector<8x128xf32>
    %113 = vector.extract_strided_slice %106 {offsets = [0, 128], sizes = [8, 128], strides = [1, 1]} : vector<8x512xf32> to vector<8x128xf32>
    %114 = arith.negf %113 : vector<8x128xf32>
    %115 = math.exp %114 : vector<8x128xf32>
    %cst_58 = arith.constant 1.000000e+00 : f32
    %116 = vector.broadcast %cst_58 : f32 to vector<8x128xf32>
    %117 = arith.addf %116, %115 : vector<8x128xf32>
    %118 = arith.divf %116, %117 : vector<8x128xf32>
    %119 = vector.extract_strided_slice %106 {offsets = [0, 256], sizes = [8, 128], strides = [1, 1]} : vector<8x512xf32> to vector<8x128xf32>
    %120 = math.tanh %119 : vector<8x128xf32>
    %121 = vector.extract_strided_slice %106 {offsets = [0, 384], sizes = [8, 128], strides = [1, 1]} : vector<8x512xf32> to vector<8x128xf32>
    %122 = arith.negf %121 : vector<8x128xf32>
    %123 = math.exp %122 : vector<8x128xf32>
    %cst_59 = arith.constant 1.000000e+00 : f32
    %124 = vector.broadcast %cst_59 : f32 to vector<8x128xf32>
    %125 = arith.addf %124, %123 : vector<8x128xf32>
    %126 = arith.divf %124, %125 : vector<8x128xf32>
    %127 = arith.mulf %118, %102 : vector<8x128xf32>
    %128 = arith.mulf %112, %120 : vector<8x128xf32>
    %129 = arith.addf %127, %128 : vector<8x128xf32>
    %130 = math.tanh %129 : vector<8x128xf32>
    %131 = arith.mulf %126, %130 : vector<8x128xf32>
    %c0_60 = arith.constant 0 : index
    %c0_61 = arith.constant 0 : index
    %c0_62 = arith.constant 0 : index
    %132 = vector.load %arg11[%c0_60, %c0_61, %c0_62] : memref<2x8x128xf32, #tpu.memory_space<vmem>>, vector<1x8x128xf32>
    %133 = vector.shape_cast %132 : vector<1x8x128xf32> to vector<8x128xf32>
    %134 = vector.shape_cast %131 : vector<8x128xf32> to vector<1x8x128xf32>
    tpu.vector_store %arg11[%c0_60, %c0_61, %c0_62], %134 {strides = array<i32>} : memref<2x8x128xf32, #tpu.memory_space<vmem>>, vector<1x8x128xf32>,
    %c0_63 = arith.constant 0 : index
    %c0_64 = arith.constant 0 : index
    %c0_65 = arith.constant 0 : index
    %135 = vector.load %arg12[%c0_63, %c0_64, %c0_65] : memref<2x8x128xf32, #tpu.memory_space<vmem>>, vector<1x8x128xf32>
    %136 = vector.shape_cast %135 : vector<1x8x128xf32> to vector<8x128xf32>
    %137 = vector.shape_cast %129 : vector<8x128xf32> to vector<1x8x128xf32>
    tpu.vector_store %arg12[%c0_63, %c0_64, %c0_65], %137 {strides = array<i32>} : memref<2x8x128xf32, #tpu.memory_space<vmem>>, vector<1x8x128xf32>,
    %138 = arith.index_cast %98 : i32 to index
    %c0_66 = arith.constant 0 : index
    %139 = vector.load %arg13[%138, %c0_66] : memref<32x128xf32, #tpu.memory_space<vmem>>, vector<8x128xf32>
    tpu.vector_store %arg13[%138, %c0_66], %131 {strides = array<i32>} : memref<32x128xf32, #tpu.memory_space<vmem>>, vector<8x128xf32>,
    %c3_i32 = arith.constant 3 : i32
    %c8_i32_67 = arith.constant 8 : i32
    %140 = arith.muli %c3_i32, %c8_i32_67 : i32
    %141 = tpu.assume_multiple %140, 8 : i32
    %c0_68 = arith.constant 0 : index
    %c0_69 = arith.constant 0 : index
    %c0_70 = arith.constant 0 : index
    %142 = vector.load %arg11[%c0_68, %c0_69, %c0_70] : memref<2x8x128xf32, #tpu.memory_space<vmem>>, vector<1x8x128xf32>
    %143 = vector.shape_cast %142 : vector<1x8x128xf32> to vector<8x128xf32>
    %c0_71 = arith.constant 0 : index
    %c0_72 = arith.constant 0 : index
    %c0_73 = arith.constant 0 : index
    %144 = vector.load %arg12[%c0_71, %c0_72, %c0_73] : memref<2x8x128xf32, #tpu.memory_space<vmem>>, vector<1x8x128xf32>
    %145 = vector.shape_cast %144 : vector<1x8x128xf32> to vector<8x128xf32>
    %146 = arith.index_cast %141 : i32 to index
    %c0_74 = arith.constant 0 : index
    %147 = vector.load %arg14[%146, %c0_74] : memref<32x512xf32, #tpu.memory_space<vmem>>, vector<8x512xf32>
    %cst_75 = arith.constant dense<0.000000e+00> : vector<8x512xf32>
    %148 = tpu.matmul %143, %10, %cst_75 {dimension_numbers = #tpu.dot_dimension_numbers<[1], [0], [0], [1], [0, 0, 1, 1], [], []>} : vector<8x128xf32>, vector<128x512xf32>, vector<8x512xf32> -> vector<8x512xf32>
    %149 = arith.addf %147, %148 : vector<8x512xf32>
    %150 = vector.extract_strided_slice %149 {offsets = [0, 0], sizes = [8, 128], strides = [1, 1]} : vector<8x512xf32> to vector<8x128xf32>
    %151 = arith.negf %150 : vector<8x128xf32>
    %152 = math.exp %151 : vector<8x128xf32>
    %cst_76 = arith.constant 1.000000e+00 : f32
    %153 = vector.broadcast %cst_76 : f32 to vector<8x128xf32>
    %154 = arith.addf %153, %152 : vector<8x128xf32>
    %155 = arith.divf %153, %154 : vector<8x128xf32>
    %156 = vector.extract_strided_slice %149 {offsets = [0, 128], sizes = [8, 128], strides = [1, 1]} : vector<8x512xf32> to vector<8x128xf32>
    %157 = arith.negf %156 : vector<8x128xf32>
    %158 = math.exp %157 : vector<8x128xf32>
    %cst_77 = arith.constant 1.000000e+00 : f32
    %159 = vector.broadcast %cst_77 : f32 to vector<8x128xf32>
    %160 = arith.addf %159, %158 : vector<8x128xf32>
    %161 = arith.divf %159, %160 : vector<8x128xf32>
    %162 = vector.extract_strided_slice %149 {offsets = [0, 256], sizes = [8, 128], strides = [1, 1]} : vector<8x512xf32> to vector<8x128xf32>
    %163 = math.tanh %162 : vector<8x128xf32>
    %164 = vector.extract_strided_slice %149 {offsets = [0, 384], sizes = [8, 128], strides = [1, 1]} : vector<8x512xf32> to vector<8x128xf32>
    %165 = arith.negf %164 : vector<8x128xf32>
    %166 = math.exp %165 : vector<8x128xf32>
    %cst_78 = arith.constant 1.000000e+00 : f32
    %167 = vector.broadcast %cst_78 : f32 to vector<8x128xf32>
    %168 = arith.addf %167, %166 : vector<8x128xf32>
    %169 = arith.divf %167, %168 : vector<8x128xf32>
    %170 = arith.mulf %161, %145 : vector<8x128xf32>
    %171 = arith.mulf %155, %163 : vector<8x128xf32>
    %172 = arith.addf %170, %171 : vector<8x128xf32>
    %173 = math.tanh %172 : vector<8x128xf32>
    %174 = arith.mulf %169, %173 : vector<8x128xf32>
    %c0_79 = arith.constant 0 : index
    %c0_80 = arith.constant 0 : index
    %c0_81 = arith.constant 0 : index
    %175 = vector.load %arg11[%c0_79, %c0_80, %c0_81] : memref<2x8x128xf32, #tpu.memory_space<vmem>>, vector<1x8x128xf32>
    %176 = vector.shape_cast %175 : vector<1x8x128xf32> to vector<8x128xf32>
    %177 = vector.shape_cast %174 : vector<8x128xf32> to vector<1x8x128xf32>
    tpu.vector_store %arg11[%c0_79, %c0_80, %c0_81], %177 {strides = array<i32>} : memref<2x8x128xf32, #tpu.memory_space<vmem>>, vector<1x8x128xf32>,
    %c0_82 = arith.constant 0 : index
    %c0_83 = arith.constant 0 : index
    %c0_84 = arith.constant 0 : index
    %178 = vector.load %arg12[%c0_82, %c0_83, %c0_84] : memref<2x8x128xf32, #tpu.memory_space<vmem>>, vector<1x8x128xf32>
    %179 = vector.shape_cast %178 : vector<1x8x128xf32> to vector<8x128xf32>
    %180 = vector.shape_cast %172 : vector<8x128xf32> to vector<1x8x128xf32>
    tpu.vector_store %arg12[%c0_82, %c0_83, %c0_84], %180 {strides = array<i32>} : memref<2x8x128xf32, #tpu.memory_space<vmem>>, vector<1x8x128xf32>,
    %181 = arith.index_cast %141 : i32 to index
    %c0_85 = arith.constant 0 : index
    %182 = vector.load %arg13[%181, %c0_85] : memref<32x128xf32, #tpu.memory_space<vmem>>, vector<8x128xf32>
    tpu.vector_store %arg13[%181, %c0_85], %174 {strides = array<i32>} : memref<32x128xf32, #tpu.memory_space<vmem>>, vector<8x128xf32>,
    %c4_i32 = arith.constant 4 : i32
    %c0_86 = arith.constant 0 : index
    %c0_87 = arith.constant 0 : index
    %183 = vector.load %arg13[%c0_86, %c0_87] : memref<32x128xf32, #tpu.memory_space<vmem>>, vector<32x128xf32>
    %c0_88 = arith.constant 0 : index
    %c0_89 = arith.constant 0 : index
    %184 = vector.load %arg5[%c0_88, %c0_89] : memref<128x512xf32, #tpu.memory_space<vmem>>, vector<128x512xf32>
    %cst_90 = arith.constant dense<0.000000e+00> : vector<32x512xf32>
    %185 = tpu.matmul %183, %184, %cst_90 {dimension_numbers = #tpu.dot_dimension_numbers<[1], [0], [0], [1], [0, 0, 1, 1], [], []>} : vector<32x128xf32>, vector<128x512xf32>, vector<32x512xf32> -> vector<32x512xf32>
    %c0_91 = arith.constant 0 : index
    %c0_92 = arith.constant 0 : index
    %186 = vector.load %arg7[%c0_91, %c0_92] : memref<1x512xf32, #tpu.memory_space<vmem>>, vector<1x512xf32>
    %187 = vector.broadcast %186 : vector<1x512xf32> to vector<32x512xf32>
    %188 = arith.addf %185, %187 : vector<32x512xf32>
    %c0_93 = arith.constant 0 : index
    %c0_94 = arith.constant 0 : index
    %189 = vector.load %arg14[%c0_93, %c0_94] : memref<32x512xf32, #tpu.memory_space<vmem>>, vector<32x512xf32>
    tpu.vector_store %arg14[%c0_93, %c0_94], %188 {strides = array<i32>} : memref<32x512xf32, #tpu.memory_space<vmem>>, vector<32x512xf32>,
    %c0_95 = arith.constant 0 : index
    %c0_96 = arith.constant 0 : index
    %190 = vector.load %arg6[%c0_95, %c0_96] : memref<128x512xf32, #tpu.memory_space<vmem>>, vector<128x512xf32>
    %c0_i32_97 = arith.constant 0 : i32
    %c8_i32_98 = arith.constant 8 : i32
    %191 = arith.muli %c0_i32_97, %c8_i32_98 : i32
    %192 = tpu.assume_multiple %191, 8 : i32
    %c1 = arith.constant 1 : index
    %c0_99 = arith.constant 0 : index
    %c0_100 = arith.constant 0 : index
    %193 = vector.load %arg11[%c1, %c0_99, %c0_100] : memref<2x8x128xf32, #tpu.memory_space<vmem>>, vector<1x8x128xf32>
    %194 = vector.shape_cast %193 : vector<1x8x128xf32> to vector<8x128xf32>
    %c1_101 = arith.constant 1 : index
    %c0_102 = arith.constant 0 : index
    %c0_103 = arith.constant 0 : index
    %195 = vector.load %arg12[%c1_101, %c0_102, %c0_103] : memref<2x8x128xf32, #tpu.memory_space<vmem>>, vector<1x8x128xf32>
    %196 = vector.shape_cast %195 : vector<1x8x128xf32> to vector<8x128xf32>
    %197 = arith.index_cast %192 : i32 to index
    %c0_104 = arith.constant 0 : index
    %198 = vector.load %arg14[%197, %c0_104] : memref<32x512xf32, #tpu.memory_space<vmem>>, vector<8x512xf32>
    %cst_105 = arith.constant dense<0.000000e+00> : vector<8x512xf32>
    %199 = tpu.matmul %194, %190, %cst_105 {dimension_numbers = #tpu.dot_dimension_numbers<[1], [0], [0], [1], [0, 0, 1, 1], [], []>} : vector<8x128xf32>, vector<128x512xf32>, vector<8x512xf32> -> vector<8x512xf32>
    %200 = arith.addf %198, %199 : vector<8x512xf32>
    %201 = vector.extract_strided_slice %200 {offsets = [0, 0], sizes = [8, 128], strides = [1, 1]} : vector<8x512xf32> to vector<8x128xf32>
    %202 = arith.negf %201 : vector<8x128xf32>
    %203 = math.exp %202 : vector<8x128xf32>
    %cst_106 = arith.constant 1.000000e+00 : f32
    %204 = vector.broadcast %cst_106 : f32 to vector<8x128xf32>
    %205 = arith.addf %204, %203 : vector<8x128xf32>
    %206 = arith.divf %204, %205 : vector<8x128xf32>
    %207 = vector.extract_strided_slice %200 {offsets = [0, 128], sizes = [8, 128], strides = [1, 1]} : vector<8x512xf32> to vector<8x128xf32>
    %208 = arith.negf %207 : vector<8x128xf32>
    %209 = math.exp %208 : vector<8x128xf32>
    %cst_107 = arith.constant 1.000000e+00 : f32
    %210 = vector.broadcast %cst_107 : f32 to vector<8x128xf32>
    %211 = arith.addf %210, %209 : vector<8x128xf32>
    %212 = arith.divf %210, %211 : vector<8x128xf32>
    %213 = vector.extract_strided_slice %200 {offsets = [0, 256], sizes = [8, 128], strides = [1, 1]} : vector<8x512xf32> to vector<8x128xf32>
    %214 = math.tanh %213 : vector<8x128xf32>
    %215 = vector.extract_strided_slice %200 {offsets = [0, 384], sizes = [8, 128], strides = [1, 1]} : vector<8x512xf32> to vector<8x128xf32>
    %216 = arith.negf %215 : vector<8x128xf32>
    %217 = math.exp %216 : vector<8x128xf32>
    %cst_108 = arith.constant 1.000000e+00 : f32
    %218 = vector.broadcast %cst_108 : f32 to vector<8x128xf32>
    %219 = arith.addf %218, %217 : vector<8x128xf32>
    %220 = arith.divf %218, %219 : vector<8x128xf32>
    %221 = arith.mulf %212, %196 : vector<8x128xf32>
    %222 = arith.mulf %206, %214 : vector<8x128xf32>
    %223 = arith.addf %221, %222 : vector<8x128xf32>
    %224 = math.tanh %223 : vector<8x128xf32>
    %225 = arith.mulf %220, %224 : vector<8x128xf32>
    %c1_109 = arith.constant 1 : index
    %c0_110 = arith.constant 0 : index
    %c0_111 = arith.constant 0 : index
    %226 = vector.load %arg11[%c1_109, %c0_110, %c0_111] : memref<2x8x128xf32, #tpu.memory_space<vmem>>, vector<1x8x128xf32>
    %227 = vector.shape_cast %226 : vector<1x8x128xf32> to vector<8x128xf32>
    %228 = vector.shape_cast %225 : vector<8x128xf32> to vector<1x8x128xf32>
    tpu.vector_store %arg11[%c1_109, %c0_110, %c0_111], %228 {strides = array<i32>} : memref<2x8x128xf32, #tpu.memory_space<vmem>>, vector<1x8x128xf32>,
    %c1_112 = arith.constant 1 : index
    %c0_113 = arith.constant 0 : index
    %c0_114 = arith.constant 0 : index
    %229 = vector.load %arg12[%c1_112, %c0_113, %c0_114] : memref<2x8x128xf32, #tpu.memory_space<vmem>>, vector<1x8x128xf32>
    %230 = vector.shape_cast %229 : vector<1x8x128xf32> to vector<8x128xf32>
    %231 = vector.shape_cast %223 : vector<8x128xf32> to vector<1x8x128xf32>
    tpu.vector_store %arg12[%c1_112, %c0_113, %c0_114], %231 {strides = array<i32>} : memref<2x8x128xf32, #tpu.memory_space<vmem>>, vector<1x8x128xf32>,
    %c1_i32_115 = arith.constant 1 : i32
    %c8_i32_116 = arith.constant 8 : i32
    %232 = arith.muli %c1_i32_115, %c8_i32_116 : i32
    %233 = tpu.assume_multiple %232, 8 : i32
    %c1_117 = arith.constant 1 : index
    %c0_118 = arith.constant 0 : index
    %c0_119 = arith.constant 0 : index
    %234 = vector.load %arg11[%c1_117, %c0_118, %c0_119] : memref<2x8x128xf32, #tpu.memory_space<vmem>>, vector<1x8x128xf32>
    %235 = vector.shape_cast %234 : vector<1x8x128xf32> to vector<8x128xf32>
    %c1_120 = arith.constant 1 : index
    %c0_121 = arith.constant 0 : index
    %c0_122 = arith.constant 0 : index
    %236 = vector.load %arg12[%c1_120, %c0_121, %c0_122] : memref<2x8x128xf32, #tpu.memory_space<vmem>>, vector<1x8x128xf32>
    %237 = vector.shape_cast %236 : vector<1x8x128xf32> to vector<8x128xf32>
    %238 = arith.index_cast %233 : i32 to index
    %c0_123 = arith.constant 0 : index
    %239 = vector.load %arg14[%238, %c0_123] : memref<32x512xf32, #tpu.memory_space<vmem>>, vector<8x512xf32>
    %cst_124 = arith.constant dense<0.000000e+00> : vector<8x512xf32>
    %240 = tpu.matmul %235, %190, %cst_124 {dimension_numbers = #tpu.dot_dimension_numbers<[1], [0], [0], [1], [0, 0, 1, 1], [], []>} : vector<8x128xf32>, vector<128x512xf32>, vector<8x512xf32> -> vector<8x512xf32>
    %241 = arith.addf %239, %240 : vector<8x512xf32>
    %242 = vector.extract_strided_slice %241 {offsets = [0, 0], sizes = [8, 128], strides = [1, 1]} : vector<8x512xf32> to vector<8x128xf32>
    %243 = arith.negf %242 : vector<8x128xf32>
    %244 = math.exp %243 : vector<8x128xf32>
    %cst_125 = arith.constant 1.000000e+00 : f32
    %245 = vector.broadcast %cst_125 : f32 to vector<8x128xf32>
    %246 = arith.addf %245, %244 : vector<8x128xf32>
    %247 = arith.divf %245, %246 : vector<8x128xf32>
    %248 = vector.extract_strided_slice %241 {offsets = [0, 128], sizes = [8, 128], strides = [1, 1]} : vector<8x512xf32> to vector<8x128xf32>
    %249 = arith.negf %248 : vector<8x128xf32>
    %250 = math.exp %249 : vector<8x128xf32>
    %cst_126 = arith.constant 1.000000e+00 : f32
    %251 = vector.broadcast %cst_126 : f32 to vector<8x128xf32>
    %252 = arith.addf %251, %250 : vector<8x128xf32>
    %253 = arith.divf %251, %252 : vector<8x128xf32>
    %254 = vector.extract_strided_slice %241 {offsets = [0, 256], sizes = [8, 128], strides = [1, 1]} : vector<8x512xf32> to vector<8x128xf32>
    %255 = math.tanh %254 : vector<8x128xf32>
    %256 = vector.extract_strided_slice %241 {offsets = [0, 384], sizes = [8, 128], strides = [1, 1]} : vector<8x512xf32> to vector<8x128xf32>
    %257 = arith.negf %256 : vector<8x128xf32>
    %258 = math.exp %257 : vector<8x128xf32>
    %cst_127 = arith.constant 1.000000e+00 : f32
    %259 = vector.broadcast %cst_127 : f32 to vector<8x128xf32>
    %260 = arith.addf %259, %258 : vector<8x128xf32>
    %261 = arith.divf %259, %260 : vector<8x128xf32>
    %262 = arith.mulf %253, %237 : vector<8x128xf32>
    %263 = arith.mulf %247, %255 : vector<8x128xf32>
    %264 = arith.addf %262, %263 : vector<8x128xf32>
    %265 = math.tanh %264 : vector<8x128xf32>
    %266 = arith.mulf %261, %265 : vector<8x128xf32>
    %c1_128 = arith.constant 1 : index
    %c0_129 = arith.constant 0 : index
    %c0_130 = arith.constant 0 : index
    %267 = vector.load %arg11[%c1_128, %c0_129, %c0_130] : memref<2x8x128xf32, #tpu.memory_space<vmem>>, vector<1x8x128xf32>
    %268 = vector.shape_cast %267 : vector<1x8x128xf32> to vector<8x128xf32>
    %269 = vector.shape_cast %266 : vector<8x128xf32> to vector<1x8x128xf32>
    tpu.vector_store %arg11[%c1_128, %c0_129, %c0_130], %269 {strides = array<i32>} : memref<2x8x128xf32, #tpu.memory_space<vmem>>, vector<1x8x128xf32>,
    %c1_131 = arith.constant 1 : index
    %c0_132 = arith.constant 0 : index
    %c0_133 = arith.constant 0 : index
    %270 = vector.load %arg12[%c1_131, %c0_132, %c0_133] : memref<2x8x128xf32, #tpu.memory_space<vmem>>, vector<1x8x128xf32>
    %271 = vector.shape_cast %270 : vector<1x8x128xf32> to vector<8x128xf32>
    %272 = vector.shape_cast %264 : vector<8x128xf32> to vector<1x8x128xf32>
    tpu.vector_store %arg12[%c1_131, %c0_132, %c0_133], %272 {strides = array<i32>} : memref<2x8x128xf32, #tpu.memory_space<vmem>>, vector<1x8x128xf32>,
    %c2_i32_134 = arith.constant 2 : i32
    %c8_i32_135 = arith.constant 8 : i32
    %273 = arith.muli %c2_i32_134, %c8_i32_135 : i32
    %274 = tpu.assume_multiple %273, 8 : i32
    %c1_136 = arith.constant 1 : index
    %c0_137 = arith.constant 0 : index
    %c0_138 = arith.constant 0 : index
    %275 = vector.load %arg11[%c1_136, %c0_137, %c0_138] : memref<2x8x128xf32, #tpu.memory_space<vmem>>, vector<1x8x128xf32>
    %276 = vector.shape_cast %275 : vector<1x8x128xf32> to vector<8x128xf32>
    %c1_139 = arith.constant 1 : index
    %c0_140 = arith.constant 0 : index
    %c0_141 = arith.constant 0 : index
    %277 = vector.load %arg12[%c1_139, %c0_140, %c0_141] : memref<2x8x128xf32, #tpu.memory_space<vmem>>, vector<1x8x128xf32>
    %278 = vector.shape_cast %277 : vector<1x8x128xf32> to vector<8x128xf32>
    %279 = arith.index_cast %274 : i32 to index
    %c0_142 = arith.constant 0 : index
    %280 = vector.load %arg14[%279, %c0_142] : memref<32x512xf32, #tpu.memory_space<vmem>>, vector<8x512xf32>
    %cst_143 = arith.constant dense<0.000000e+00> : vector<8x512xf32>
    %281 = tpu.matmul %276, %190, %cst_143 {dimension_numbers = #tpu.dot_dimension_numbers<[1], [0], [0], [1], [0, 0, 1, 1], [], []>} : vector<8x128xf32>, vector<128x512xf32>, vector<8x512xf32> -> vector<8x512xf32>
    %282 = arith.addf %280, %281 : vector<8x512xf32>
    %283 = vector.extract_strided_slice %282 {offsets = [0, 0], sizes = [8, 128], strides = [1, 1]} : vector<8x512xf32> to vector<8x128xf32>
    %284 = arith.negf %283 : vector<8x128xf32>
    %285 = math.exp %284 : vector<8x128xf32>
    %cst_144 = arith.constant 1.000000e+00 : f32
    %286 = vector.broadcast %cst_144 : f32 to vector<8x128xf32>
    %287 = arith.addf %286, %285 : vector<8x128xf32>
    %288 = arith.divf %286, %287 : vector<8x128xf32>
    %289 = vector.extract_strided_slice %282 {offsets = [0, 128], sizes = [8, 128], strides = [1, 1]} : vector<8x512xf32> to vector<8x128xf32>
    %290 = arith.negf %289 : vector<8x128xf32>
    %291 = math.exp %290 : vector<8x128xf32>
    %cst_145 = arith.constant 1.000000e+00 : f32
    %292 = vector.broadcast %cst_145 : f32 to vector<8x128xf32>
    %293 = arith.addf %292, %291 : vector<8x128xf32>
    %294 = arith.divf %292, %293 : vector<8x128xf32>
    %295 = vector.extract_strided_slice %282 {offsets = [0, 256], sizes = [8, 128], strides = [1, 1]} : vector<8x512xf32> to vector<8x128xf32>
    %296 = math.tanh %295 : vector<8x128xf32>
    %297 = vector.extract_strided_slice %282 {offsets = [0, 384], sizes = [8, 128], strides = [1, 1]} : vector<8x512xf32> to vector<8x128xf32>
    %298 = arith.negf %297 : vector<8x128xf32>
    %299 = math.exp %298 : vector<8x128xf32>
    %cst_146 = arith.constant 1.000000e+00 : f32
    %300 = vector.broadcast %cst_146 : f32 to vector<8x128xf32>
    %301 = arith.addf %300, %299 : vector<8x128xf32>
    %302 = arith.divf %300, %301 : vector<8x128xf32>
    %303 = arith.mulf %294, %278 : vector<8x128xf32>
    %304 = arith.mulf %288, %296 : vector<8x128xf32>
    %305 = arith.addf %303, %304 : vector<8x128xf32>
    %306 = math.tanh %305 : vector<8x128xf32>
    %307 = arith.mulf %302, %306 : vector<8x128xf32>
    %c1_147 = arith.constant 1 : index
    %c0_148 = arith.constant 0 : index
    %c0_149 = arith.constant 0 : index
    %308 = vector.load %arg11[%c1_147, %c0_148, %c0_149] : memref<2x8x128xf32, #tpu.memory_space<vmem>>, vector<1x8x128xf32>
    %309 = vector.shape_cast %308 : vector<1x8x128xf32> to vector<8x128xf32>
    %310 = vector.shape_cast %307 : vector<8x128xf32> to vector<1x8x128xf32>
    tpu.vector_store %arg11[%c1_147, %c0_148, %c0_149], %310 {strides = array<i32>} : memref<2x8x128xf32, #tpu.memory_space<vmem>>, vector<1x8x128xf32>,
    %c1_150 = arith.constant 1 : index
    %c0_151 = arith.constant 0 : index
    %c0_152 = arith.constant 0 : index
    %311 = vector.load %arg12[%c1_150, %c0_151, %c0_152] : memref<2x8x128xf32, #tpu.memory_space<vmem>>, vector<1x8x128xf32>
    %312 = vector.shape_cast %311 : vector<1x8x128xf32> to vector<8x128xf32>
    %313 = vector.shape_cast %305 : vector<8x128xf32> to vector<1x8x128xf32>
    tpu.vector_store %arg12[%c1_150, %c0_151, %c0_152], %313 {strides = array<i32>} : memref<2x8x128xf32, #tpu.memory_space<vmem>>, vector<1x8x128xf32>,
    %c3_i32_153 = arith.constant 3 : i32
    %c8_i32_154 = arith.constant 8 : i32
    %314 = arith.muli %c3_i32_153, %c8_i32_154 : i32
    %315 = tpu.assume_multiple %314, 8 : i32
    %c1_155 = arith.constant 1 : index
    %c0_156 = arith.constant 0 : index
    %c0_157 = arith.constant 0 : index
    %316 = vector.load %arg11[%c1_155, %c0_156, %c0_157] : memref<2x8x128xf32, #tpu.memory_space<vmem>>, vector<1x8x128xf32>
    %317 = vector.shape_cast %316 : vector<1x8x128xf32> to vector<8x128xf32>
    %c1_158 = arith.constant 1 : index
    %c0_159 = arith.constant 0 : index
    %c0_160 = arith.constant 0 : index
    %318 = vector.load %arg12[%c1_158, %c0_159, %c0_160] : memref<2x8x128xf32, #tpu.memory_space<vmem>>, vector<1x8x128xf32>
    %319 = vector.shape_cast %318 : vector<1x8x128xf32> to vector<8x128xf32>
    %320 = arith.index_cast %315 : i32 to index
    %c0_161 = arith.constant 0 : index
    %321 = vector.load %arg14[%320, %c0_161] : memref<32x512xf32, #tpu.memory_space<vmem>>, vector<8x512xf32>
    %cst_162 = arith.constant dense<0.000000e+00> : vector<8x512xf32>
    %322 = tpu.matmul %317, %190, %cst_162 {dimension_numbers = #tpu.dot_dimension_numbers<[1], [0], [0], [1], [0, 0, 1, 1], [], []>} : vector<8x128xf32>, vector<128x512xf32>, vector<8x512xf32> -> vector<8x512xf32>
    %323 = arith.addf %321, %322 : vector<8x512xf32>
    %324 = vector.extract_strided_slice %323 {offsets = [0, 0], sizes = [8, 128], strides = [1, 1]} : vector<8x512xf32> to vector<8x128xf32>
    %325 = arith.negf %324 : vector<8x128xf32>
    %326 = math.exp %325 : vector<8x128xf32>
    %cst_163 = arith.constant 1.000000e+00 : f32
    %327 = vector.broadcast %cst_163 : f32 to vector<8x128xf32>
    %328 = arith.addf %327, %326 : vector<8x128xf32>
    %329 = arith.divf %327, %328 : vector<8x128xf32>
    %330 = vector.extract_strided_slice %323 {offsets = [0, 128], sizes = [8, 128], strides = [1, 1]} : vector<8x512xf32> to vector<8x128xf32>
    %331 = arith.negf %330 : vector<8x128xf32>
    %332 = math.exp %331 : vector<8x128xf32>
    %cst_164 = arith.constant 1.000000e+00 : f32
    %333 = vector.broadcast %cst_164 : f32 to vector<8x128xf32>
    %334 = arith.addf %333, %332 : vector<8x128xf32>
    %335 = arith.divf %333, %334 : vector<8x128xf32>
    %336 = vector.extract_strided_slice %323 {offsets = [0, 256], sizes = [8, 128], strides = [1, 1]} : vector<8x512xf32> to vector<8x128xf32>
    %337 = math.tanh %336 : vector<8x128xf32>
    %338 = vector.extract_strided_slice %323 {offsets = [0, 384], sizes = [8, 128], strides = [1, 1]} : vector<8x512xf32> to vector<8x128xf32>
    %339 = arith.negf %338 : vector<8x128xf32>
    %340 = math.exp %339 : vector<8x128xf32>
    %cst_165 = arith.constant 1.000000e+00 : f32
    %341 = vector.broadcast %cst_165 : f32 to vector<8x128xf32>
    %342 = arith.addf %341, %340 : vector<8x128xf32>
    %343 = arith.divf %341, %342 : vector<8x128xf32>
    %344 = arith.mulf %335, %319 : vector<8x128xf32>
    %345 = arith.mulf %329, %337 : vector<8x128xf32>
    %346 = arith.addf %344, %345 : vector<8x128xf32>
    %347 = math.tanh %346 : vector<8x128xf32>
    %348 = arith.mulf %343, %347 : vector<8x128xf32>
    %c1_166 = arith.constant 1 : index
    %c0_167 = arith.constant 0 : index
    %c0_168 = arith.constant 0 : index
    %349 = vector.load %arg11[%c1_166, %c0_167, %c0_168] : memref<2x8x128xf32, #tpu.memory_space<vmem>>, vector<1x8x128xf32>
    %350 = vector.shape_cast %349 : vector<1x8x128xf32> to vector<8x128xf32>
    %351 = vector.shape_cast %348 : vector<8x128xf32> to vector<1x8x128xf32>
    tpu.vector_store %arg11[%c1_166, %c0_167, %c0_168], %351 {strides = array<i32>} : memref<2x8x128xf32, #tpu.memory_space<vmem>>, vector<1x8x128xf32>,
    %c1_169 = arith.constant 1 : index
    %c0_170 = arith.constant 0 : index
    %c0_171 = arith.constant 0 : index
    %352 = vector.load %arg12[%c1_169, %c0_170, %c0_171] : memref<2x8x128xf32, #tpu.memory_space<vmem>>, vector<1x8x128xf32>
    %353 = vector.shape_cast %352 : vector<1x8x128xf32> to vector<8x128xf32>
    %354 = vector.shape_cast %346 : vector<8x128xf32> to vector<1x8x128xf32>
    tpu.vector_store %arg12[%c1_169, %c0_170, %c0_171], %354 {strides = array<i32>} : memref<2x8x128xf32, #tpu.memory_space<vmem>>, vector<1x8x128xf32>,
    %c4_i32_172 = arith.constant 4 : i32
    %c3_i32_173 = arith.constant 3 : i32
    %355 = arith.cmpi eq, %arg0, %c3_i32_173 : i32
    %356 = arith.extui %355 : i1 to i32
    %c0_i32_174 = arith.constant 0 : i32
    %357 = arith.cmpi ne, %356, %c0_i32_174 : i32
    scf.if %357 {
      %c1_175 = arith.constant 1 : index
      %c0_176 = arith.constant 0 : index
      %c0_177 = arith.constant 0 : index
      %358 = vector.load %arg11[%c1_175, %c0_176, %c0_177] : memref<2x8x128xf32, #tpu.memory_space<vmem>>, vector<1x8x128xf32>
      %359 = vector.shape_cast %358 : vector<1x8x128xf32> to vector<8x128xf32>
      %c0_178 = arith.constant 0 : index
      %c0_179 = arith.constant 0 : index
      %360 = vector.load %arg8[%c0_178, %c0_179] : memref<128x128xf32, #tpu.memory_space<vmem>>, vector<128x128xf32>
      %cst_180 = arith.constant dense<0.000000e+00> : vector<8x128xf32>
      %361 = tpu.matmul %359, %360, %cst_180 {dimension_numbers = #tpu.dot_dimension_numbers<[1], [0], [0], [1], [0, 0, 1, 1], [], []>} : vector<8x128xf32>, vector<128x128xf32>, vector<8x128xf32> -> vector<8x128xf32>
      %c0_181 = arith.constant 0 : index
      %c0_182 = arith.constant 0 : index
      %362 = vector.load %arg9[%c0_181, %c0_182] : memref<1x128xf32, #tpu.memory_space<vmem>>, vector<1x128xf32>
      %363 = vector.broadcast %362 : vector<1x128xf32> to vector<8x128xf32>
      %364 = arith.addf %361, %363 : vector<8x128xf32>
      %c0_183 = arith.constant 0 : index
      %c0_184 = arith.constant 0 : index
      %365 = vector.load %arg10[%c0_183, %c0_184] : memref<8x128xf32, #tpu.memory_space<vmem>>, vector<8x128xf32>
      tpu.vector_store %arg10[%c0_183, %c0_184], %364 {strides = array<i32>} : memref<8x128xf32, #tpu.memory_space<vmem>>, vector<8x128xf32>,
    } else {
    }
    return
  }
  func.func @transform_0(%arg0: i32) -> (i32, i32) {
    %c0_i32 = arith.constant 0 : i32
    %c0_i32_0 = arith.constant 0 : i32
    return %arg0, %c0_i32 : i32, i32
  }
  func.func @transform_1(%arg0: i32) -> (i32, i32) {
    %c0_i32 = arith.constant 0 : i32
    %c0_i32_0 = arith.constant 0 : i32
    %c0_i32_1 = arith.constant 0 : i32
    return %c0_i32, %c0_i32_0 : i32, i32
  }
  func.func @transform_2(%arg0: i32) -> (i32, i32) {
    %c0_i32 = arith.constant 0 : i32
    %c0_i32_0 = arith.constant 0 : i32
    %c0_i32_1 = arith.constant 0 : i32
    return %c0_i32, %c0_i32_0 : i32, i32
  }
  func.func @transform_3(%arg0: i32) -> (i32, i32) {
    %c0_i32 = arith.constant 0 : i32
    %c0_i32_0 = arith.constant 0 : i32
    %c0_i32_1 = arith.constant 0 : i32
    return %c0_i32, %c0_i32_0 : i32, i32
  }
  func.func @transform_4(%arg0: i32) -> (i32, i32) {
    %c0_i32 = arith.constant 0 : i32
    %c0_i32_0 = arith.constant 0 : i32
    %c0_i32_1 = arith.constant 0 : i32
    return %c0_i32, %c0_i32_0 : i32, i32
  }
  func.func @transform_5(%arg0: i32) -> (i32, i32) {
    %c0_i32 = arith.constant 0 : i32
    %c0_i32_0 = arith.constant 0 : i32
    %c0_i32_1 = arith.constant 0 : i32
    return %c0_i32, %c0_i32_0 : i32, i32
  }
  func.func @transform_6(%arg0: i32) -> (i32, i32) {
    %c0_i32 = arith.constant 0 : i32
    %c0_i32_0 = arith.constant 0 : i32
    %c0_i32_1 = arith.constant 0 : i32
    return %c0_i32, %c0_i32_0 : i32, i32
  }
  func.func @transform_7(%arg0: i32) -> (i32, i32) {
    %c0_i32 = arith.constant 0 : i32
    %c0_i32_0 = arith.constant 0 : i32
    %c0_i32_1 = arith.constant 0 : i32
    return %c0_i32, %c0_i32_0 : i32, i32
  }
  func.func @transform_8(%arg0: i32) -> (i32, i32) {
    %c0_i32 = arith.constant 0 : i32
    %c0_i32_0 = arith.constant 0 : i32
    %c0_i32_1 = arith.constant 0 : i32
    return %c0_i32, %c0_i32_0 : i32, i32
  }
  func.func @transform_9(%arg0: i32) -> (i32, i32) {
    %c0_i32 = arith.constant 0 : i32
    %c0_i32_0 = arith.constant 0 : i32
    %c0_i32_1 = arith.constant 0 : i32
    return %c0_i32, %c0_i32_0 : i32, i32
  }
}

</mosaic_0001>

<llo_original>
// kernel: tpu_custom_call.1
$region0: #{tpu_custom_call.1}
  #allocation0 [shape = 'u32[]', space=smem, size = 0x4, offset = 0x4, fixed_abs, tag = 'smem constant byte address 0x4 - core index']
  #allocation1 [shape = 'u32[72,128]{1,0:T(1,128)}', space=vmem, size = 0x9000, scoped, tag = 'internal scratch']
  #allocation2 [shape = 'f32[2,8,128]{2,1,0:T(8,128)}', space=vmem, size = 0x2000, scoped, tag = 'scratch operand']
  #allocation3 [shape = 'f32[2,8,128]{2,1,0:T(8,128)}', space=vmem, size = 0x2000, scoped, tag = 'scratch operand']
  #allocation4 [shape = 'f32[32,128]{1,0:T(8,128)}', space=vmem, size = 0x4000, scoped, tag = 'scratch operand']
  #allocation5 [shape = 'f32[32,512]{1,0:T(8,128)}', space=vmem, size = 0x10000, scoped, tag = 'scratch operand']
  %s0 = inlined_call_operand.hbm [shape: f32[128,128], index: 0, kind: input, shape index: {}]
  %s1 = inlined_call_operand.hbm [shape: f32[128,512], index: 1, kind: input, shape index: {}]
  %s2 = inlined_call_operand.hbm [shape: f32[128,512], index: 2, kind: input, shape index: {}]
  %s3 = inlined_call_operand.hbm [shape: f32[1,512], index: 3, kind: input, shape index: {}]
  %s4 = inlined_call_operand.hbm [shape: f32[128,512], index: 4, kind: input, shape index: {}]
  %s5 = inlined_call_operand.hbm [shape: f32[128,512], index: 5, kind: input, shape index: {}]
  %s6 = inlined_call_operand.vmem [shape: f32[1,512], index: 6, kind: input, shape index: {}]
  %s7 = inlined_call_operand.hbm [shape: f32[128,128], index: 7, kind: input, shape index: {}]
  %s8 = inlined_call_operand.vmem [shape: f32[1,128], index: 8, kind: input, shape index: {}]
  %s9 = inlined_call_operand.hbm [shape: f32[8,128], index: 9, kind: output, shape index: {}]
  %s10 = sld [smem:[#allocation0]]
  $region105: #{tpu_custom_call.1} parent=0
    _
  %s12 = ssub.s32 1, %s10
  %s13 = scalar_select 0, %s12, %s10
  $region1: #{tpu_custom_call.1} parent=0
    #allocation6 [shape = 'u8[32768]{0}', space=vmem, size = 0x8000, scoped, tag = 'input window, operand 0']
    #allocation7 [shape = 's32[2]{0}', space=sflag, size = 0x8, scoped, tag = 'scoped memory for tpu_custom_call.1']
    #allocation8 [shape = 's32[2]{0}', space=sflag, size = 0x8, scoped, tag = 'scoped memory for tpu_custom_call.1']
    #allocation9 [shape = 'u8[262144]{0}', space=vmem, size = 0x40000, scoped, tag = 'input window, operand 1, single buffered']
    #allocation10 [shape = 's32[1]{0}', space=sflag, size = 0x4, scoped, tag = 'scoped memory for tpu_custom_call.1']
    #allocation11 [shape = 'u8[262144]{0}', space=vmem, size = 0x40000, scoped, tag = 'input window, operand 2, single buffered']
    #allocation12 [shape = 'u8[2048]{0}', space=vmem, size = 0x800, scoped, tag = 'input window, operand 3, single buffered']
    #allocation13 [shape = 's32[1]{0}', space=sflag, size = 0x4, scoped, tag = 'scoped memory for tpu_custom_call.1']
    #allocation14 [shape = 'u8[262144]{0}', space=vmem, size = 0x40000, scoped, tag = 'input window, operand 4, single buffered']
    #allocation15 [shape = 'u8[262144]{0}', space=vmem, size = 0x40000, scoped, tag = 'input window, operand 5, single buffered']
    #allocation16 [shape = 's32[1]{0}', space=sflag, size = 0x4, scoped, tag = 'scoped memory for tpu_custom_call.1']
    #allocation17 [shape = 'u8[65536]{0}', space=vmem, size = 0x10000, scoped, tag = 'input window, operand 7, single buffered']
    #allocation18 [shape = 'u8[4096]{0}', space=vmem, size = 0x1000, scoped, tag = 'output window, operand 0, single buffered']
    %14 = vsyncpa [#allocation7], 0
    %s15 = scalar_lea.sflag [#allocation7], 1
    %16 = vsyncpa %s15, 0
    %17 = vsyncpa [#allocation10], 0
    %18 = vsyncpa [#allocation13], 0
    %19 = vsyncpa [#allocation16], 0
    %20 = vsyncpa [#allocation8], 0
    loop: start=0, step=1, limit=6
    $region2: #{tpu_custom_call.1} parent=1 // loop_pre_header
      _
    $region3: #{tpu_custom_call.1} parent=1 // loop_header
      %s22 = sphi 0, %s26
      %p23 = scmp.ge.s32.totalorder %s22, 6
      %s32 = sphi 0, %s34
      %s35 = sphi 0, %s32
      %s36 = sphi 0, %s35
      %s52 = sphi 0, %s36
      %s56 = sphi 0, %s56
      %s58 = sphi 0, %s56
      %s59 = sphi 0, %s58
      %s73 = sphi 0, %s59
      %s77 = sphi 0, %s77
      %s79 = sphi 0, %s77
      %s80 = sphi 0, %s79
      %s94 = sphi 0, %s80
      %s98 = sphi 0, %s98
      %s100 = sphi 0, %s98
      %s101 = sphi 0, %s100
      %s115 = sphi 0, %s101
      %s119 = sphi 0, %s119
      %s121 = sphi 0, %s119
      %s122 = sphi 0, %s121
      %s136 = sphi 0, %s122
      %s140 = sphi 0, %s140
      %s142 = sphi 0, %s140
      %s143 = sphi 0, %s142
      %s157 = sphi 0, %s143
      %s161 = sphi 0, %s161
      %s163 = sphi 0, %s161
      %s164 = sphi 0, %s163
      %s178 = sphi 0, %s164
      %s182 = sphi 0, %s182
      %s184 = sphi 0, %s182
      %s185 = sphi 0, %s184
      %s199 = sphi 0, %s185
      %s203 = sphi 0, %s203
      %s205 = sphi 0, %s203
      %s206 = sphi 0, %s205
      %s220 = sphi 0, %s206
      %s224 = sphi 0, %s224
      %s226 = sphi 0, %s224
      %s227 = sphi 0, %s226
      %s241 = sphi 0, %s227
    $region4: #{tpu_custom_call.1} parent=1 // loop_header_branch
      %25 = sbr.rel (%p23) target = $region8
    $region5: #{tpu_custom_call.1} parent=1 // loop_body
      %s27 = ssub.s32 %s22, 1
      %s28 = ssub.s32 %s22, 2
      %s29 = sadd.s32 %s22, 1
      %s30 = ssub.s32 %s22, %s29
      %p31 = scmp.eq.s32.totalorder %s30, 0
      %s33 = sadd.s32 %s32, 1
      %s34 = scalar_select %p31, %s32, %s33
      %p37 = pneg %p31
      %p38 = scmp.eq.s32.totalorder %s22, 3
      %p39 = por %p37, %p38
      %p40 = scmp.ne.s32.totalorder %s32, %s35
      %p41 = scmp.eq.s32.totalorder %s22, 0
      %p42 = por %p40, %p41
      %p43 = scmp.ne.s32.totalorder %s32, %s35
      %p44 = scmp.eq.s32.totalorder %s27, 3
      %p45 = por %p43, %p44
      %p46 = scmp.ne.s32.totalorder %s35, %s36
      %p47 = scmp.eq.s32.totalorder %s27, 0
      %p48 = por %p46, %p47
      %p49 = scmp.ne.s32.totalorder %s35, %s36
      %p50 = scmp.eq.s32.totalorder %s28, 3
      %p51 = por %p49, %p50
      %p53 = scmp.ne.s32.totalorder %s36, %s52
      %p54 = scmp.eq.s32.totalorder %s28, 0
      %p55 = por %p53, %p54
      %s57 = sadd.s32 %s56, 1
      %p60 = scmp.eq.s32.totalorder %s22, 3
      %p61 = scmp.ne.s32.totalorder %s56, %s58
      %p62 = scmp.eq.s32.totalorder %s22, 0
      %p63 = por %p61, %p62
      %p64 = scmp.ne.s32.totalorder %s56, %s58
      %p65 = scmp.eq.s32.totalorder %s27, 3
      %p66 = por %p64, %p65
      %p67 = scmp.ne.s32.totalorder %s58, %s59
      %p68 = scmp.eq.s32.totalorder %s27, 0
      %p69 = por %p67, %p68
      %p70 = scmp.ne.s32.totalorder %s58, %s59
      %p71 = scmp.eq.s32.totalorder %s28, 3
      %p72 = por %p70, %p71
      %p74 = scmp.ne.s32.totalorder %s59, %s73
      %p75 = scmp.eq.s32.totalorder %s28, 0
      %p76 = por %p74, %p75
      %s78 = sadd.s32 %s77, 1
      %p81 = scmp.eq.s32.totalorder %s22, 3
      %p82 = scmp.ne.s32.totalorder %s77, %s79
      %p83 = scmp.eq.s32.totalorder %s22, 0
      %p84 = por %p82, %p83
      %p85 = scmp.ne.s32.totalorder %s77, %s79
      %p86 = scmp.eq.s32.totalorder %s27, 3
      %p87 = por %p85, %p86
      %p88 = scmp.ne.s32.totalorder %s79, %s80
      %p89 = scmp.eq.s32.totalorder %s27, 0
      %p90 = por %p88, %p89
      %p91 = scmp.ne.s32.totalorder %s79, %s80
      %p92 = scmp.eq.s32.totalorder %s28, 3
      %p93 = por %p91, %p92
      %p95 = scmp.ne.s32.totalorder %s80, %s94
      %p96 = scmp.eq.s32.totalorder %s28, 0
      %p97 = por %p95, %p96
      %s99 = sadd.s32 %s98, 1
      %p102 = scmp.eq.s32.totalorder %s22, 3
      %p103 = scmp.ne.s32.totalorder %s98, %s100
      %p104 = scmp.eq.s32.totalorder %s22, 0
      %p105 = por %p103, %p104
      %p106 = scmp.ne.s32.totalorder %s98, %s100
      %p107 = scmp.eq.s32.totalorder %s27, 3
      %p108 = por %p106, %p107
      %p109 = scmp.ne.s32.totalorder %s100, %s101
      %p110 = scmp.eq.s32.totalorder %s27, 0
      %p111 = por %p109, %p110
      %p112 = scmp.ne.s32.totalorder %s100, %s101
      %p113 = scmp.eq.s32.totalorder %s28, 3
      %p114 = por %p112, %p113
      %p116 = scmp.ne.s32.totalorder %s101, %s115
      %p117 = scmp.eq.s32.totalorder %s28, 0
      %p118 = por %p116, %p117
      %s120 = sadd.s32 %s119, 1
      %p123 = scmp.eq.s32.totalorder %s22, 3
      %p124 = scmp.ne.s32.totalorder %s119, %s121
      %p125 = scmp.eq.s32.totalorder %s22, 0
      %p126 = por %p124, %p125
      %p127 = scmp.ne.s32.totalorder %s119, %s121
      %p128 = scmp.eq.s32.totalorder %s27, 3
      %p129 = por %p127, %p128
      %p130 = scmp.ne.s32.totalorder %s121, %s122
      %p131 = scmp.eq.s32.totalorder %s27, 0
      %p132 = por %p130, %p131
      %p133 = scmp.ne.s32.totalorder %s121, %s122
      %p134 = scmp.eq.s32.totalorder %s28, 3
      %p135 = por %p133, %p134
      %p137 = scmp.ne.s32.totalorder %s122, %s136
      %p138 = scmp.eq.s32.totalorder %s28, 0
      %p139 = por %p137, %p138
      %s141 = sadd.s32 %s140, 1
      %p144 = scmp.eq.s32.totalorder %s22, 3
      %p145 = scmp.ne.s32.totalorder %s140, %s142
      %p146 = scmp.eq.s32.totalorder %s22, 0
      %p147 = por %p145, %p146
      %p148 = scmp.ne.s32.totalorder %s140, %s142
      %p149 = scmp.eq.s32.totalorder %s27, 3
      %p150 = por %p148, %p149
      %p151 = scmp.ne.s32.totalorder %s142, %s143
      %p152 = scmp.eq.s32.totalorder %s27, 0
      %p153 = por %p151, %p152
      %p154 = scmp.ne.s32.totalorder %s142, %s143
      %p155 = scmp.eq.s32.totalorder %s28, 3
      %p156 = por %p154, %p155
      %p158 = scmp.ne.s32.totalorder %s143, %s157
      %p159 = scmp.eq.s32.totalorder %s28, 0
      %p160 = por %p158, %p159
      %s162 = sadd.s32 %s161, 1
      %p165 = scmp.eq.s32.totalorder %s22, 3
      %p166 = scmp.ne.s32.totalorder %s161, %s163
      %p167 = scmp.eq.s32.totalorder %s22, 0
      %p168 = por %p166, %p167
      %p169 = scmp.ne.s32.totalorder %s161, %s163
      %p170 = scmp.eq.s32.totalorder %s27, 3
      %p171 = por %p169, %p170
      %p172 = scmp.ne.s32.totalorder %s163, %s164
      %p173 = scmp.eq.s32.totalorder %s27, 0
      %p174 = por %p172, %p173
      %p175 = scmp.ne.s32.totalorder %s163, %s164
      %p176 = scmp.eq.s32.totalorder %s28, 3
      %p177 = por %p175, %p176
      %p179 = scmp.ne.s32.totalorder %s164, %s178
      %p180 = scmp.eq.s32.totalorder %s28, 0
      %p181 = por %p179, %p180
      %s183 = sadd.s32 %s182, 1
      %p186 = scmp.eq.s32.totalorder %s22, 3
      %p187 = scmp.ne.s32.totalorder %s182, %s184
      %p188 = scmp.eq.s32.totalorder %s22, 0
      %p189 = por %p187, %p188
      %p190 = scmp.ne.s32.totalorder %s182, %s184
      %p191 = scmp.eq.s32.totalorder %s27, 3
      %p192 = por %p190, %p191
      %p193 = scmp.ne.s32.totalorder %s184, %s185
      %p194 = scmp.eq.s32.totalorder %s27, 0
      %p195 = por %p193, %p194
      %p196 = scmp.ne.s32.totalorder %s184, %s185
      %p197 = scmp.eq.s32.totalorder %s28, 3
      %p198 = por %p196, %p197
      %p200 = scmp.ne.s32.totalorder %s185, %s199
      %p201 = scmp.eq.s32.totalorder %s28, 0
      %p202 = por %p200, %p201
      %s204 = sadd.s32 %s203, 1
      %p207 = scmp.eq.s32.totalorder %s22, 3
      %p208 = scmp.ne.s32.totalorder %s203, %s205
      %p209 = scmp.eq.s32.totalorder %s22, 0
      %p210 = por %p208, %p209
      %p211 = scmp.ne.s32.totalorder %s203, %s205
      %p212 = scmp.eq.s32.totalorder %s27, 3
      %p213 = por %p211, %p212
      %p214 = scmp.ne.s32.totalorder %s205, %s206
      %p215 = scmp.eq.s32.totalorder %s27, 0
      %p216 = por %p214, %p215
      %p217 = scmp.ne.s32.totalorder %s205, %s206
      %p218 = scmp.eq.s32.totalorder %s28, 3
      %p219 = por %p217, %p218
      %p221 = scmp.ne.s32.totalorder %s206, %s220
      %p222 = scmp.eq.s32.totalorder %s28, 0
      %p223 = por %p221, %p222
      %s225 = sadd.s32 %s224, 1
      %p228 = scmp.eq.s32.totalorder %s22, 3
      %p229 = scmp.ne.s32.totalorder %s224, %s226
      %p230 = scmp.eq.s32.totalorder %s22, 0
      %p231 = por %p229, %p230
      %p232 = scmp.ne.s32.totalorder %s224, %s226
      %p233 = scmp.eq.s32.totalorder %s27, 3
      %p234 = por %p232, %p233
      %p235 = scmp.ne.s32.totalorder %s226, %s227
      %p236 = scmp.eq.s32.totalorder %s27, 0
      %p237 = por %p235, %p236
      %p238 = scmp.ne.s32.totalorder %s226, %s227
      %p239 = scmp.eq.s32.totalorder %s28, 3
      %p240 = por %p238, %p239
      %p242 = scmp.ne.s32.totalorder %s227, %s241
      %p243 = scmp.eq.s32.totalorder %s28, 0
      %p244 = por %p242, %p243
      %p245 = scmp.le.s32.totalorder 1, %s22
      %p246 = scmp.lt.s32.totalorder %s22, 5
      %p247 = pnand %p245, %p246
      %p248 = pneg %p247
      // Predicated region
      $region9: #{tpu_custom_call.1} parent=5 // pred_check
        _
      $region10: #{tpu_custom_call.1} parent=5 // pred_check_branch
        %250 = sbr.rel (%p247) target = $region12
      $region11: #{tpu_custom_call.1} parent=5 // pred_region
        %s251 = ssub.s32 %s22, 1
        // Predicated region
        $region13: #{tpu_custom_call.1} parent=11 // pred_check
          %p252 = pneg %p69
        $region14: #{tpu_custom_call.1} parent=11 // pred_check_branch
          %254 = sbr.rel (%p252) target = $region16
        $region15: #{tpu_custom_call.1} parent=11 // pred_region
          %256 = vsyncadd [#allocation10], 0
          %s257 = sshll.u32 %s1, 4
          %s258 = int_to_ptr.hbm [resolvable:$true] %s257
          %s259 = sshll.u32 [#allocation9], 4
          %s260 = int_to_ptr.vmem [resolvable:$true] %s259
          %265 = dma.hbm_to_vmem [thread:$0]  %s258, 8192, %s260, [#allocation10], 512, 512, 32
        $region16: #{tpu_custom_call.1} parent=11 // pred_fallthru
          _
        // Predicated region
        $region17: #{tpu_custom_call.1} parent=11 // pred_check
          %p266 = pneg %p90
        $region18: #{tpu_custom_call.1} parent=11 // pred_check_branch
          %268 = sbr.rel (%p266) target = $region20
        $region19: #{tpu_custom_call.1} parent=11 // pred_region
          %270 = vsyncadd [#allocation10], 0
          %s271 = sshll.u32 %s2, 4
          %s272 = int_to_ptr.hbm [resolvable:$true] %s271
          %s273 = sshll.u32 [#allocation11], 4
          %s274 = int_to_ptr.vmem [resolvable:$true] %s273
          %279 = dma.hbm_to_vmem [thread:$0]  %s272, 8192, %s274, [#allocation10], 512, 512, 32
        $region20: #{tpu_custom_call.1} parent=11 // pred_fallthru
          _
        // Predicated region
        $region21: #{tpu_custom_call.1} parent=11 // pred_check
          %p280 = pneg %p111
        $region22: #{tpu_custom_call.1} parent=11 // pred_check_branch
          %282 = sbr.rel (%p280) target = $region24
        $region23: #{tpu_custom_call.1} parent=11 // pred_region
          %284 = vsyncadd [#allocation13], 0
          %s286 = sshll.u32 %s3, 4
          %s287 = int_to_ptr.hbm [resolvable:$true] %s286
          %s288 = sshll.u32 [#allocation12], 4
          %s289 = int_to_ptr.vmem [resolvable:$true] %s288
          %291 = dma.hbm_to_vmem [thread:$0]  %s287, 64, %s289, [#allocation13]
        $region24: #{tpu_custom_call.1} parent=11 // pred_fallthru
          _
        // Predicated region
        $region25: #{tpu_custom_call.1} parent=11 // pred_check
          %p292 = pneg %p132
        $region26: #{tpu_custom_call.1} parent=11 // pred_check_branch
          %294 = sbr.rel (%p292) target = $region28
        $region27: #{tpu_custom_call.1} parent=11 // pred_region
          %296 = vsyncadd [#allocation13], 0
          %s297 = sshll.u32 %s4, 4
          %s298 = int_to_ptr.hbm [resolvable:$true] %s297
          %s299 = sshll.u32 [#allocation14], 4
          %s300 = int_to_ptr.vmem [resolvable:$true] %s299
          %305 = dma.hbm_to_vmem [thread:$0]  %s298, 8192, %s300, [#allocation13], 512, 512, 32
        $region28: #{tpu_custom_call.1} parent=11 // pred_fallthru
          _
        // Predicated region
        $region29: #{tpu_custom_call.1} parent=11 // pred_check
          %p306 = pneg %p153
        $region30: #{tpu_custom_call.1} parent=11 // pred_check_branch
          %308 = sbr.rel (%p306) target = $region32
        $region31: #{tpu_custom_call.1} parent=11 // pred_region
          %310 = vsyncadd [#allocation16], 0
          %s311 = sshll.u32 %s5, 4
          %s312 = int_to_ptr.hbm [resolvable:$true] %s311
          %s313 = sshll.u32 [#allocation15], 4
          %s314 = int_to_ptr.vmem [resolvable:$true] %s313
          %319 = dma.hbm_to_vmem [thread:$0]  %s312, 8192, %s314, [#allocation16], 512, 512, 32
        $region32: #{tpu_custom_call.1} parent=11 // pred_fallthru
          _
        // Predicated region
        $region33: #{tpu_custom_call.1} parent=11 // pred_check
          %p320 = pneg %p174
        $region34: #{tpu_custom_call.1} parent=11 // pred_check_branch
          %322 = sbr.rel (%p320) target = $region36
        $region35: #{tpu_custom_call.1} parent=11 // pred_region
          _
        $region36: #{tpu_custom_call.1} parent=11 // pred_fallthru
          _
        // Predicated region
        $region37: #{tpu_custom_call.1} parent=11 // pred_check
          %p323 = pneg %p195
        $region38: #{tpu_custom_call.1} parent=11 // pred_check_branch
          %325 = sbr.rel (%p323) target = $region40
        $region39: #{tpu_custom_call.1} parent=11 // pred_region
          %327 = vsyncadd [#allocation16], 0
          %s328 = sshll.u32 %s7, 4
          %s329 = int_to_ptr.hbm [resolvable:$true] %s328
          %s330 = sshll.u32 [#allocation17], 4
          %s331 = int_to_ptr.vmem [resolvable:$true] %s330
          %336 = dma.hbm_to_vmem [thread:$0]  %s329, 2048, %s331, [#allocation16], 128, 128, 8
        $region40: #{tpu_custom_call.1} parent=11 // pred_fallthru
          _
        // Predicated region
        $region41: #{tpu_custom_call.1} parent=11 // pred_check
          %p337 = pneg %p216
        $region42: #{tpu_custom_call.1} parent=11 // pred_check_branch
          %339 = sbr.rel (%p337) target = $region44
        $region43: #{tpu_custom_call.1} parent=11 // pred_region
          _
        $region44: #{tpu_custom_call.1} parent=11 // pred_fallthru
          _
      $region12: #{tpu_custom_call.1} parent=5 // pred_fallthru
        _
      %p340 = scmp.lt.s32.totalorder %s22, 4
      // Predicated region
      $region45: #{tpu_custom_call.1} parent=5 // pred_check
        %p341 = pneg %p340
      $region46: #{tpu_custom_call.1} parent=5 // pred_check_branch
        %343 = sbr.rel (%p341) target = $region48
      $region47: #{tpu_custom_call.1} parent=5 // pred_region
        // Predicated region
        $region49: #{tpu_custom_call.1} parent=47 // pred_check
          %p344 = pneg %p42
        $region50: #{tpu_custom_call.1} parent=47 // pred_check_branch
          %346 = sbr.rel (%p344) target = $region52
        $region51: #{tpu_custom_call.1} parent=47 // pred_region
          %s347 = sand.u32 %s32, 1
          %s348 = scalar_lea.sflag [#allocation7], %s347
          %s349 = sand.u32 %s32, 1
          %s350 = smul.addr %s349, 32
          %s351 = scalar_lea.vmem [#allocation6], %s350
          %s352 = smul.u32 4, %s22
          %354 = vsyncadd %s348, 0
          %s355 = smul.addr %s352, 8
          %s356 = scalar_lea.hbm %s0, %s355
          %s357 = sshll.u32 %s356, 4
          %s358 = int_to_ptr.hbm [resolvable:$true] %s357
          %s359 = sshll.u32 %s351, 4
          %s360 = int_to_ptr.vmem [resolvable:$true] %s359
          %365 = dma.hbm_to_vmem [thread:$0]  %s358, 512, %s360, %s348, 128, 128, 8
        $region52: #{tpu_custom_call.1} parent=47 // pred_fallthru
          _
      $region48: #{tpu_custom_call.1} parent=5 // pred_fallthru
        _
      %p366 = scmp.le.s32.totalorder 1, %s22
      %p367 = scmp.lt.s32.totalorder %s22, 5
      %p368 = pnand %p366, %p367
      %p369 = pneg %p368
      // Predicated region
      $region53: #{tpu_custom_call.1} parent=5 // pred_check
        _
      $region54: #{tpu_custom_call.1} parent=5 // pred_check_branch
        %371 = sbr.rel (%p368) target = $region56
      $region55: #{tpu_custom_call.1} parent=5 // pred_region
        %s372 = ssub.s32 %s22, 1
        %s373 = sand.u32 %s35, 1
        %s374 = scalar_lea.sflag [#allocation7], %s373
        %s375 = sand.u32 %s35, 1
        %s376 = smul.addr %s375, 32
        %s377 = scalar_lea.vmem [#allocation6], %s376
        // Predicated region
        $region57: #{tpu_custom_call.1} parent=55 // pred_check
          %p378 = pneg %p48
        $region58: #{tpu_custom_call.1} parent=55 // pred_check_branch
          %380 = sbr.rel (%p378) target = $region60
        $region59: #{tpu_custom_call.1} parent=55 // pred_region
          %382 = dma.done %s374, 512
        $region60: #{tpu_custom_call.1} parent=55 // pred_fallthru
          _
        // Predicated region
        $region61: #{tpu_custom_call.1} parent=55 // pred_check
          %p383 = pneg %p69
        $region62: #{tpu_custom_call.1} parent=55 // pred_check_branch
          %385 = sbr.rel (%p383) target = $region64
        $region63: #{tpu_custom_call.1} parent=55 // pred_region
          %387 = dma.done [#allocation10], 8192
        $region64: #{tpu_custom_call.1} parent=55 // pred_fallthru
          _
        // Predicated region
        $region65: #{tpu_custom_call.1} parent=55 // pred_check
          %p388 = pneg %p90
        $region66: #{tpu_custom_call.1} parent=55 // pred_check_branch
          %390 = sbr.rel (%p388) target = $region68
        $region67: #{tpu_custom_call.1} parent=55 // pred_region
          %392 = dma.done [#allocation10], 8192
        $region68: #{tpu_custom_call.1} parent=55 // pred_fallthru
          _
        // Predicated region
        $region69: #{tpu_custom_call.1} parent=55 // pred_check
          %p393 = pneg %p111
        $region70: #{tpu_custom_call.1} parent=55 // pred_check_branch
          %395 = sbr.rel (%p393) target = $region72
        $region71: #{tpu_custom_call.1} parent=55 // pred_region
          %397 = dma.done [#allocation13], 64
        $region72: #{tpu_custom_call.1} parent=55 // pred_fallthru
          _
        // Predicated region
        $region73: #{tpu_custom_call.1} parent=55 // pred_check
          %p398 = pneg %p132
        $region74: #{tpu_custom_call.1} parent=55 // pred_check_branch
          %400 = sbr.rel (%p398) target = $region76
        $region75: #{tpu_custom_call.1} parent=55 // pred_region
          %402 = dma.done [#allocation13], 8192
        $region76: #{tpu_custom_call.1} parent=55 // pred_fallthru
          _
        // Predicated region
        $region77: #{tpu_custom_call.1} parent=55 // pred_check
          %p403 = pneg %p153
        $region78: #{tpu_custom_call.1} parent=55 // pred_check_branch
          %405 = sbr.rel (%p403) target = $region80
        $region79: #{tpu_custom_call.1} parent=55 // pred_region
          %407 = dma.done [#allocation16], 8192
        $region80: #{tpu_custom_call.1} parent=55 // pred_fallthru
          _
        // Predicated region
        $region81: #{tpu_custom_call.1} parent=55 // pred_check
          %p408 = pneg %p195
        $region82: #{tpu_custom_call.1} parent=55 // pred_check_branch
          %410 = sbr.rel (%p408) target = $region84
        $region83: #{tpu_custom_call.1} parent=55 // pred_region
          %412 = dma.done [#allocation16], 2048
        $region84: #{tpu_custom_call.1} parent=55 // pred_fallthru
          _
        %s413 = sand.u32 %s35, 1
        %s414 = scalar_lea.sflag [#allocation7], %s413
        %s415 = sand.u32 %s35, 1
        %s416 = smul.addr %s415, 32
        %s417 = scalar_lea.vmem [#allocation6], %s416
        %p418 = pneg %p48
        %p419 = pneg %p45
        %p420 = pneg %p69
        %p421 = pneg %p66
        %p422 = pneg %p90
        %p423 = pneg %p87
        %p424 = pneg %p111
        %p425 = pneg %p108
        %p426 = pneg %p132
        %p427 = pneg %p129
        %p428 = pneg %p153
        %p429 = pneg %p150
        %p430 = pneg %p174
        %p431 = pneg %p171
        %p432 = pneg %p195
        %p433 = pneg %p192
        %p434 = pneg %p216
        %p435 = pneg %p213
        %p436 = pneg %p237
        %p437 = pneg %p234
        %s438 = smul.u32 4, %s27
        %p439 = scmp.eq.s32.totalorder %s27, 0
        // Predicated region
        $region85: #{tpu_custom_call.1} parent=55 // pred_check
          %p440 = pneg %p439
        $region86: #{tpu_custom_call.1} parent=55 // pred_check_branch
          %442 = sbr.rel (%p440) target = $region88
        $region87: #{tpu_custom_call.1} parent=55 // pred_region
          %443 = vst [vmem:[#allocation2] sm:$0xff] 0.0
          %444 = vst [vmem:[#allocation2 + $0x8] sm:$0xff] 0.0
          %445 = vst [vmem:[#allocation3] sm:$0xff] 0.0
          %446 = vst [vmem:[#allocation3 + $0x8] sm:$0xff] 0.0
        $region88: #{tpu_custom_call.1} parent=55 // pred_fallthru
          _
        %v447 = vld [vmem:[%s377] sm:$0xff]
        %v448 = vld [vmem:[%s377 + $0x8] sm:$0xff]
        %v449 = vld [vmem:[%s377 + $0x10] sm:$0xff]
        %v450 = vld [vmem:[%s377 + $0x18] sm:$0xff]
        %v451 = vld [vmem:[#allocation9] sm:$0xff]
        %v452 = vld [vmem:[#allocation9 + $0x8] sm:$0xff]
        %v453 = vld [vmem:[#allocation9 + $0x10] sm:$0xff]
        %v454 = vld [vmem:[#allocation9 + $0x18] sm:$0xff]
        %v455 = vld [vmem:[#allocation9 + $0x20] sm:$0xff]
        %v456 = vld [vmem:[#allocation9 + $0x28] sm:$0xff]
        %v457 = vld [vmem:[#allocation9 + $0x30] sm:$0xff]
        %v458 = vld [vmem:[#allocation9 + $0x38] sm:$0xff]
        %v459 = vld [vmem:[#allocation9 + $0x40] sm:$0xff]
        %v460 = vld [vmem:[#allocation9 + $0x48] sm:$0xff]
        %v461 = vld [vmem:[#allocation9 + $0x50] sm:$0xff]
        %v462 = vld [vmem:[#allocation9 + $0x58] sm:$0xff]
        %v463 = vld [vmem:[#allocation9 + $0x60] sm:$0xff]
        %v464 = vld [vmem:[#allocation9 + $0x68] sm:$0xff]
        %v465 = vld [vmem:[#allocation9 + $0x70] sm:$0xff]
        %v466 = vld [vmem:[#allocation9 + $0x78] sm:$0xff]
        %v467 = vld [vmem:[#allocation9 + $0x80] sm:$0xff]
        %v468 = vld [vmem:[#allocation9 + $0x88] sm:$0xff]
        %v469 = vld [vmem:[#allocation9 + $0x90] sm:$0xff]
        %v470 = vld [vmem:[#allocation9 + $0x98] sm:$0xff]
        %v471 = vld [vmem:[#allocation9 + $0xa0] sm:$0xff]
        %v472 = vld [vmem:[#allocation9 + $0xa8] sm:$0xff]
        %v473 = vld [vmem:[#allocation9 + $0xb0] sm:$0xff]
        %v474 = vld [vmem:[#allocation9 + $0xb8] sm:$0xff]
        %v475 = vld [vmem:[#allocation9 + $0xc0] sm:$0xff]
        %v476 = vld [vmem:[#allocation9 + $0xc8] sm:$0xff]
        %v477 = vld [vmem:[#allocation9 + $0xd0] sm:$0xff]
        %v478 = vld [vmem:[#allocation9 + $0xd8] sm:$0xff]
        %v479 = vld [vmem:[#allocation9 + $0xe0] sm:$0xff]
        %v480 = vld [vmem:[#allocation9 + $0xe8] sm:$0xff]
        %v481 = vld [vmem:[#allocation9 + $0xf0] sm:$0xff]
        %v482 = vld [vmem:[#allocation9 + $0xf8] sm:$0xff]
        %v483 = vld [vmem:[#allocation9 + $0x100] sm:$0xff]
        %v484 = vld [vmem:[#allocation9 + $0x108] sm:$0xff]
        %v485 = vld [vmem:[#allocation9 + $0x110] sm:$0xff]
        %v486 = vld [vmem:[#allocation9 + $0x118] sm:$0xff]
        %v487 = vld [vmem:[#allocation9 + $0x120] sm:$0xff]
        %v488 = vld [vmem:[#allocation9 + $0x128] sm:$0xff]
        %v489 = vld [vmem:[#allocation9 + $0x130] sm:$0xff]
        %v490 = vld [vmem:[#allocation9 + $0x138] sm:$0xff]
        %v491 = vld [vmem:[#allocation9 + $0x140] sm:$0xff]
        %v492 = vld [vmem:[#allocation9 + $0x148] sm:$0xff]
        %v493 = vld [vmem:[#allocation9 + $0x150] sm:$0xff]
        %v494 = vld [vmem:[#allocation9 + $0x158] sm:$0xff]
        %v495 = vld [vmem:[#allocation9 + $0x160] sm:$0xff]
        %v496 = vld [vmem:[#allocation9 + $0x168] sm:$0xff]
        %v497 = vld [vmem:[#allocation9 + $0x170] sm:$0xff]
        %v498 = vld [vmem:[#allocation9 + $0x178] sm:$0xff]
        %v499 = vld [vmem:[#allocation9 + $0x180] sm:$0xff]
        %v500 = vld [vmem:[#allocation9 + $0x188] sm:$0xff]
        %v501 = vld [vmem:[#allocation9 + $0x190] sm:$0xff]
        %v502 = vld [vmem:[#allocation9 + $0x198] sm:$0xff]
        %v503 = vld [vmem:[#allocation9 + $0x1a0] sm:$0xff]
        %v504 = vld [vmem:[#allocation9 + $0x1a8] sm:$0xff]
        %v505 = vld [vmem:[#allocation9 + $0x1b0] sm:$0xff]
        %v506 = vld [vmem:[#allocation9 + $0x1b8] sm:$0xff]
        %v507 = vld [vmem:[#allocation9 + $0x1c0] sm:$0xff]
        %v508 = vld [vmem:[#allocation9 + $0x1c8] sm:$0xff]
        %v509 = vld [vmem:[#allocation9 + $0x1d0] sm:$0xff]
        %v510 = vld [vmem:[#allocation9 + $0x1d8] sm:$0xff]
        %v511 = vld [vmem:[#allocation9 + $0x1e0] sm:$0xff]
        %v512 = vld [vmem:[#allocation9 + $0x1e8] sm:$0xff]
        %v513 = vld [vmem:[#allocation9 + $0x1f0] sm:$0xff]
        %v514 = vld [vmem:[#allocation9 + $0x1f8] sm:$0xff]
        %v515 = vld [vmem:[#allocation12] sm:$0xf]
        %v517 = vperm.slane %v515, 0
        %v518 = vperm.slane %v515, 1
        %v519 = vperm.slane %v515, 2
        %v520 = vperm.slane %v515, 3
        %525 = vmatpush.msra.mxu0 %v511
        %526 = vmatpush.msra.mxu0 %v507
        %527 = vmatpush.msra.mxu0 %v503
        %528 = vmatpush.msra.mxu0 %v499
        %529 = vmatpush.msra.mxu0 %v495
        %530 = vmatpush.msra.mxu0 %v491
        %531 = vmatpush.msra.mxu0 %v487
        %532 = vmatpush.msra.mxu0 %v483
        %533 = vmatpush.msra.mxu0 %v479
        %534 = vmatpush.msra.mxu0 %v475
        %535 = vmatpush.msra.mxu0 %v471
        %536 = vmatpush.msra.mxu0 %v467
        %537 = vmatpush.msra.mxu0 %v463
        %538 = vmatpush.msra.mxu0 %v459
        %539 = vmatpush.msra.mxu0 %v455
        %540 = vmatpush.msra.mxu0 %v451
        %541 = vmatmul.f32.gmra.mxu0 %v447
        %v542 = vpop.f32.mrf.mxu0
        %v543 = vadd.f32 %v517, %v542
        %544 = vmatmul.f32.gmra.mxu0 %v448
        %v545 = vpop.f32.mrf.mxu0
        %v546 = vadd.f32 %v517, %v545
        %547 = vmatmul.f32.gmra.mxu0 %v449
        %v548 = vpop.f32.mrf.mxu0
        %v549 = vadd.f32 %v517, %v548
        %550 = vmatmul.f32.gmra.mxu0 %v450
        %v551 = vpop.f32.mrf.mxu0
        %v552 = vadd.f32 %v517, %v551
        %553 = vdwg.mxu0
        %554 = vmatpush.msra.mxu0 %v512
        %555 = vmatpush.msra.mxu0 %v508
        %556 = vmatpush.msra.mxu0 %v504
        %557 = vmatpush.msra.mxu0 %v500
        %558 = vmatpush.msra.mxu0 %v496
        %559 = vmatpush.msra.mxu0 %v492
        %560 = vmatpush.msra.mxu0 %v488
        %561 = vmatpush.msra.mxu0 %v484
        %562 = vmatpush.msra.mxu0 %v480
        %563 = vmatpush.msra.mxu0 %v476
        %564 = vmatpush.msra.mxu0 %v472
        %565 = vmatpush.msra.mxu0 %v468
        %566 = vmatpush.msra.mxu0 %v464
        %567 = vmatpush.msra.mxu0 %v460
        %568 = vmatpush.msra.mxu0 %v456
        %569 = vmatpush.msra.mxu0 %v452
        %570 = vmatmul.f32.gmra.mxu0 %v447
        %v571 = vpop.f32.mrf.mxu0
        %v572 = vadd.f32 %v518, %v571
        %573 = vmatmul.f32.gmra.mxu0 %v448
        %v574 = vpop.f32.mrf.mxu0
        %v575 = vadd.f32 %v518, %v574
        %576 = vmatmul.f32.gmra.mxu0 %v449
        %v577 = vpop.f32.mrf.mxu0
        %v578 = vadd.f32 %v518, %v577
        %579 = vmatmul.f32.gmra.mxu0 %v450
        %v580 = vpop.f32.mrf.mxu0
        %v581 = vadd.f32 %v518, %v580
        %582 = vdwg.mxu0
        %583 = vmatpush.msra.mxu0 %v513
        %584 = vmatpush.msra.mxu0 %v509
        %585 = vmatpush.msra.mxu0 %v505
        %586 = vmatpush.msra.mxu0 %v501
        %587 = vmatpush.msra.mxu0 %v497
        %588 = vmatpush.msra.mxu0 %v493
        %589 = vmatpush.msra.mxu0 %v489
        %590 = vmatpush.msra.mxu0 %v485
        %591 = vmatpush.msra.mxu0 %v481
        %592 = vmatpush.msra.mxu0 %v477
        %593 = vmatpush.msra.mxu0 %v473
        %594 = vmatpush.msra.mxu0 %v469
        %595 = vmatpush.msra.mxu0 %v465
        %596 = vmatpush.msra.mxu0 %v461
        %597 = vmatpush.msra.mxu0 %v457
        %598 = vmatpush.msra.mxu0 %v453
        %599 = vmatmul.f32.gmra.mxu0 %v447
        %v600 = vpop.f32.mrf.mxu0
        %v601 = vadd.f32 %v519, %v600
        %602 = vmatmul.f32.gmra.mxu0 %v448
        %v603 = vpop.f32.mrf.mxu0
        %v604 = vadd.f32 %v519, %v603
        %605 = vmatmul.f32.gmra.mxu0 %v449
        %v606 = vpop.f32.mrf.mxu0
        %v607 = vadd.f32 %v519, %v606
        %608 = vmatmul.f32.gmra.mxu0 %v450
        %v609 = vpop.f32.mrf.mxu0
        %v610 = vadd.f32 %v519, %v609
        %611 = vdwg.mxu0
        %612 = vmatpush.msra.mxu0 %v514
        %613 = vmatpush.msra.mxu0 %v510
        %614 = vmatpush.msra.mxu0 %v506
        %615 = vmatpush.msra.mxu0 %v502
        %616 = vmatpush.msra.mxu0 %v498
        %617 = vmatpush.msra.mxu0 %v494
        %618 = vmatpush.msra.mxu0 %v490
        %619 = vmatpush.msra.mxu0 %v486
        %620 = vmatpush.msra.mxu0 %v482
        %621 = vmatpush.msra.mxu0 %v478
        %622 = vmatpush.msra.mxu0 %v474
        %623 = vmatpush.msra.mxu0 %v470
        %624 = vmatpush.msra.mxu0 %v466
        %625 = vmatpush.msra.mxu0 %v462
        %626 = vmatpush.msra.mxu0 %v458
        %627 = vmatpush.msra.mxu0 %v454
        %628 = vmatmul.f32.gmra.mxu0 %v447
        %v629 = vpop.f32.mrf.mxu0
        %v630 = vadd.f32 %v520, %v629
        %631 = vmatmul.f32.gmra.mxu0 %v448
        %v632 = vpop.f32.mrf.mxu0
        %v633 = vadd.f32 %v520, %v632
        %634 = vmatmul.f32.gmra.mxu0 %v449
        %v635 = vpop.f32.mrf.mxu0
        %v636 = vadd.f32 %v520, %v635
        %637 = vmatmul.f32.gmra.mxu0 %v450
        %v638 = vpop.f32.mrf.mxu0
        %v639 = vadd.f32 %v520, %v638
        %640 = vdwg.mxu0
        %641 = vst [vmem:[#allocation5] sm:$0xff] %v543
        %642 = vst [vmem:[#allocation5 + $0x8] sm:$0xff] %v572
        %643 = vst [vmem:[#allocation5 + $0x10] sm:$0xff] %v601
        %644 = vst [vmem:[#allocation5 + $0x18] sm:$0xff] %v630
        %645 = vst [vmem:[#allocation5 + $0x20] sm:$0xff] %v546
        %646 = vst [vmem:[#allocation5 + $0x28] sm:$0xff] %v575
        %647 = vst [vmem:[#allocation5 + $0x30] sm:$0xff] %v604
        %648 = vst [vmem:[#allocation5 + $0x38] sm:$0xff] %v633
        %649 = vst [vmem:[#allocation5 + $0x40] sm:$0xff] %v549
        %650 = vst [vmem:[#allocation5 + $0x48] sm:$0xff] %v578
        %651 = vst [vmem:[#allocation5 + $0x50] sm:$0xff] %v607
        %652 = vst [vmem:[#allocation5 + $0x58] sm:$0xff] %v636
        %653 = vst [vmem:[#allocation5 + $0x60] sm:$0xff] %v552
        %654 = vst [vmem:[#allocation5 + $0x68] sm:$0xff] %v581
        %655 = vst [vmem:[#allocation5 + $0x70] sm:$0xff] %v610
        %656 = vst [vmem:[#allocation5 + $0x78] sm:$0xff] %v639
        %v657 = vld [vmem:[#allocation11] sm:$0xff]
        %v658 = vld [vmem:[#allocation11 + $0x8] sm:$0xff]
        %v659 = vld [vmem:[#allocation11 + $0x10] sm:$0xff]
        %v660 = vld [vmem:[#allocation11 + $0x18] sm:$0xff]
        %v661 = vld [vmem:[#allocation11 + $0x20] sm:$0xff]
        %v662 = vld [vmem:[#allocation11 + $0x28] sm:$0xff]
        %v663 = vld [vmem:[#allocation11 + $0x30] sm:$0xff]
        %v664 = vld [vmem:[#allocation11 + $0x38] sm:$0xff]
        %v665 = vld [vmem:[#allocation11 + $0x40] sm:$0xff]
        %v666 = vld [vmem:[#allocation11 + $0x48] sm:$0xff]
        %v667 = vld [vmem:[#allocation11 + $0x50] sm:$0xff]
        %v668 = vld [vmem:[#allocation11 + $0x58] sm:$0xff]
        %v669 = vld [vmem:[#allocation11 + $0x60] sm:$0xff]
        %v670 = vld [vmem:[#allocation11 + $0x68] sm:$0xff]
        %v671 = vld [vmem:[#allocation11 + $0x70] sm:$0xff]
        %v672 = vld [vmem:[#allocation11 + $0x78] sm:$0xff]
        %v673 = vld [vmem:[#allocation11 + $0x80] sm:$0xff]
        %v674 = vld [vmem:[#allocation11 + $0x88] sm:$0xff]
        %v675 = vld [vmem:[#allocation11 + $0x90] sm:$0xff]
        %v676 = vld [vmem:[#allocation11 + $0x98] sm:$0xff]
        %v677 = vld [vmem:[#allocation11 + $0xa0] sm:$0xff]
        %v678 = vld [vmem:[#allocation11 + $0xa8] sm:$0xff]
        %v679 = vld [vmem:[#allocation11 + $0xb0] sm:$0xff]
        %v680 = vld [vmem:[#allocation11 + $0xb8] sm:$0xff]
        %v681 = vld [vmem:[#allocation11 + $0xc0] sm:$0xff]
        %v682 = vld [vmem:[#allocation11 + $0xc8] sm:$0xff]
        %v683 = vld [vmem:[#allocation11 + $0xd0] sm:$0xff]
        %v684 = vld [vmem:[#allocation11 + $0xd8] sm:$0xff]
        %v685 = vld [vmem:[#allocation11 + $0xe0] sm:$0xff]
        %v686 = vld [vmem:[#allocation11 + $0xe8] sm:$0xff]
        %v687 = vld [vmem:[#allocation11 + $0xf0] sm:$0xff]
        %v688 = vld [vmem:[#allocation11 + $0xf8] sm:$0xff]
        %v689 = vld [vmem:[#allocation11 + $0x100] sm:$0xff]
        %v690 = vld [vmem:[#allocation11 + $0x108] sm:$0xff]
        %v691 = vld [vmem:[#allocation11 + $0x110] sm:$0xff]
        %v692 = vld [vmem:[#allocation11 + $0x118] sm:$0xff]
        %v693 = vld [vmem:[#allocation11 + $0x120] sm:$0xff]
        %v694 = vld [vmem:[#allocation11 + $0x128] sm:$0xff]
        %v695 = vld [vmem:[#allocation11 + $0x130] sm:$0xff]
        %v696 = vld [vmem:[#allocation11 + $0x138] sm:$0xff]
        %v697 = vld [vmem:[#allocation11 + $0x140] sm:$0xff]
        %v698 = vld [vmem:[#allocation11 + $0x148] sm:$0xff]
        %v699 = vld [vmem:[#allocation11 + $0x150] sm:$0xff]
        %v700 = vld [vmem:[#allocation11 + $0x158] sm:$0xff]
        %v701 = vld [vmem:[#allocation11 + $0x160] sm:$0xff]
        %v702 = vld [vmem:[#allocation11 + $0x168] sm:$0xff]
        %v703 = vld [vmem:[#allocation11 + $0x170] sm:$0xff]
        %v704 = vld [vmem:[#allocation11 + $0x178] sm:$0xff]
        %v705 = vld [vmem:[#allocation11 + $0x180] sm:$0xff]
        %v706 = vld [vmem:[#allocation11 + $0x188] sm:$0xff]
        %v707 = vld [vmem:[#allocation11 + $0x190] sm:$0xff]
        %v708 = vld [vmem:[#allocation11 + $0x198] sm:$0xff]
        %v709 = vld [vmem:[#allocation11 + $0x1a0] sm:$0xff]
        %v710 = vld [vmem:[#allocation11 + $0x1a8] sm:$0xff]
        %v711 = vld [vmem:[#allocation11 + $0x1b0] sm:$0xff]
        %v712 = vld [vmem:[#allocation11 + $0x1b8] sm:$0xff]
        %v713 = vld [vmem:[#allocation11 + $0x1c0] sm:$0xff]
        %v714 = vld [vmem:[#allocation11 + $0x1c8] sm:$0xff]
        %v715 = vld [vmem:[#allocation11 + $0x1d0] sm:$0xff]
        %v716 = vld [vmem:[#allocation11 + $0x1d8] sm:$0xff]
        %v717 = vld [vmem:[#allocation11 + $0x1e0] sm:$0xff]
        %v718 = vld [vmem:[#allocation11 + $0x1e8] sm:$0xff]
        %v719 = vld [vmem:[#allocation11 + $0x1f0] sm:$0xff]
        %v720 = vld [vmem:[#allocation11 + $0x1f8] sm:$0xff]
        %v721 = vld [vmem:[#allocation2] sm:$0xff]
        %v722 = vld [vmem:[#allocation3] sm:$0xff]
        %s723 = smul.u32 0, 4
        %s724 = smul.addr %s723, 8
        %s725 = scalar_lea.vmem [#allocation5], %s724
        %v726 = vld [vmem:[%s725] sm:$0xff]
        %v727 = vld [vmem:[%s725 + $0x8] sm:$0xff]
        %v728 = vld [vmem:[%s725 + $0x10] sm:$0xff]
        %v729 = vld [vmem:[%s725 + $0x18] sm:$0xff]
        %730 = vmatpush.msra.mxu0 %v717
        %731 = vmatpush.msra.mxu0 %v713
        %732 = vmatpush.msra.mxu0 %v709
        %733 = vmatpush.msra.mxu0 %v705
        %734 = vmatpush.msra.mxu0 %v701
        %735 = vmatpush.msra.mxu0 %v697
        %736 = vmatpush.msra.mxu0 %v693
        %737 = vmatpush.msra.mxu0 %v689
        %738 = vmatpush.msra.mxu0 %v685
        %739 = vmatpush.msra.mxu0 %v681
        %740 = vmatpush.msra.mxu0 %v677
        %741 = vmatpush.msra.mxu0 %v673
        %742 = vmatpush.msra.mxu0 %v669
        %743 = vmatpush.msra.mxu0 %v665
        %744 = vmatpush.msra.mxu0 %v661
        %745 = vmatpush.msra.mxu0 %v657
        %746 = vmatmul.f32.gmra.mxu0 %v721
        %v747 = vpop.f32.mrf.mxu0
        %v748 = vadd.f32 0.0, %v747
        %749 = vdwg.mxu0
        %750 = vmatpush.msra.mxu0 %v718
        %751 = vmatpush.msra.mxu0 %v714
        %752 = vmatpush.msra.mxu0 %v710
        %753 = vmatpush.msra.mxu0 %v706
        %754 = vmatpush.msra.mxu0 %v702
        %755 = vmatpush.msra.mxu0 %v698
        %756 = vmatpush.msra.mxu0 %v694
        %757 = vmatpush.msra.mxu0 %v690
        %758 = vmatpush.msra.mxu0 %v686
        %759 = vmatpush.msra.mxu0 %v682
        %760 = vmatpush.msra.mxu0 %v678
        %761 = vmatpush.msra.mxu0 %v674
        %762 = vmatpush.msra.mxu0 %v670
        %763 = vmatpush.msra.mxu0 %v666
        %764 = vmatpush.msra.mxu0 %v662
        %765 = vmatpush.msra.mxu0 %v658
        %766 = vmatmul.f32.gmra.mxu0 %v721
        %v767 = vpop.f32.mrf.mxu0
        %v768 = vadd.f32 0.0, %v767
        %769 = vdwg.mxu0
        %770 = vmatpush.msra.mxu0 %v719
        %771 = vmatpush.msra.mxu0 %v715
        %772 = vmatpush.msra.mxu0 %v711
        %773 = vmatpush.msra.mxu0 %v707
        %774 = vmatpush.msra.mxu0 %v703
        %775 = vmatpush.msra.mxu0 %v699
        %776 = vmatpush.msra.mxu0 %v695
        %777 = vmatpush.msra.mxu0 %v691
        %778 = vmatpush.msra.mxu0 %v687
        %779 = vmatpush.msra.mxu0 %v683
        %780 = vmatpush.msra.mxu0 %v679
        %781 = vmatpush.msra.mxu0 %v675
        %782 = vmatpush.msra.mxu0 %v671
        %783 = vmatpush.msra.mxu0 %v667
        %784 = vmatpush.msra.mxu0 %v663
        %785 = vmatpush.msra.mxu0 %v659
        %786 = vmatmul.f32.gmra.mxu0 %v721
        %v787 = vpop.f32.mrf.mxu0
        %v788 = vadd.f32 0.0, %v787
        %789 = vdwg.mxu0
        %790 = vmatpush.msra.mxu0 %v720
        %791 = vmatpush.msra.mxu0 %v716
        %792 = vmatpush.msra.mxu0 %v712
        %793 = vmatpush.msra.mxu0 %v708
        %794 = vmatpush.msra.mxu0 %v704
        %795 = vmatpush.msra.mxu0 %v700
        %796 = vmatpush.msra.mxu0 %v696
        %797 = vmatpush.msra.mxu0 %v692
        %798 = vmatpush.msra.mxu0 %v688
        %799 = vmatpush.msra.mxu0 %v684
        %800 = vmatpush.msra.mxu0 %v680
        %801 = vmatpush.msra.mxu0 %v676
        %802 = vmatpush.msra.mxu0 %v672
        %803 = vmatpush.msra.mxu0 %v668
        %804 = vmatpush.msra.mxu0 %v664
        %805 = vmatpush.msra.mxu0 %v660
        %806 = vmatmul.f32.gmra.mxu0 %v721
        %v807 = vpop.f32.mrf.mxu0
        %v808 = vadd.f32 0.0, %v807
        %809 = vdwg.mxu0
        %v810 = vadd.f32 %v726, %v748
        %v811 = vadd.f32 %v727, %v768
        %v812 = vadd.f32 %v728, %v788
        %v813 = vadd.f32 %v729, %v808
        %v814 = vxor.u32 %v810, 2147483648
        %v815 = vmul.f32 %v814, 1.442695
        %v816 = vpow.pop %v815
        %v817 = vadd.f32 %v816, 1.0
        %v818 = vrcp.pop %v817
        %v819 = vmul.f32 %v817, %v818
        %v820 = vsub.f32 1.0, %v819
        %v821 = vmul.f32 %v818, %v820
        %v822 = vadd.f32 %v818, %v821
        %vm823 = vweird.f32 %v817
        %vm824 = vweird.f32 %v818
        %vm825 = vmor %vm823, %vm824
        %v826 = vsel %vm825, %v818, %v822
        %v827 = vand.u32 2147483647, %v817
        %vm828 = vcmp.eq.f32.partialorder %v827, 8.507059e+37
        %v829 = vand.u32 %v817, 2147483648
        %v830 = vor.u32 1.1754944e-38, %v829
        %v831 = vsel %vm828, %v830, %v826
        %v832 = vmul.f32 1.0, %v831
        %v833 = vxor.u32 %v811, 2147483648
        %v834 = vmul.f32 %v833, 1.442695
        %v835 = vpow.pop %v834
        %v836 = vadd.f32 %v835, 1.0
        %v837 = vrcp.pop %v836
        %v838 = vmul.f32 %v836, %v837
        %v839 = vsub.f32 1.0, %v838
        %v840 = vmul.f32 %v837, %v839
        %v841 = vadd.f32 %v837, %v840
        %vm842 = vweird.f32 %v836
        %vm843 = vweird.f32 %v837
        %vm844 = vmor %vm842, %vm843
        %v845 = vsel %vm844, %v837, %v841
        %v846 = vand.u32 2147483647, %v836
        %vm847 = vcmp.eq.f32.partialorder %v846, 8.507059e+37
        %v848 = vand.u32 %v836, 2147483648
        %v849 = vor.u32 1.1754944e-38, %v848
        %v850 = vsel %vm847, %v849, %v845
        %v851 = vmul.f32 1.0, %v850
        %v852 = vtanh.pop %v812
        %v853 = vxor.u32 %v813, 2147483648
        %v854 = vmul.f32 %v853, 1.442695
        %v855 = vpow.pop %v854
        %v856 = vadd.f32 %v855, 1.0
        %v857 = vrcp.pop %v856
        %v858 = vmul.f32 %v856, %v857
        %v859 = vsub.f32 1.0, %v858
        %v860 = vmul.f32 %v857, %v859
        %v861 = vadd.f32 %v857, %v860
        %vm862 = vweird.f32 %v856
        %vm863 = vweird.f32 %v857
        %vm864 = vmor %vm862, %vm863
        %v865 = vsel %vm864, %v857, %v861
        %v866 = vand.u32 2147483647, %v856
        %vm867 = vcmp.eq.f32.partialorder %v866, 8.507059e+37
        %v868 = vand.u32 %v856, 2147483648
        %v869 = vor.u32 1.1754944e-38, %v868
        %v870 = vsel %vm867, %v869, %v865
        %v871 = vmul.f32 1.0, %v870
        %v872 = vmul.f32 %v851, %v722
        %v873 = vmul.f32 %v832, %v852
        %v874 = vadd.f32 %v872, %v873
        %v875 = vtanh.pop %v874
        %v876 = vmul.f32 %v871, %v875
        %877 = vst [vmem:[#allocation2] sm:$0xff] %v876
        %878 = vst [vmem:[#allocation3] sm:$0xff] %v874
        %879 = vst [vmem:[#allocation4] sm:$0xff] %v876
        %v880 = vld [vmem:[#allocation2] sm:$0xff]
        %v881 = vld [vmem:[#allocation3] sm:$0xff]
        %s882 = smul.u32 1, 4
        %s883 = smul.addr %s882, 8
        %s884 = scalar_lea.vmem [#allocation5], %s883
        %v885 = vld [vmem:[%s884] sm:$0xff]
        %v886 = vld [vmem:[%s884 + $0x8] sm:$0xff]
        %v887 = vld [vmem:[%s884 + $0x10] sm:$0xff]
        %v888 = vld [vmem:[%s884 + $0x18] sm:$0xff]
        %889 = vmatpush.msra.mxu0 %v717
        %890 = vmatpush.msra.mxu0 %v713
        %891 = vmatpush.msra.mxu0 %v709
        %892 = vmatpush.msra.mxu0 %v705
        %893 = vmatpush.msra.mxu0 %v701
        %894 = vmatpush.msra.mxu0 %v697
        %895 = vmatpush.msra.mxu0 %v693
        %896 = vmatpush.msra.mxu0 %v689
        %897 = vmatpush.msra.mxu0 %v685
        %898 = vmatpush.msra.mxu0 %v681
        %899 = vmatpush.msra.mxu0 %v677
        %900 = vmatpush.msra.mxu0 %v673
        %901 = vmatpush.msra.mxu0 %v669
        %902 = vmatpush.msra.mxu0 %v665
        %903 = vmatpush.msra.mxu0 %v661
        %904 = vmatpush.msra.mxu0 %v657
        %905 = vmatmul.f32.gmra.mxu0 %v880
        %v906 = vpop.f32.mrf.mxu0
        %v907 = vadd.f32 0.0, %v906
        %908 = vdwg.mxu0
        %909 = vmatpush.msra.mxu0 %v718
        %910 = vmatpush.msra.mxu0 %v714
        %911 = vmatpush.msra.mxu0 %v710
        %912 = vmatpush.msra.mxu0 %v706
        %913 = vmatpush.msra.mxu0 %v702
        %914 = vmatpush.msra.mxu0 %v698
        %915 = vmatpush.msra.mxu0 %v694
        %916 = vmatpush.msra.mxu0 %v690
        %917 = vmatpush.msra.mxu0 %v686
        %918 = vmatpush.msra.mxu0 %v682
        %919 = vmatpush.msra.mxu0 %v678
        %920 = vmatpush.msra.mxu0 %v674
        %921 = vmatpush.msra.mxu0 %v670
        %922 = vmatpush.msra.mxu0 %v666
        %923 = vmatpush.msra.mxu0 %v662
        %924 = vmatpush.msra.mxu0 %v658
        %925 = vmatmul.f32.gmra.mxu0 %v880
        %v926 = vpop.f32.mrf.mxu0
        %v927 = vadd.f32 0.0, %v926
        %928 = vdwg.mxu0
        %929 = vmatpush.msra.mxu0 %v719
        %930 = vmatpush.msra.mxu0 %v715
        %931 = vmatpush.msra.mxu0 %v711
        %932 = vmatpush.msra.mxu0 %v707
        %933 = vmatpush.msra.mxu0 %v703
        %934 = vmatpush.msra.mxu0 %v699
        %935 = vmatpush.msra.mxu0 %v695
        %936 = vmatpush.msra.mxu0 %v691
        %937 = vmatpush.msra.mxu0 %v687
        %938 = vmatpush.msra.mxu0 %v683
        %939 = vmatpush.msra.mxu0 %v679
        %940 = vmatpush.msra.mxu0 %v675
        %941 = vmatpush.msra.mxu0 %v671
        %942 = vmatpush.msra.mxu0 %v667
        %943 = vmatpush.msra.mxu0 %v663
        %944 = vmatpush.msra.mxu0 %v659
        %945 = vmatmul.f32.gmra.mxu0 %v880
        %v946 = vpop.f32.mrf.mxu0
        %v947 = vadd.f32 0.0, %v946
        %948 = vdwg.mxu0
        %949 = vmatpush.msra.mxu0 %v720
        %950 = vmatpush.msra.mxu0 %v716
        %951 = vmatpush.msra.mxu0 %v712
        %952 = vmatpush.msra.mxu0 %v708
        %953 = vmatpush.msra.mxu0 %v704
        %954 = vmatpush.msra.mxu0 %v700
        %955 = vmatpush.msra.mxu0 %v696
        %956 = vmatpush.msra.mxu0 %v692
        %957 = vmatpush.msra.mxu0 %v688
        %958 = vmatpush.msra.mxu0 %v684
        %959 = vmatpush.msra.mxu0 %v680
        %960 = vmatpush.msra.mxu0 %v676
        %961 = vmatpush.msra.mxu0 %v672
        %962 = vmatpush.msra.mxu0 %v668
        %963 = vmatpush.msra.mxu0 %v664
        %964 = vmatpush.msra.mxu0 %v660
        %965 = vmatmul.f32.gmra.mxu0 %v880
        %v966 = vpop.f32.mrf.mxu0
        %v967 = vadd.f32 0.0, %v966
        %968 = vdwg.mxu0
        %v969 = vadd.f32 %v885, %v907
        %v970 = vadd.f32 %v886, %v927
        %v971 = vadd.f32 %v887, %v947
        %v972 = vadd.f32 %v888, %v967
        %v973 = vxor.u32 %v969, 2147483648
        %v974 = vmul.f32 %v973, 1.442695
        %v975 = vpow.pop %v974
        %v976 = vadd.f32 %v975, 1.0
        %v977 = vrcp.pop %v976
        %v978 = vmul.f32 %v976, %v977
        %v979 = vsub.f32 1.0, %v978
        %v980 = vmul.f32 %v977, %v979
        %v981 = vadd.f32 %v977, %v980
        %vm982 = vweird.f32 %v976
        %vm983 = vweird.f32 %v977
        %vm984 = vmor %vm982, %vm983
        %v985 = vsel %vm984, %v977, %v981
        %v986 = vand.u32 2147483647, %v976
        %vm987 = vcmp.eq.f32.partialorder %v986, 8.507059e+37
        %v988 = vand.u32 %v976, 2147483648
        %v989 = vor.u32 1.1754944e-38, %v988
        %v990 = vsel %vm987, %v989, %v985
        %v991 = vmul.f32 1.0, %v990
        %v992 = vxor.u32 %v970, 2147483648
        %v993 = vmul.f32 %v992, 1.442695
        %v994 = vpow.pop %v993
        %v995 = vadd.f32 %v994, 1.0
        %v996 = vrcp.pop %v995
        %v997 = vmul.f32 %v995, %v996
        %v998 = vsub.f32 1.0, %v997
        %v999 = vmul.f32 %v996, %v998
        %v1000 = vadd.f32 %v996, %v999
        %vm1001 = vweird.f32 %v995
        %vm1002 = vweird.f32 %v996
        %vm1003 = vmor %vm1001, %vm1002
        %v1004 = vsel %vm1003, %v996, %v1000
        %v1005 = vand.u32 2147483647, %v995
        %vm1006 = vcmp.eq.f32.partialorder %v1005, 8.507059e+37
        %v1007 = vand.u32 %v995, 2147483648
        %v1008 = vor.u32 1.1754944e-38, %v1007
        %v1009 = vsel %vm1006, %v1008, %v1004
        %v1010 = vmul.f32 1.0, %v1009
        %v1011 = vtanh.pop %v971
        %v1012 = vxor.u32 %v972, 2147483648
        %v1013 = vmul.f32 %v1012, 1.442695
        %v1014 = vpow.pop %v1013
        %v1015 = vadd.f32 %v1014, 1.0
        %v1016 = vrcp.pop %v1015
        %v1017 = vmul.f32 %v1015, %v1016
        %v1018 = vsub.f32 1.0, %v1017
        %v1019 = vmul.f32 %v1016, %v1018
        %v1020 = vadd.f32 %v1016, %v1019
        %vm1021 = vweird.f32 %v1015
        %vm1022 = vweird.f32 %v1016
        %vm1023 = vmor %vm1021, %vm1022
        %v1024 = vsel %vm1023, %v1016, %v1020
        %v1025 = vand.u32 2147483647, %v1015
        %vm1026 = vcmp.eq.f32.partialorder %v1025, 8.507059e+37
        %v1027 = vand.u32 %v1015, 2147483648
        %v1028 = vor.u32 1.1754944e-38, %v1027
        %v1029 = vsel %vm1026, %v1028, %v1024
        %v1030 = vmul.f32 1.0, %v1029
        %v1031 = vmul.f32 %v1010, %v881
        %v1032 = vmul.f32 %v991, %v1011
        %v1033 = vadd.f32 %v1031, %v1032
        %v1034 = vtanh.pop %v1033
        %v1035 = vmul.f32 %v1030, %v1034
        %1036 = vst [vmem:[#allocation2] sm:$0xff] %v1035
        %1037 = vst [vmem:[#allocation3] sm:$0xff] %v1033
        %s1038 = scalar_lea.vmem [#allocation4], 8
        %1039 = vst [vmem:[%s1038] sm:$0xff] %v1035
        %v1040 = vld [vmem:[#allocation2] sm:$0xff]
        %v1041 = vld [vmem:[#allocation3] sm:$0xff]
        %s1042 = smul.u32 2, 4
        %s1043 = smul.addr %s1042, 8
        %s1044 = scalar_lea.vmem [#allocation5], %s1043
        %v1045 = vld [vmem:[%s1044] sm:$0xff]
        %v1046 = vld [vmem:[%s1044 + $0x8] sm:$0xff]
        %v1047 = vld [vmem:[%s1044 + $0x10] sm:$0xff]
        %v1048 = vld [vmem:[%s1044 + $0x18] sm:$0xff]
        %1049 = vmatpush.msra.mxu0 %v717
        %1050 = vmatpush.msra.mxu0 %v713
        %1051 = vmatpush.msra.mxu0 %v709
        %1052 = vmatpush.msra.mxu0 %v705
        %1053 = vmatpush.msra.mxu0 %v701
        %1054 = vmatpush.msra.mxu0 %v697
        %1055 = vmatpush.msra.mxu0 %v693
        %1056 = vmatpush.msra.mxu0 %v689
        %1057 = vmatpush.msra.mxu0 %v685
        %1058 = vmatpush.msra.mxu0 %v681
        %1059 = vmatpush.msra.mxu0 %v677
        %1060 = vmatpush.msra.mxu0 %v673
        %1061 = vmatpush.msra.mxu0 %v669
        %1062 = vmatpush.msra.mxu0 %v665
        %1063 = vmatpush.msra.mxu0 %v661
        %1064 = vmatpush.msra.mxu0 %v657
        %1065 = vmatmul.f32.gmra.mxu0 %v1040
        %v1066 = vpop.f32.mrf.mxu0
        %v1067 = vadd.f32 0.0, %v1066
        %1068 = vdwg.mxu0
        %1069 = vmatpush.msra.mxu0 %v718
        %1070 = vmatpush.msra.mxu0 %v714
        %1071 = vmatpush.msra.mxu0 %v710
        %1072 = vmatpush.msra.mxu0 %v706
        %1073 = vmatpush.msra.mxu0 %v702
        %1074 = vmatpush.msra.mxu0 %v698
        %1075 = vmatpush.msra.mxu0 %v694
        %1076 = vmatpush.msra.mxu0 %v690
        %1077 = vmatpush.msra.mxu0 %v686
        %1078 = vmatpush.msra.mxu0 %v682
        %1079 = vmatpush.msra.mxu0 %v678
        %1080 = vmatpush.msra.mxu0 %v674
        %1081 = vmatpush.msra.mxu0 %v670
        %1082 = vmatpush.msra.mxu0 %v666
        %1083 = vmatpush.msra.mxu0 %v662
        %1084 = vmatpush.msra.mxu0 %v658
        %1085 = vmatmul.f32.gmra.mxu0 %v1040
        %v1086 = vpop.f32.mrf.mxu0
        %v1087 = vadd.f32 0.0, %v1086
        %1088 = vdwg.mxu0
        %1089 = vmatpush.msra.mxu0 %v719
        %1090 = vmatpush.msra.mxu0 %v715
        %1091 = vmatpush.msra.mxu0 %v711
        %1092 = vmatpush.msra.mxu0 %v707
        %1093 = vmatpush.msra.mxu0 %v703
        %1094 = vmatpush.msra.mxu0 %v699
        %1095 = vmatpush.msra.mxu0 %v695
        %1096 = vmatpush.msra.mxu0 %v691
        %1097 = vmatpush.msra.mxu0 %v687
        %1098 = vmatpush.msra.mxu0 %v683
        %1099 = vmatpush.msra.mxu0 %v679
        %1100 = vmatpush.msra.mxu0 %v675
        %1101 = vmatpush.msra.mxu0 %v671
        %1102 = vmatpush.msra.mxu0 %v667
        %1103 = vmatpush.msra.mxu0 %v663
        %1104 = vmatpush.msra.mxu0 %v659
        %1105 = vmatmul.f32.gmra.mxu0 %v1040
        %v1106 = vpop.f32.mrf.mxu0
        %v1107 = vadd.f32 0.0, %v1106
        %1108 = vdwg.mxu0
        %1109 = vmatpush.msra.mxu0 %v720
        %1110 = vmatpush.msra.mxu0 %v716
        %1111 = vmatpush.msra.mxu0 %v712
        %1112 = vmatpush.msra.mxu0 %v708
        %1113 = vmatpush.msra.mxu0 %v704
        %1114 = vmatpush.msra.mxu0 %v700
        %1115 = vmatpush.msra.mxu0 %v696
        %1116 = vmatpush.msra.mxu0 %v692
        %1117 = vmatpush.msra.mxu0 %v688
        %1118 = vmatpush.msra.mxu0 %v684
        %1119 = vmatpush.msra.mxu0 %v680
        %1120 = vmatpush.msra.mxu0 %v676
        %1121 = vmatpush.msra.mxu0 %v672
        %1122 = vmatpush.msra.mxu0 %v668
        %1123 = vmatpush.msra.mxu0 %v664
        %1124 = vmatpush.msra.mxu0 %v660
        %1125 = vmatmul.f32.gmra.mxu0 %v1040
        %v1126 = vpop.f32.mrf.mxu0
        %v1127 = vadd.f32 0.0, %v1126
        %1128 = vdwg.mxu0
        %v1129 = vadd.f32 %v1045, %v1067
        %v1130 = vadd.f32 %v1046, %v1087
        %v1131 = vadd.f32 %v1047, %v1107
        %v1132 = vadd.f32 %v1048, %v1127
        %v1133 = vxor.u32 %v1129, 2147483648
        %v1134 = vmul.f32 %v1133, 1.442695
        %v1135 = vpow.pop %v1134
        %v1136 = vadd.f32 %v1135, 1.0
        %v1137 = vrcp.pop %v1136
        %v1138 = vmul.f32 %v1136, %v1137
        %v1139 = vsub.f32 1.0, %v1138
        %v1140 = vmul.f32 %v1137, %v1139
        %v1141 = vadd.f32 %v1137, %v1140
        %vm1142 = vweird.f32 %v1136
        %vm1143 = vweird.f32 %v1137
        %vm1144 = vmor %vm1142, %vm1143
        %v1145 = vsel %vm1144, %v1137, %v1141
        %v1146 = vand.u32 2147483647, %v1136
        %vm1147 = vcmp.eq.f32.partialorder %v1146, 8.507059e+37
        %v1148 = vand.u32 %v1136, 2147483648
        %v1149 = vor.u32 1.1754944e-38, %v1148
        %v1150 = vsel %vm1147, %v1149, %v1145
        %v1151 = vmul.f32 1.0, %v1150
        %v1152 = vxor.u32 %v1130, 2147483648
        %v1153 = vmul.f32 %v1152, 1.442695
        %v1154 = vpow.pop %v1153
        %v1155 = vadd.f32 %v1154, 1.0
        %v1156 = vrcp.pop %v1155
        %v1157 = vmul.f32 %v1155, %v1156
        %v1158 = vsub.f32 1.0, %v1157
        %v1159 = vmul.f32 %v1156, %v1158
        %v1160 = vadd.f32 %v1156, %v1159
        %vm1161 = vweird.f32 %v1155
        %vm1162 = vweird.f32 %v1156
        %vm1163 = vmor %vm1161, %vm1162
        %v1164 = vsel %vm1163, %v1156, %v1160
        %v1165 = vand.u32 2147483647, %v1155
        %vm1166 = vcmp.eq.f32.partialorder %v1165, 8.507059e+37
        %v1167 = vand.u32 %v1155, 2147483648
        %v1168 = vor.u32 1.1754944e-38, %v1167
        %v1169 = vsel %vm1166, %v1168, %v1164
        %v1170 = vmul.f32 1.0, %v1169
        %v1171 = vtanh.pop %v1131
        %v1172 = vxor.u32 %v1132, 2147483648
        %v1173 = vmul.f32 %v1172, 1.442695
        %v1174 = vpow.pop %v1173
        %v1175 = vadd.f32 %v1174, 1.0
        %v1176 = vrcp.pop %v1175
        %v1177 = vmul.f32 %v1175, %v1176
        %v1178 = vsub.f32 1.0, %v1177
        %v1179 = vmul.f32 %v1176, %v1178
        %v1180 = vadd.f32 %v1176, %v1179
        %vm1181 = vweird.f32 %v1175
        %vm1182 = vweird.f32 %v1176
        %vm1183 = vmor %vm1181, %vm1182
        %v1184 = vsel %vm1183, %v1176, %v1180
        %v1185 = vand.u32 2147483647, %v1175
        %vm1186 = vcmp.eq.f32.partialorder %v1185, 8.507059e+37
        %v1187 = vand.u32 %v1175, 2147483648
        %v1188 = vor.u32 1.1754944e-38, %v1187
        %v1189 = vsel %vm1186, %v1188, %v1184
        %v1190 = vmul.f32 1.0, %v1189
        %v1191 = vmul.f32 %v1170, %v1041
        %v1192 = vmul.f32 %v1151, %v1171
        %v1193 = vadd.f32 %v1191, %v1192
        %v1194 = vtanh.pop %v1193
        %v1195 = vmul.f32 %v1190, %v1194
        %1196 = vst [vmem:[#allocation2] sm:$0xff] %v1195
        %1197 = vst [vmem:[#allocation3] sm:$0xff] %v1193
        %s1198 = scalar_lea.vmem [#allocation4], 16
        %1199 = vst [vmem:[%s1198] sm:$0xff] %v1195
        %v1200 = vld [vmem:[#allocation2] sm:$0xff]
        %v1201 = vld [vmem:[#allocation3] sm:$0xff]
        %s1202 = smul.u32 3, 4
        %s1203 = smul.addr %s1202, 8
        %s1204 = scalar_lea.vmem [#allocation5], %s1203
        %v1205 = vld [vmem:[%s1204] sm:$0xff]
        %v1206 = vld [vmem:[%s1204 + $0x8] sm:$0xff]
        %v1207 = vld [vmem:[%s1204 + $0x10] sm:$0xff]
        %v1208 = vld [vmem:[%s1204 + $0x18] sm:$0xff]
        %1209 = vmatpush.msra.mxu0 %v717
        %1210 = vmatpush.msra.mxu0 %v713
        %1211 = vmatpush.msra.mxu0 %v709
        %1212 = vmatpush.msra.mxu0 %v705
        %1213 = vmatpush.msra.mxu0 %v701
        %1214 = vmatpush.msra.mxu0 %v697
        %1215 = vmatpush.msra.mxu0 %v693
        %1216 = vmatpush.msra.mxu0 %v689
        %1217 = vmatpush.msra.mxu0 %v685
        %1218 = vmatpush.msra.mxu0 %v681
        %1219 = vmatpush.msra.mxu0 %v677
        %1220 = vmatpush.msra.mxu0 %v673
        %1221 = vmatpush.msra.mxu0 %v669
        %1222 = vmatpush.msra.mxu0 %v665
        %1223 = vmatpush.msra.mxu0 %v661
        %1224 = vmatpush.msra.mxu0 %v657
        %1225 = vmatmul.f32.gmra.mxu0 %v1200
        %v1226 = vpop.f32.mrf.mxu0
        %v1227 = vadd.f32 0.0, %v1226
        %1228 = vdwg.mxu0
        %1229 = vmatpush.msra.mxu0 %v718
        %1230 = vmatpush.msra.mxu0 %v714
        %1231 = vmatpush.msra.mxu0 %v710
        %1232 = vmatpush.msra.mxu0 %v706
        %1233 = vmatpush.msra.mxu0 %v702
        %1234 = vmatpush.msra.mxu0 %v698
        %1235 = vmatpush.msra.mxu0 %v694
        %1236 = vmatpush.msra.mxu0 %v690
        %1237 = vmatpush.msra.mxu0 %v686
        %1238 = vmatpush.msra.mxu0 %v682
        %1239 = vmatpush.msra.mxu0 %v678
        %1240 = vmatpush.msra.mxu0 %v674
        %1241 = vmatpush.msra.mxu0 %v670
        %1242 = vmatpush.msra.mxu0 %v666
        %1243 = vmatpush.msra.mxu0 %v662
        %1244 = vmatpush.msra.mxu0 %v658
        %1245 = vmatmul.f32.gmra.mxu0 %v1200
        %v1246 = vpop.f32.mrf.mxu0
        %v1247 = vadd.f32 0.0, %v1246
        %1248 = vdwg.mxu0
        %1249 = vmatpush.msra.mxu0 %v719
        %1250 = vmatpush.msra.mxu0 %v715
        %1251 = vmatpush.msra.mxu0 %v711
        %1252 = vmatpush.msra.mxu0 %v707
        %1253 = vmatpush.msra.mxu0 %v703
        %1254 = vmatpush.msra.mxu0 %v699
        %1255 = vmatpush.msra.mxu0 %v695
        %1256 = vmatpush.msra.mxu0 %v691
        %1257 = vmatpush.msra.mxu0 %v687
        %1258 = vmatpush.msra.mxu0 %v683
        %1259 = vmatpush.msra.mxu0 %v679
        %1260 = vmatpush.msra.mxu0 %v675
        %1261 = vmatpush.msra.mxu0 %v671
        %1262 = vmatpush.msra.mxu0 %v667
        %1263 = vmatpush.msra.mxu0 %v663
        %1264 = vmatpush.msra.mxu0 %v659
        %1265 = vmatmul.f32.gmra.mxu0 %v1200
        %v1266 = vpop.f32.mrf.mxu0
        %v1267 = vadd.f32 0.0, %v1266
        %1268 = vdwg.mxu0
        %1269 = vmatpush.msra.mxu0 %v720
        %1270 = vmatpush.msra.mxu0 %v716
        %1271 = vmatpush.msra.mxu0 %v712
        %1272 = vmatpush.msra.mxu0 %v708
        %1273 = vmatpush.msra.mxu0 %v704
        %1274 = vmatpush.msra.mxu0 %v700
        %1275 = vmatpush.msra.mxu0 %v696
        %1276 = vmatpush.msra.mxu0 %v692
        %1277 = vmatpush.msra.mxu0 %v688
        %1278 = vmatpush.msra.mxu0 %v684
        %1279 = vmatpush.msra.mxu0 %v680
        %1280 = vmatpush.msra.mxu0 %v676
        %1281 = vmatpush.msra.mxu0 %v672
        %1282 = vmatpush.msra.mxu0 %v668
        %1283 = vmatpush.msra.mxu0 %v664
        %1284 = vmatpush.msra.mxu0 %v660
        %1285 = vmatmul.f32.gmra.mxu0 %v1200
        %v1286 = vpop.f32.mrf.mxu0
        %v1287 = vadd.f32 0.0, %v1286
        %1288 = vdwg.mxu0
        %v1289 = vadd.f32 %v1205, %v1227
        %v1290 = vadd.f32 %v1206, %v1247
        %v1291 = vadd.f32 %v1207, %v1267
        %v1292 = vadd.f32 %v1208, %v1287
        %v1293 = vxor.u32 %v1289, 2147483648
        %v1294 = vmul.f32 %v1293, 1.442695
        %v1295 = vpow.pop %v1294
        %v1296 = vadd.f32 %v1295, 1.0
        %v1297 = vrcp.pop %v1296
        %v1298 = vmul.f32 %v1296, %v1297
        %v1299 = vsub.f32 1.0, %v1298
        %v1300 = vmul.f32 %v1297, %v1299
        %v1301 = vadd.f32 %v1297, %v1300
        %vm1302 = vweird.f32 %v1296
        %vm1303 = vweird.f32 %v1297
        %vm1304 = vmor %vm1302, %vm1303
        %v1305 = vsel %vm1304, %v1297, %v1301
        %v1306 = vand.u32 2147483647, %v1296
        %vm1307 = vcmp.eq.f32.partialorder %v1306, 8.507059e+37
        %v1308 = vand.u32 %v1296, 2147483648
        %v1309 = vor.u32 1.1754944e-38, %v1308
        %v1310 = vsel %vm1307, %v1309, %v1305
        %v1311 = vmul.f32 1.0, %v1310
        %v1312 = vxor.u32 %v1290, 2147483648
        %v1313 = vmul.f32 %v1312, 1.442695
        %v1314 = vpow.pop %v1313
        %v1315 = vadd.f32 %v1314, 1.0
        %v1316 = vrcp.pop %v1315
        %v1317 = vmul.f32 %v1315, %v1316
        %v1318 = vsub.f32 1.0, %v1317
        %v1319 = vmul.f32 %v1316, %v1318
        %v1320 = vadd.f32 %v1316, %v1319
        %vm1321 = vweird.f32 %v1315
        %vm1322 = vweird.f32 %v1316
        %vm1323 = vmor %vm1321, %vm1322
        %v1324 = vsel %vm1323, %v1316, %v1320
        %v1325 = vand.u32 2147483647, %v1315
        %vm1326 = vcmp.eq.f32.partialorder %v1325, 8.507059e+37
        %v1327 = vand.u32 %v1315, 2147483648
        %v1328 = vor.u32 1.1754944e-38, %v1327
        %v1329 = vsel %vm1326, %v1328, %v1324
        %v1330 = vmul.f32 1.0, %v1329
        %v1331 = vtanh.pop %v1291
        %v1332 = vxor.u32 %v1292, 2147483648
        %v1333 = vmul.f32 %v1332, 1.442695
        %v1334 = vpow.pop %v1333
        %v1335 = vadd.f32 %v1334, 1.0
        %v1336 = vrcp.pop %v1335
        %v1337 = vmul.f32 %v1335, %v1336
        %v1338 = vsub.f32 1.0, %v1337
        %v1339 = vmul.f32 %v1336, %v1338
        %v1340 = vadd.f32 %v1336, %v1339
        %vm1341 = vweird.f32 %v1335
        %vm1342 = vweird.f32 %v1336
        %vm1343 = vmor %vm1341, %vm1342
        %v1344 = vsel %vm1343, %v1336, %v1340
        %v1345 = vand.u32 2147483647, %v1335
        %vm1346 = vcmp.eq.f32.partialorder %v1345, 8.507059e+37
        %v1347 = vand.u32 %v1335, 2147483648
        %v1348 = vor.u32 1.1754944e-38, %v1347
        %v1349 = vsel %vm1346, %v1348, %v1344
        %v1350 = vmul.f32 1.0, %v1349
        %v1351 = vmul.f32 %v1330, %v1201
        %v1352 = vmul.f32 %v1311, %v1331
        %v1353 = vadd.f32 %v1351, %v1352
        %v1354 = vtanh.pop %v1353
        %v1355 = vmul.f32 %v1350, %v1354
        %1356 = vst [vmem:[#allocation2] sm:$0xff] %v1355
        %1357 = vst [vmem:[#allocation3] sm:$0xff] %v1353
        %s1358 = scalar_lea.vmem [#allocation4], 24
        %1359 = vst [vmem:[%s1358] sm:$0xff] %v1355
        %v1360 = vld [vmem:[#allocation4] sm:$0xff]
        %v1361 = vld [vmem:[#allocation4 + $0x8] sm:$0xff]
        %v1362 = vld [vmem:[#allocation4 + $0x10] sm:$0xff]
        %v1363 = vld [vmem:[#allocation4 + $0x18] sm:$0xff]
        %v1364 = vld [vmem:[#allocation14] sm:$0xff]
        %v1365 = vld [vmem:[#allocation14 + $0x8] sm:$0xff]
        %v1366 = vld [vmem:[#allocation14 + $0x10] sm:$0xff]
        %v1367 = vld [vmem:[#allocation14 + $0x18] sm:$0xff]
        %v1368 = vld [vmem:[#allocation14 + $0x20] sm:$0xff]
        %v1369 = vld [vmem:[#allocation14 + $0x28] sm:$0xff]
        %v1370 = vld [vmem:[#allocation14 + $0x30] sm:$0xff]
        %v1371 = vld [vmem:[#allocation14 + $0x38] sm:$0xff]
        %v1372 = vld [vmem:[#allocation14 + $0x40] sm:$0xff]
        %v1373 = vld [vmem:[#allocation14 + $0x48] sm:$0xff]
        %v1374 = vld [vmem:[#allocation14 + $0x50] sm:$0xff]
        %v1375 = vld [vmem:[#allocation14 + $0x58] sm:$0xff]
        %v1376 = vld [vmem:[#allocation14 + $0x60] sm:$0xff]
        %v1377 = vld [vmem:[#allocation14 + $0x68] sm:$0xff]
        %v1378 = vld [vmem:[#allocation14 + $0x70] sm:$0xff]
        %v1379 = vld [vmem:[#allocation14 + $0x78] sm:$0xff]
        %v1380 = vld [vmem:[#allocation14 + $0x80] sm:$0xff]
        %v1381 = vld [vmem:[#allocation14 + $0x88] sm:$0xff]
        %v1382 = vld [vmem:[#allocation14 + $0x90] sm:$0xff]
        %v1383 = vld [vmem:[#allocation14 + $0x98] sm:$0xff]
        %v1384 = vld [vmem:[#allocation14 + $0xa0] sm:$0xff]
        %v1385 = vld [vmem:[#allocation14 + $0xa8] sm:$0xff]
        %v1386 = vld [vmem:[#allocation14 + $0xb0] sm:$0xff]
        %v1387 = vld [vmem:[#allocation14 + $0xb8] sm:$0xff]
        %v1388 = vld [vmem:[#allocation14 + $0xc0] sm:$0xff]
        %v1389 = vld [vmem:[#allocation14 + $0xc8] sm:$0xff]
        %v1390 = vld [vmem:[#allocation14 + $0xd0] sm:$0xff]
        %v1391 = vld [vmem:[#allocation14 + $0xd8] sm:$0xff]
        %v1392 = vld [vmem:[#allocation14 + $0xe0] sm:$0xff]
        %v1393 = vld [vmem:[#allocation14 + $0xe8] sm:$0xff]
        %v1394 = vld [vmem:[#allocation14 + $0xf0] sm:$0xff]
        %v1395 = vld [vmem:[#allocation14 + $0xf8] sm:$0xff]
        %v1396 = vld [vmem:[#allocation14 + $0x100] sm:$0xff]
        %v1397 = vld [vmem:[#allocation14 + $0x108] sm:$0xff]
        %v1398 = vld [vmem:[#allocation14 + $0x110] sm:$0xff]
        %v1399 = vld [vmem:[#allocation14 + $0x118] sm:$0xff]
        %v1400 = vld [vmem:[#allocation14 + $0x120] sm:$0xff]
        %v1401 = vld [vmem:[#allocation14 + $0x128] sm:$0xff]
        %v1402 = vld [vmem:[#allocation14 + $0x130] sm:$0xff]
        %v1403 = vld [vmem:[#allocation14 + $0x138] sm:$0xff]
        %v1404 = vld [vmem:[#allocation14 + $0x140] sm:$0xff]
        %v1405 = vld [vmem:[#allocation14 + $0x148] sm:$0xff]
        %v1406 = vld [vmem:[#allocation14 + $0x150] sm:$0xff]
        %v1407 = vld [vmem:[#allocation14 + $0x158] sm:$0xff]
        %v1408 = vld [vmem:[#allocation14 + $0x160] sm:$0xff]
        %v1409 = vld [vmem:[#allocation14 + $0x168] sm:$0xff]
        %v1410 = vld [vmem:[#allocation14 + $0x170] sm:$0xff]
        %v1411 = vld [vmem:[#allocation14 + $0x178] sm:$0xff]
        %v1412 = vld [vmem:[#allocation14 + $0x180] sm:$0xff]
        %v1413 = vld [vmem:[#allocation14 + $0x188] sm:$0xff]
        %v1414 = vld [vmem:[#allocation14 + $0x190] sm:$0xff]
        %v1415 = vld [vmem:[#allocation14 + $0x198] sm:$0xff]
        %v1416 = vld [vmem:[#allocation14 + $0x1a0] sm:$0xff]
        %v1417 = vld [vmem:[#allocation14 + $0x1a8] sm:$0xff]
        %v1418 = vld [vmem:[#allocation14 + $0x1b0] sm:$0xff]
        %v1419 = vld [vmem:[#allocation14 + $0x1b8] sm:$0xff]
        %v1420 = vld [vmem:[#allocation14 + $0x1c0] sm:$0xff]
        %v1421 = vld [vmem:[#allocation14 + $0x1c8] sm:$0xff]
        %v1422 = vld [vmem:[#allocation14 + $0x1d0] sm:$0xff]
        %v1423 = vld [vmem:[#allocation14 + $0x1d8] sm:$0xff]
        %v1424 = vld [vmem:[#allocation14 + $0x1e0] sm:$0xff]
        %v1425 = vld [vmem:[#allocation14 + $0x1e8] sm:$0xff]
        %v1426 = vld [vmem:[#allocation14 + $0x1f0] sm:$0xff]
        %v1427 = vld [vmem:[#allocation14 + $0x1f8] sm:$0xff]
        %v1428 = vld [vmem:[%s6] sm:$0xf]
        %v1430 = vperm.slane %v1428, 0
        %v1431 = vperm.slane %v1428, 1
        %v1432 = vperm.slane %v1428, 2
        %v1433 = vperm.slane %v1428, 3
        %1438 = vmatpush.msra.mxu0 %v1424
        %1439 = vmatpush.msra.mxu0 %v1420
        %1440 = vmatpush.msra.mxu0 %v1416
        %1441 = vmatpush.msra.mxu0 %v1412
        %1442 = vmatpush.msra.mxu0 %v1408
        %1443 = vmatpush.msra.mxu0 %v1404
        %1444 = vmatpush.msra.mxu0 %v1400
        %1445 = vmatpush.msra.mxu0 %v1396
        %1446 = vmatpush.msra.mxu0 %v1392
        %1447 = vmatpush.msra.mxu0 %v1388
        %1448 = vmatpush.msra.mxu0 %v1384
        %1449 = vmatpush.msra.mxu0 %v1380
        %1450 = vmatpush.msra.mxu0 %v1376
        %1451 = vmatpush.msra.mxu0 %v1372
        %1452 = vmatpush.msra.mxu0 %v1368
        %1453 = vmatpush.msra.mxu0 %v1364
        %1454 = vmatmul.f32.gmra.mxu0 %v1360
        %v1455 = vpop.f32.mrf.mxu0
        %v1456 = vadd.f32 %v1430, %v1455
        %1457 = vmatmul.f32.gmra.mxu0 %v1361
        %v1458 = vpop.f32.mrf.mxu0
        %v1459 = vadd.f32 %v1430, %v1458
        %1460 = vmatmul.f32.gmra.mxu0 %v1362
        %v1461 = vpop.f32.mrf.mxu0
        %v1462 = vadd.f32 %v1430, %v1461
        %1463 = vmatmul.f32.gmra.mxu0 %v1363
        %v1464 = vpop.f32.mrf.mxu0
        %v1465 = vadd.f32 %v1430, %v1464
        %1466 = vdwg.mxu0
        %1467 = vmatpush.msra.mxu0 %v1425
        %1468 = vmatpush.msra.mxu0 %v1421
        %1469 = vmatpush.msra.mxu0 %v1417
        %1470 = vmatpush.msra.mxu0 %v1413
        %1471 = vmatpush.msra.mxu0 %v1409
        %1472 = vmatpush.msra.mxu0 %v1405
        %1473 = vmatpush.msra.mxu0 %v1401
        %1474 = vmatpush.msra.mxu0 %v1397
        %1475 = vmatpush.msra.mxu0 %v1393
        %1476 = vmatpush.msra.mxu0 %v1389
        %1477 = vmatpush.msra.mxu0 %v1385
        %1478 = vmatpush.msra.mxu0 %v1381
        %1479 = vmatpush.msra.mxu0 %v1377
        %1480 = vmatpush.msra.mxu0 %v1373
        %1481 = vmatpush.msra.mxu0 %v1369
        %1482 = vmatpush.msra.mxu0 %v1365
        %1483 = vmatmul.f32.gmra.mxu0 %v1360
        %v1484 = vpop.f32.mrf.mxu0
        %v1485 = vadd.f32 %v1431, %v1484
        %1486 = vmatmul.f32.gmra.mxu0 %v1361
        %v1487 = vpop.f32.mrf.mxu0
        %v1488 = vadd.f32 %v1431, %v1487
        %1489 = vmatmul.f32.gmra.mxu0 %v1362
        %v1490 = vpop.f32.mrf.mxu0
        %v1491 = vadd.f32 %v1431, %v1490
        %1492 = vmatmul.f32.gmra.mxu0 %v1363
        %v1493 = vpop.f32.mrf.mxu0
        %v1494 = vadd.f32 %v1431, %v1493
        %1495 = vdwg.mxu0
        %1496 = vmatpush.msra.mxu0 %v1426
        %1497 = vmatpush.msra.mxu0 %v1422
        %1498 = vmatpush.msra.mxu0 %v1418
        %1499 = vmatpush.msra.mxu0 %v1414
        %1500 = vmatpush.msra.mxu0 %v1410
        %1501 = vmatpush.msra.mxu0 %v1406
        %1502 = vmatpush.msra.mxu0 %v1402
        %1503 = vmatpush.msra.mxu0 %v1398
        %1504 = vmatpush.msra.mxu0 %v1394
        %1505 = vmatpush.msra.mxu0 %v1390
        %1506 = vmatpush.msra.mxu0 %v1386
        %1507 = vmatpush.msra.mxu0 %v1382
        %1508 = vmatpush.msra.mxu0 %v1378
        %1509 = vmatpush.msra.mxu0 %v1374
        %1510 = vmatpush.msra.mxu0 %v1370
        %1511 = vmatpush.msra.mxu0 %v1366
        %1512 = vmatmul.f32.gmra.mxu0 %v1360
        %v1513 = vpop.f32.mrf.mxu0
        %v1514 = vadd.f32 %v1432, %v1513
        %1515 = vmatmul.f32.gmra.mxu0 %v1361
        %v1516 = vpop.f32.mrf.mxu0
        %v1517 = vadd.f32 %v1432, %v1516
        %1518 = vmatmul.f32.gmra.mxu0 %v1362
        %v1519 = vpop.f32.mrf.mxu0
        %v1520 = vadd.f32 %v1432, %v1519
        %1521 = vmatmul.f32.gmra.mxu0 %v1363
        %v1522 = vpop.f32.mrf.mxu0
        %v1523 = vadd.f32 %v1432, %v1522
        %1524 = vdwg.mxu0
        %1525 = vmatpush.msra.mxu0 %v1427
        %1526 = vmatpush.msra.mxu0 %v1423
        %1527 = vmatpush.msra.mxu0 %v1419
        %1528 = vmatpush.msra.mxu0 %v1415
        %1529 = vmatpush.msra.mxu0 %v1411
        %1530 = vmatpush.msra.mxu0 %v1407
        %1531 = vmatpush.msra.mxu0 %v1403
        %1532 = vmatpush.msra.mxu0 %v1399
        %1533 = vmatpush.msra.mxu0 %v1395
        %1534 = vmatpush.msra.mxu0 %v1391
        %1535 = vmatpush.msra.mxu0 %v1387
        %1536 = vmatpush.msra.mxu0 %v1383
        %1537 = vmatpush.msra.mxu0 %v1379
        %1538 = vmatpush.msra.mxu0 %v1375
        %1539 = vmatpush.msra.mxu0 %v1371
        %1540 = vmatpush.msra.mxu0 %v1367
        %1541 = vmatmul.f32.gmra.mxu0 %v1360
        %v1542 = vpop.f32.mrf.mxu0
        %v1543 = vadd.f32 %v1433, %v1542
        %1544 = vmatmul.f32.gmra.mxu0 %v1361
        %v1545 = vpop.f32.mrf.mxu0
        %v1546 = vadd.f32 %v1433, %v1545
        %1547 = vmatmul.f32.gmra.mxu0 %v1362
        %v1548 = vpop.f32.mrf.mxu0
        %v1549 = vadd.f32 %v1433, %v1548
        %1550 = vmatmul.f32.gmra.mxu0 %v1363
        %v1551 = vpop.f32.mrf.mxu0
        %v1552 = vadd.f32 %v1433, %v1551
        %1553 = vdwg.mxu0
        %1554 = vst [vmem:[#allocation5] sm:$0xff] %v1456
        %1555 = vst [vmem:[#allocation5 + $0x8] sm:$0xff] %v1485
        %1556 = vst [vmem:[#allocation5 + $0x10] sm:$0xff] %v1514
        %1557 = vst [vmem:[#allocation5 + $0x18] sm:$0xff] %v1543
        %1558 = vst [vmem:[#allocation5 + $0x20] sm:$0xff] %v1459
        %1559 = vst [vmem:[#allocation5 + $0x28] sm:$0xff] %v1488
        %1560 = vst [vmem:[#allocation5 + $0x30] sm:$0xff] %v1517
        %1561 = vst [vmem:[#allocation5 + $0x38] sm:$0xff] %v1546
        %1562 = vst [vmem:[#allocation5 + $0x40] sm:$0xff] %v1462
        %1563 = vst [vmem:[#allocation5 + $0x48] sm:$0xff] %v1491
        %1564 = vst [vmem:[#allocation5 + $0x50] sm:$0xff] %v1520
        %1565 = vst [vmem:[#allocation5 + $0x58] sm:$0xff] %v1549
        %1566 = vst [vmem:[#allocation5 + $0x60] sm:$0xff] %v1465
        %1567 = vst [vmem:[#allocation5 + $0x68] sm:$0xff] %v1494
        %1568 = vst [vmem:[#allocation5 + $0x70] sm:$0xff] %v1523
        %1569 = vst [vmem:[#allocation5 + $0x78] sm:$0xff] %v1552
        %v1570 = vld [vmem:[#allocation15] sm:$0xff]
        %v1571 = vld [vmem:[#allocation15 + $0x8] sm:$0xff]
        %v1572 = vld [vmem:[#allocation15 + $0x10] sm:$0xff]
        %v1573 = vld [vmem:[#allocation15 + $0x18] sm:$0xff]
        %v1574 = vld [vmem:[#allocation15 + $0x20] sm:$0xff]
        %v1575 = vld [vmem:[#allocation15 + $0x28] sm:$0xff]
        %v1576 = vld [vmem:[#allocation15 + $0x30] sm:$0xff]
        %v1577 = vld [vmem:[#allocation15 + $0x38] sm:$0xff]
        %v1578 = vld [vmem:[#allocation15 + $0x40] sm:$0xff]
        %v1579 = vld [vmem:[#allocation15 + $0x48] sm:$0xff]
        %v1580 = vld [vmem:[#allocation15 + $0x50] sm:$0xff]
        %v1581 = vld [vmem:[#allocation15 + $0x58] sm:$0xff]
        %v1582 = vld [vmem:[#allocation15 + $0x60] sm:$0xff]
        %v1583 = vld [vmem:[#allocation15 + $0x68] sm:$0xff]
        %v1584 = vld [vmem:[#allocation15 + $0x70] sm:$0xff]
        %v1585 = vld [vmem:[#allocation15 + $0x78] sm:$0xff]
        %v1586 = vld [vmem:[#allocation15 + $0x80] sm:$0xff]
        %v1587 = vld [vmem:[#allocation15 + $0x88] sm:$0xff]
        %v1588 = vld [vmem:[#allocation15 + $0x90] sm:$0xff]
        %v1589 = vld [vmem:[#allocation15 + $0x98] sm:$0xff]
        %v1590 = vld [vmem:[#allocation15 + $0xa0] sm:$0xff]
        %v1591 = vld [vmem:[#allocation15 + $0xa8] sm:$0xff]
        %v1592 = vld [vmem:[#allocation15 + $0xb0] sm:$0xff]
        %v1593 = vld [vmem:[#allocation15 + $0xb8] sm:$0xff]
        %v1594 = vld [vmem:[#allocation15 + $0xc0] sm:$0xff]
        %v1595 = vld [vmem:[#allocation15 + $0xc8] sm:$0xff]
        %v1596 = vld [vmem:[#allocation15 + $0xd0] sm:$0xff]
        %v1597 = vld [vmem:[#allocation15 + $0xd8] sm:$0xff]
        %v1598 = vld [vmem:[#allocation15 + $0xe0] sm:$0xff]
        %v1599 = vld [vmem:[#allocation15 + $0xe8] sm:$0xff]
        %v1600 = vld [vmem:[#allocation15 + $0xf0] sm:$0xff]
        %v1601 = vld [vmem:[#allocation15 + $0xf8] sm:$0xff]
        %v1602 = vld [vmem:[#allocation15 + $0x100] sm:$0xff]
        %v1603 = vld [vmem:[#allocation15 + $0x108] sm:$0xff]
        %v1604 = vld [vmem:[#allocation15 + $0x110] sm:$0xff]
        %v1605 = vld [vmem:[#allocation15 + $0x118] sm:$0xff]
        %v1606 = vld [vmem:[#allocation15 + $0x120] sm:$0xff]
        %v1607 = vld [vmem:[#allocation15 + $0x128] sm:$0xff]
        %v1608 = vld [vmem:[#allocation15 + $0x130] sm:$0xff]
        %v1609 = vld [vmem:[#allocation15 + $0x138] sm:$0xff]
        %v1610 = vld [vmem:[#allocation15 + $0x140] sm:$0xff]
        %v1611 = vld [vmem:[#allocation15 + $0x148] sm:$0xff]
        %v1612 = vld [vmem:[#allocation15 + $0x150] sm:$0xff]
        %v1613 = vld [vmem:[#allocation15 + $0x158] sm:$0xff]
        %v1614 = vld [vmem:[#allocation15 + $0x160] sm:$0xff]
        %v1615 = vld [vmem:[#allocation15 + $0x168] sm:$0xff]
        %v1616 = vld [vmem:[#allocation15 + $0x170] sm:$0xff]
        %v1617 = vld [vmem:[#allocation15 + $0x178] sm:$0xff]
        %v1618 = vld [vmem:[#allocation15 + $0x180] sm:$0xff]
        %v1619 = vld [vmem:[#allocation15 + $0x188] sm:$0xff]
        %v1620 = vld [vmem:[#allocation15 + $0x190] sm:$0xff]
        %v1621 = vld [vmem:[#allocation15 + $0x198] sm:$0xff]
        %v1622 = vld [vmem:[#allocation15 + $0x1a0] sm:$0xff]
        %v1623 = vld [vmem:[#allocation15 + $0x1a8] sm:$0xff]
        %v1624 = vld [vmem:[#allocation15 + $0x1b0] sm:$0xff]
        %v1625 = vld [vmem:[#allocation15 + $0x1b8] sm:$0xff]
        %v1626 = vld [vmem:[#allocation15 + $0x1c0] sm:$0xff]
        %v1627 = vld [vmem:[#allocation15 + $0x1c8] sm:$0xff]
        %v1628 = vld [vmem:[#allocation15 + $0x1d0] sm:$0xff]
        %v1629 = vld [vmem:[#allocation15 + $0x1d8] sm:$0xff]
        %v1630 = vld [vmem:[#allocation15 + $0x1e0] sm:$0xff]
        %v1631 = vld [vmem:[#allocation15 + $0x1e8] sm:$0xff]
        %v1632 = vld [vmem:[#allocation15 + $0x1f0] sm:$0xff]
        %v1633 = vld [vmem:[#allocation15 + $0x1f8] sm:$0xff]
        %s1634 = scalar_lea.vmem [#allocation2], 8
        %v1635 = vld [vmem:[%s1634] sm:$0xff]
        %s1636 = scalar_lea.vmem [#allocation3], 8
        %v1637 = vld [vmem:[%s1636] sm:$0xff]
        %v1638 = vld [vmem:[%s725] sm:$0xff]
        %v1639 = vld [vmem:[%s725 + $0x8] sm:$0xff]
        %v1640 = vld [vmem:[%s725 + $0x10] sm:$0xff]
        %v1641 = vld [vmem:[%s725 + $0x18] sm:$0xff]
        %1642 = vmatpush.msra.mxu0 %v1630
        %1643 = vmatpush.msra.mxu0 %v1626
        %1644 = vmatpush.msra.mxu0 %v1622
        %1645 = vmatpush.msra.mxu0 %v1618
        %1646 = vmatpush.msra.mxu0 %v1614
        %1647 = vmatpush.msra.mxu0 %v1610
        %1648 = vmatpush.msra.mxu0 %v1606
        %1649 = vmatpush.msra.mxu0 %v1602
        %1650 = vmatpush.msra.mxu0 %v1598
        %1651 = vmatpush.msra.mxu0 %v1594
        %1652 = vmatpush.msra.mxu0 %v1590
        %1653 = vmatpush.msra.mxu0 %v1586
        %1654 = vmatpush.msra.mxu0 %v1582
        %1655 = vmatpush.msra.mxu0 %v1578
        %1656 = vmatpush.msra.mxu0 %v1574
        %1657 = vmatpush.msra.mxu0 %v1570
        %1658 = vmatmul.f32.gmra.mxu0 %v1635
        %v1659 = vpop.f32.mrf.mxu0
        %v1660 = vadd.f32 0.0, %v1659
        %1661 = vdwg.mxu0
        %1662 = vmatpush.msra.mxu0 %v1631
        %1663 = vmatpush.msra.mxu0 %v1627
        %1664 = vmatpush.msra.mxu0 %v1623
        %1665 = vmatpush.msra.mxu0 %v1619
        %1666 = vmatpush.msra.mxu0 %v1615
        %1667 = vmatpush.msra.mxu0 %v1611
        %1668 = vmatpush.msra.mxu0 %v1607
        %1669 = vmatpush.msra.mxu0 %v1603
        %1670 = vmatpush.msra.mxu0 %v1599
        %1671 = vmatpush.msra.mxu0 %v1595
        %1672 = vmatpush.msra.mxu0 %v1591
        %1673 = vmatpush.msra.mxu0 %v1587
        %1674 = vmatpush.msra.mxu0 %v1583
        %1675 = vmatpush.msra.mxu0 %v1579
        %1676 = vmatpush.msra.mxu0 %v1575
        %1677 = vmatpush.msra.mxu0 %v1571
        %1678 = vmatmul.f32.gmra.mxu0 %v1635
        %v1679 = vpop.f32.mrf.mxu0
        %v1680 = vadd.f32 0.0, %v1679
        %1681 = vdwg.mxu0
        %1682 = vmatpush.msra.mxu0 %v1632
        %1683 = vmatpush.msra.mxu0 %v1628
        %1684 = vmatpush.msra.mxu0 %v1624
        %1685 = vmatpush.msra.mxu0 %v1620
        %1686 = vmatpush.msra.mxu0 %v1616
        %1687 = vmatpush.msra.mxu0 %v1612
        %1688 = vmatpush.msra.mxu0 %v1608
        %1689 = vmatpush.msra.mxu0 %v1604
        %1690 = vmatpush.msra.mxu0 %v1600
        %1691 = vmatpush.msra.mxu0 %v1596
        %1692 = vmatpush.msra.mxu0 %v1592
        %1693 = vmatpush.msra.mxu0 %v1588
        %1694 = vmatpush.msra.mxu0 %v1584
        %1695 = vmatpush.msra.mxu0 %v1580
        %1696 = vmatpush.msra.mxu0 %v1576
        %1697 = vmatpush.msra.mxu0 %v1572
        %1698 = vmatmul.f32.gmra.mxu0 %v1635
        %v1699 = vpop.f32.mrf.mxu0
        %v1700 = vadd.f32 0.0, %v1699
        %1701 = vdwg.mxu0
        %1702 = vmatpush.msra.mxu0 %v1633
        %1703 = vmatpush.msra.mxu0 %v1629
        %1704 = vmatpush.msra.mxu0 %v1625
        %1705 = vmatpush.msra.mxu0 %v1621
        %1706 = vmatpush.msra.mxu0 %v1617
        %1707 = vmatpush.msra.mxu0 %v1613
        %1708 = vmatpush.msra.mxu0 %v1609
        %1709 = vmatpush.msra.mxu0 %v1605
        %1710 = vmatpush.msra.mxu0 %v1601
        %1711 = vmatpush.msra.mxu0 %v1597
        %1712 = vmatpush.msra.mxu0 %v1593
        %1713 = vmatpush.msra.mxu0 %v1589
        %1714 = vmatpush.msra.mxu0 %v1585
        %1715 = vmatpush.msra.mxu0 %v1581
        %1716 = vmatpush.msra.mxu0 %v1577
        %1717 = vmatpush.msra.mxu0 %v1573
        %1718 = vmatmul.f32.gmra.mxu0 %v1635
        %v1719 = vpop.f32.mrf.mxu0
        %v1720 = vadd.f32 0.0, %v1719
        %1721 = vdwg.mxu0
        %v1722 = vadd.f32 %v1638, %v1660
        %v1723 = vadd.f32 %v1639, %v1680
        %v1724 = vadd.f32 %v1640, %v1700
        %v1725 = vadd.f32 %v1641, %v1720
        %v1726 = vxor.u32 %v1722, 2147483648
        %v1727 = vmul.f32 %v1726, 1.442695
        %v1728 = vpow.pop %v1727
        %v1729 = vadd.f32 %v1728, 1.0
        %v1730 = vrcp.pop %v1729
        %v1731 = vmul.f32 %v1729, %v1730
        %v1732 = vsub.f32 1.0, %v1731
        %v1733 = vmul.f32 %v1730, %v1732
        %v1734 = vadd.f32 %v1730, %v1733
        %vm1735 = vweird.f32 %v1729
        %vm1736 = vweird.f32 %v1730
        %vm1737 = vmor %vm1735, %vm1736
        %v1738 = vsel %vm1737, %v1730, %v1734
        %v1739 = vand.u32 2147483647, %v1729
        %vm1740 = vcmp.eq.f32.partialorder %v1739, 8.507059e+37
        %v1741 = vand.u32 %v1729, 2147483648
        %v1742 = vor.u32 1.1754944e-38, %v1741
        %v1743 = vsel %vm1740, %v1742, %v1738
        %v1744 = vmul.f32 1.0, %v1743
        %v1745 = vxor.u32 %v1723, 2147483648
        %v1746 = vmul.f32 %v1745, 1.442695
        %v1747 = vpow.pop %v1746
        %v1748 = vadd.f32 %v1747, 1.0
        %v1749 = vrcp.pop %v1748
        %v1750 = vmul.f32 %v1748, %v1749
        %v1751 = vsub.f32 1.0, %v1750
        %v1752 = vmul.f32 %v1749, %v1751
        %v1753 = vadd.f32 %v1749, %v1752
        %vm1754 = vweird.f32 %v1748
        %vm1755 = vweird.f32 %v1749
        %vm1756 = vmor %vm1754, %vm1755
        %v1757 = vsel %vm1756, %v1749, %v1753
        %v1758 = vand.u32 2147483647, %v1748
        %vm1759 = vcmp.eq.f32.partialorder %v1758, 8.507059e+37
        %v1760 = vand.u32 %v1748, 2147483648
        %v1761 = vor.u32 1.1754944e-38, %v1760
        %v1762 = vsel %vm1759, %v1761, %v1757
        %v1763 = vmul.f32 1.0, %v1762
        %v1764 = vtanh.pop %v1724
        %v1765 = vxor.u32 %v1725, 2147483648
        %v1766 = vmul.f32 %v1765, 1.442695
        %v1767 = vpow.pop %v1766
        %v1768 = vadd.f32 %v1767, 1.0
        %v1769 = vrcp.pop %v1768
        %v1770 = vmul.f32 %v1768, %v1769
        %v1771 = vsub.f32 1.0, %v1770
        %v1772 = vmul.f32 %v1769, %v1771
        %v1773 = vadd.f32 %v1769, %v1772
        %vm1774 = vweird.f32 %v1768
        %vm1775 = vweird.f32 %v1769
        %vm1776 = vmor %vm1774, %vm1775
        %v1777 = vsel %vm1776, %v1769, %v1773
        %v1778 = vand.u32 2147483647, %v1768
        %vm1779 = vcmp.eq.f32.partialorder %v1778, 8.507059e+37
        %v1780 = vand.u32 %v1768, 2147483648
        %v1781 = vor.u32 1.1754944e-38, %v1780
        %v1782 = vsel %vm1779, %v1781, %v1777
        %v1783 = vmul.f32 1.0, %v1782
        %v1784 = vmul.f32 %v1763, %v1637
        %v1785 = vmul.f32 %v1744, %v1764
        %v1786 = vadd.f32 %v1784, %v1785
        %v1787 = vtanh.pop %v1786
        %v1788 = vmul.f32 %v1783, %v1787
        %1789 = vst [vmem:[%s1634] sm:$0xff] %v1788
        %1790 = vst [vmem:[%s1636] sm:$0xff] %v1786
        %v1791 = vld [vmem:[%s1634] sm:$0xff]
        %v1792 = vld [vmem:[%s1636] sm:$0xff]
        %v1793 = vld [vmem:[%s884] sm:$0xff]
        %v1794 = vld [vmem:[%s884 + $0x8] sm:$0xff]
        %v1795 = vld [vmem:[%s884 + $0x10] sm:$0xff]
        %v1796 = vld [vmem:[%s884 + $0x18] sm:$0xff]
        %1797 = vmatpush.msra.mxu0 %v1630
        %1798 = vmatpush.msra.mxu0 %v1626
        %1799 = vmatpush.msra.mxu0 %v1622
        %1800 = vmatpush.msra.mxu0 %v1618
        %1801 = vmatpush.msra.mxu0 %v1614
        %1802 = vmatpush.msra.mxu0 %v1610
        %1803 = vmatpush.msra.mxu0 %v1606
        %1804 = vmatpush.msra.mxu0 %v1602
        %1805 = vmatpush.msra.mxu0 %v1598
        %1806 = vmatpush.msra.mxu0 %v1594
        %1807 = vmatpush.msra.mxu0 %v1590
        %1808 = vmatpush.msra.mxu0 %v1586
        %1809 = vmatpush.msra.mxu0 %v1582
        %1810 = vmatpush.msra.mxu0 %v1578
        %1811 = vmatpush.msra.mxu0 %v1574
        %1812 = vmatpush.msra.mxu0 %v1570
        %1813 = vmatmul.f32.gmra.mxu0 %v1791
        %v1814 = vpop.f32.mrf.mxu0
        %v1815 = vadd.f32 0.0, %v1814
        %1816 = vdwg.mxu0
        %1817 = vmatpush.msra.mxu0 %v1631
        %1818 = vmatpush.msra.mxu0 %v1627
        %1819 = vmatpush.msra.mxu0 %v1623
        %1820 = vmatpush.msra.mxu0 %v1619
        %1821 = vmatpush.msra.mxu0 %v1615
        %1822 = vmatpush.msra.mxu0 %v1611
        %1823 = vmatpush.msra.mxu0 %v1607
        %1824 = vmatpush.msra.mxu0 %v1603
        %1825 = vmatpush.msra.mxu0 %v1599
        %1826 = vmatpush.msra.mxu0 %v1595
        %1827 = vmatpush.msra.mxu0 %v1591
        %1828 = vmatpush.msra.mxu0 %v1587
        %1829 = vmatpush.msra.mxu0 %v1583
        %1830 = vmatpush.msra.mxu0 %v1579
        %1831 = vmatpush.msra.mxu0 %v1575
        %1832 = vmatpush.msra.mxu0 %v1571
        %1833 = vmatmul.f32.gmra.mxu0 %v1791
        %v1834 = vpop.f32.mrf.mxu0
        %v1835 = vadd.f32 0.0, %v1834
        %1836 = vdwg.mxu0
        %1837 = vmatpush.msra.mxu0 %v1632
        %1838 = vmatpush.msra.mxu0 %v1628
        %1839 = vmatpush.msra.mxu0 %v1624
        %1840 = vmatpush.msra.mxu0 %v1620
        %1841 = vmatpush.msra.mxu0 %v1616
        %1842 = vmatpush.msra.mxu0 %v1612
        %1843 = vmatpush.msra.mxu0 %v1608
        %1844 = vmatpush.msra.mxu0 %v1604
        %1845 = vmatpush.msra.mxu0 %v1600
        %1846 = vmatpush.msra.mxu0 %v1596
        %1847 = vmatpush.msra.mxu0 %v1592
        %1848 = vmatpush.msra.mxu0 %v1588
        %1849 = vmatpush.msra.mxu0 %v1584
        %1850 = vmatpush.msra.mxu0 %v1580
        %1851 = vmatpush.msra.mxu0 %v1576
        %1852 = vmatpush.msra.mxu0 %v1572
        %1853 = vmatmul.f32.gmra.mxu0 %v1791
        %v1854 = vpop.f32.mrf.mxu0
        %v1855 = vadd.f32 0.0, %v1854
        %1856 = vdwg.mxu0
        %1857 = vmatpush.msra.mxu0 %v1633
        %1858 = vmatpush.msra.mxu0 %v1629
        %1859 = vmatpush.msra.mxu0 %v1625
        %1860 = vmatpush.msra.mxu0 %v1621
        %1861 = vmatpush.msra.mxu0 %v1617
        %1862 = vmatpush.msra.mxu0 %v1613
        %1863 = vmatpush.msra.mxu0 %v1609
        %1864 = vmatpush.msra.mxu0 %v1605
        %1865 = vmatpush.msra.mxu0 %v1601
        %1866 = vmatpush.msra.mxu0 %v1597
        %1867 = vmatpush.msra.mxu0 %v1593
        %1868 = vmatpush.msra.mxu0 %v1589
        %1869 = vmatpush.msra.mxu0 %v1585
        %1870 = vmatpush.msra.mxu0 %v1581
        %1871 = vmatpush.msra.mxu0 %v1577
        %1872 = vmatpush.msra.mxu0 %v1573
        %1873 = vmatmul.f32.gmra.mxu0 %v1791
        %v1874 = vpop.f32.mrf.mxu0
        %v1875 = vadd.f32 0.0, %v1874
        %1876 = vdwg.mxu0
        %v1877 = vadd.f32 %v1793, %v1815
        %v1878 = vadd.f32 %v1794, %v1835
        %v1879 = vadd.f32 %v1795, %v1855
        %v1880 = vadd.f32 %v1796, %v1875
        %v1881 = vxor.u32 %v1877, 2147483648
        %v1882 = vmul.f32 %v1881, 1.442695
        %v1883 = vpow.pop %v1882
        %v1884 = vadd.f32 %v1883, 1.0
        %v1885 = vrcp.pop %v1884
        %v1886 = vmul.f32 %v1884, %v1885
        %v1887 = vsub.f32 1.0, %v1886
        %v1888 = vmul.f32 %v1885, %v1887
        %v1889 = vadd.f32 %v1885, %v1888
        %vm1890 = vweird.f32 %v1884
        %vm1891 = vweird.f32 %v1885
        %vm1892 = vmor %vm1890, %vm1891
        %v1893 = vsel %vm1892, %v1885, %v1889
        %v1894 = vand.u32 2147483647, %v1884
        %vm1895 = vcmp.eq.f32.partialorder %v1894, 8.507059e+37
        %v1896 = vand.u32 %v1884, 2147483648
        %v1897 = vor.u32 1.1754944e-38, %v1896
        %v1898 = vsel %vm1895, %v1897, %v1893
        %v1899 = vmul.f32 1.0, %v1898
        %v1900 = vxor.u32 %v1878, 2147483648
        %v1901 = vmul.f32 %v1900, 1.442695
        %v1902 = vpow.pop %v1901
        %v1903 = vadd.f32 %v1902, 1.0
        %v1904 = vrcp.pop %v1903
        %v1905 = vmul.f32 %v1903, %v1904
        %v1906 = vsub.f32 1.0, %v1905
        %v1907 = vmul.f32 %v1904, %v1906
        %v1908 = vadd.f32 %v1904, %v1907
        %vm1909 = vweird.f32 %v1903
        %vm1910 = vweird.f32 %v1904
        %vm1911 = vmor %vm1909, %vm1910
        %v1912 = vsel %vm1911, %v1904, %v1908
        %v1913 = vand.u32 2147483647, %v1903
        %vm1914 = vcmp.eq.f32.partialorder %v1913, 8.507059e+37
        %v1915 = vand.u32 %v1903, 2147483648
        %v1916 = vor.u32 1.1754944e-38, %v1915
        %v1917 = vsel %vm1914, %v1916, %v1912
        %v1918 = vmul.f32 1.0, %v1917
        %v1919 = vtanh.pop %v1879
        %v1920 = vxor.u32 %v1880, 2147483648
        %v1921 = vmul.f32 %v1920, 1.442695
        %v1922 = vpow.pop %v1921
        %v1923 = vadd.f32 %v1922, 1.0
        %v1924 = vrcp.pop %v1923
        %v1925 = vmul.f32 %v1923, %v1924
        %v1926 = vsub.f32 1.0, %v1925
        %v1927 = vmul.f32 %v1924, %v1926
        %v1928 = vadd.f32 %v1924, %v1927
        %vm1929 = vweird.f32 %v1923
        %vm1930 = vweird.f32 %v1924
        %vm1931 = vmor %vm1929, %vm1930
        %v1932 = vsel %vm1931, %v1924, %v1928
        %v1933 = vand.u32 2147483647, %v1923
        %vm1934 = vcmp.eq.f32.partialorder %v1933, 8.507059e+37
        %v1935 = vand.u32 %v1923, 2147483648
        %v1936 = vor.u32 1.1754944e-38, %v1935
        %v1937 = vsel %vm1934, %v1936, %v1932
        %v1938 = vmul.f32 1.0, %v1937
        %v1939 = vmul.f32 %v1918, %v1792
        %v1940 = vmul.f32 %v1899, %v1919
        %v1941 = vadd.f32 %v1939, %v1940
        %v1942 = vtanh.pop %v1941
        %v1943 = vmul.f32 %v1938, %v1942
        %1944 = vst [vmem:[%s1634] sm:$0xff] %v1943
        %1945 = vst [vmem:[%s1636] sm:$0xff] %v1941
        %v1946 = vld [vmem:[%s1634] sm:$0xff]
        %v1947 = vld [vmem:[%s1636] sm:$0xff]
        %v1948 = vld [vmem:[%s1044] sm:$0xff]
        %v1949 = vld [vmem:[%s1044 + $0x8] sm:$0xff]
        %v1950 = vld [vmem:[%s1044 + $0x10] sm:$0xff]
        %v1951 = vld [vmem:[%s1044 + $0x18] sm:$0xff]
        %1952 = vmatpush.msra.mxu0 %v1630
        %1953 = vmatpush.msra.mxu0 %v1626
        %1954 = vmatpush.msra.mxu0 %v1622
        %1955 = vmatpush.msra.mxu0 %v1618
        %1956 = vmatpush.msra.mxu0 %v1614
        %1957 = vmatpush.msra.mxu0 %v1610
        %1958 = vmatpush.msra.mxu0 %v1606
        %1959 = vmatpush.msra.mxu0 %v1602
        %1960 = vmatpush.msra.mxu0 %v1598
        %1961 = vmatpush.msra.mxu0 %v1594
        %1962 = vmatpush.msra.mxu0 %v1590
        %1963 = vmatpush.msra.mxu0 %v1586
        %1964 = vmatpush.msra.mxu0 %v1582
        %1965 = vmatpush.msra.mxu0 %v1578
        %1966 = vmatpush.msra.mxu0 %v1574
        %1967 = vmatpush.msra.mxu0 %v1570
        %1968 = vmatmul.f32.gmra.mxu0 %v1946
        %v1969 = vpop.f32.mrf.mxu0
        %v1970 = vadd.f32 0.0, %v1969
        %1971 = vdwg.mxu0
        %1972 = vmatpush.msra.mxu0 %v1631
        %1973 = vmatpush.msra.mxu0 %v1627
        %1974 = vmatpush.msra.mxu0 %v1623
        %1975 = vmatpush.msra.mxu0 %v1619
        %1976 = vmatpush.msra.mxu0 %v1615
        %1977 = vmatpush.msra.mxu0 %v1611
        %1978 = vmatpush.msra.mxu0 %v1607
        %1979 = vmatpush.msra.mxu0 %v1603
        %1980 = vmatpush.msra.mxu0 %v1599
        %1981 = vmatpush.msra.mxu0 %v1595
        %1982 = vmatpush.msra.mxu0 %v1591
        %1983 = vmatpush.msra.mxu0 %v1587
        %1984 = vmatpush.msra.mxu0 %v1583
        %1985 = vmatpush.msra.mxu0 %v1579
        %1986 = vmatpush.msra.mxu0 %v1575
        %1987 = vmatpush.msra.mxu0 %v1571
        %1988 = vmatmul.f32.gmra.mxu0 %v1946
        %v1989 = vpop.f32.mrf.mxu0
        %v1990 = vadd.f32 0.0, %v1989
        %1991 = vdwg.mxu0
        %1992 = vmatpush.msra.mxu0 %v1632
        %1993 = vmatpush.msra.mxu0 %v1628
        %1994 = vmatpush.msra.mxu0 %v1624
        %1995 = vmatpush.msra.mxu0 %v1620
        %1996 = vmatpush.msra.mxu0 %v1616
        %1997 = vmatpush.msra.mxu0 %v1612
        %1998 = vmatpush.msra.mxu0 %v1608
        %1999 = vmatpush.msra.mxu0 %v1604
        %2000 = vmatpush.msra.mxu0 %v1600
        %2001 = vmatpush.msra.mxu0 %v1596
        %2002 = vmatpush.msra.mxu0 %v1592
        %2003 = vmatpush.msra.mxu0 %v1588
        %2004 = vmatpush.msra.mxu0 %v1584
        %2005 = vmatpush.msra.mxu0 %v1580
        %2006 = vmatpush.msra.mxu0 %v1576
        %2007 = vmatpush.msra.mxu0 %v1572
        %2008 = vmatmul.f32.gmra.mxu0 %v1946
        %v2009 = vpop.f32.mrf.mxu0
        %v2010 = vadd.f32 0.0, %v2009
        %2011 = vdwg.mxu0
        %2012 = vmatpush.msra.mxu0 %v1633
        %2013 = vmatpush.msra.mxu0 %v1629
        %2014 = vmatpush.msra.mxu0 %v1625
        %2015 = vmatpush.msra.mxu0 %v1621
        %2016 = vmatpush.msra.mxu0 %v1617
        %2017 = vmatpush.msra.mxu0 %v1613
        %2018 = vmatpush.msra.mxu0 %v1609
        %2019 = vmatpush.msra.mxu0 %v1605
        %2020 = vmatpush.msra.mxu0 %v1601
        %2021 = vmatpush.msra.mxu0 %v1597
        %2022 = vmatpush.msra.mxu0 %v1593
        %2023 = vmatpush.msra.mxu0 %v1589
        %2024 = vmatpush.msra.mxu0 %v1585
        %2025 = vmatpush.msra.mxu0 %v1581
        %2026 = vmatpush.msra.mxu0 %v1577
        %2027 = vmatpush.msra.mxu0 %v1573
        %2028 = vmatmul.f32.gmra.mxu0 %v1946
        %v2029 = vpop.f32.mrf.mxu0
        %v2030 = vadd.f32 0.0, %v2029
        %2031 = vdwg.mxu0
        %v2032 = vadd.f32 %v1948, %v1970
        %v2033 = vadd.f32 %v1949, %v1990
        %v2034 = vadd.f32 %v1950, %v2010
        %v2035 = vadd.f32 %v1951, %v2030
        %v2036 = vxor.u32 %v2032, 2147483648
        %v2037 = vmul.f32 %v2036, 1.442695
        %v2038 = vpow.pop %v2037
        %v2039 = vadd.f32 %v2038, 1.0
        %v2040 = vrcp.pop %v2039
        %v2041 = vmul.f32 %v2039, %v2040
        %v2042 = vsub.f32 1.0, %v2041
        %v2043 = vmul.f32 %v2040, %v2042
        %v2044 = vadd.f32 %v2040, %v2043
        %vm2045 = vweird.f32 %v2039
        %vm2046 = vweird.f32 %v2040
        %vm2047 = vmor %vm2045, %vm2046
        %v2048 = vsel %vm2047, %v2040, %v2044
        %v2049 = vand.u32 2147483647, %v2039
        %vm2050 = vcmp.eq.f32.partialorder %v2049, 8.507059e+37
        %v2051 = vand.u32 %v2039, 2147483648
        %v2052 = vor.u32 1.1754944e-38, %v2051
        %v2053 = vsel %vm2050, %v2052, %v2048
        %v2054 = vmul.f32 1.0, %v2053
        %v2055 = vxor.u32 %v2033, 2147483648
        %v2056 = vmul.f32 %v2055, 1.442695
        %v2057 = vpow.pop %v2056
        %v2058 = vadd.f32 %v2057, 1.0
        %v2059 = vrcp.pop %v2058
        %v2060 = vmul.f32 %v2058, %v2059
        %v2061 = vsub.f32 1.0, %v2060
        %v2062 = vmul.f32 %v2059, %v2061
        %v2063 = vadd.f32 %v2059, %v2062
        %vm2064 = vweird.f32 %v2058
        %vm2065 = vweird.f32 %v2059
        %vm2066 = vmor %vm2064, %vm2065
        %v2067 = vsel %vm2066, %v2059, %v2063
        %v2068 = vand.u32 2147483647, %v2058
        %vm2069 = vcmp.eq.f32.partialorder %v2068, 8.507059e+37
        %v2070 = vand.u32 %v2058, 2147483648
        %v2071 = vor.u32 1.1754944e-38, %v2070
        %v2072 = vsel %vm2069, %v2071, %v2067
        %v2073 = vmul.f32 1.0, %v2072
        %v2074 = vtanh.pop %v2034
        %v2075 = vxor.u32 %v2035, 2147483648
        %v2076 = vmul.f32 %v2075, 1.442695
        %v2077 = vpow.pop %v2076
        %v2078 = vadd.f32 %v2077, 1.0
        %v2079 = vrcp.pop %v2078
        %v2080 = vmul.f32 %v2078, %v2079
        %v2081 = vsub.f32 1.0, %v2080
        %v2082 = vmul.f32 %v2079, %v2081
        %v2083 = vadd.f32 %v2079, %v2082
        %vm2084 = vweird.f32 %v2078
        %vm2085 = vweird.f32 %v2079
        %vm2086 = vmor %vm2084, %vm2085
        %v2087 = vsel %vm2086, %v2079, %v2083
        %v2088 = vand.u32 2147483647, %v2078
        %vm2089 = vcmp.eq.f32.partialorder %v2088, 8.507059e+37
        %v2090 = vand.u32 %v2078, 2147483648
        %v2091 = vor.u32 1.1754944e-38, %v2090
        %v2092 = vsel %vm2089, %v2091, %v2087
        %v2093 = vmul.f32 1.0, %v2092
        %v2094 = vmul.f32 %v2073, %v1947
        %v2095 = vmul.f32 %v2054, %v2074
        %v2096 = vadd.f32 %v2094, %v2095
        %v2097 = vtanh.pop %v2096
        %v2098 = vmul.f32 %v2093, %v2097
        %2099 = vst [vmem:[%s1634] sm:$0xff] %v2098
        %2100 = vst [vmem:[%s1636] sm:$0xff] %v2096
        %v2101 = vld [vmem:[%s1634] sm:$0xff]
        %v2102 = vld [vmem:[%s1636] sm:$0xff]
        %v2103 = vld [vmem:[%s1204] sm:$0xff]
        %v2104 = vld [vmem:[%s1204 + $0x8] sm:$0xff]
        %v2105 = vld [vmem:[%s1204 + $0x10] sm:$0xff]
        %v2106 = vld [vmem:[%s1204 + $0x18] sm:$0xff]
        %2107 = vmatpush.msra.mxu0 %v1630
        %2108 = vmatpush.msra.mxu0 %v1626
        %2109 = vmatpush.msra.mxu0 %v1622
        %2110 = vmatpush.msra.mxu0 %v1618
        %2111 = vmatpush.msra.mxu0 %v1614
        %2112 = vmatpush.msra.mxu0 %v1610
        %2113 = vmatpush.msra.mxu0 %v1606
        %2114 = vmatpush.msra.mxu0 %v1602
        %2115 = vmatpush.msra.mxu0 %v1598
        %2116 = vmatpush.msra.mxu0 %v1594
        %2117 = vmatpush.msra.mxu0 %v1590
        %2118 = vmatpush.msra.mxu0 %v1586
        %2119 = vmatpush.msra.mxu0 %v1582
        %2120 = vmatpush.msra.mxu0 %v1578
        %2121 = vmatpush.msra.mxu0 %v1574
        %2122 = vmatpush.msra.mxu0 %v1570
        %2123 = vmatmul.f32.gmra.mxu0 %v2101
        %v2124 = vpop.f32.mrf.mxu0
        %v2125 = vadd.f32 0.0, %v2124
        %2126 = vdwg.mxu0
        %2127 = vmatpush.msra.mxu0 %v1631
        %2128 = vmatpush.msra.mxu0 %v1627
        %2129 = vmatpush.msra.mxu0 %v1623
        %2130 = vmatpush.msra.mxu0 %v1619
        %2131 = vmatpush.msra.mxu0 %v1615
        %2132 = vmatpush.msra.mxu0 %v1611
        %2133 = vmatpush.msra.mxu0 %v1607
        %2134 = vmatpush.msra.mxu0 %v1603
        %2135 = vmatpush.msra.mxu0 %v1599
        %2136 = vmatpush.msra.mxu0 %v1595
        %2137 = vmatpush.msra.mxu0 %v1591
        %2138 = vmatpush.msra.mxu0 %v1587
        %2139 = vmatpush.msra.mxu0 %v1583
        %2140 = vmatpush.msra.mxu0 %v1579
        %2141 = vmatpush.msra.mxu0 %v1575
        %2142 = vmatpush.msra.mxu0 %v1571
        %2143 = vmatmul.f32.gmra.mxu0 %v2101
        %v2144 = vpop.f32.mrf.mxu0
        %v2145 = vadd.f32 0.0, %v2144
        %2146 = vdwg.mxu0
        %2147 = vmatpush.msra.mxu0 %v1632
        %2148 = vmatpush.msra.mxu0 %v1628
        %2149 = vmatpush.msra.mxu0 %v1624
        %2150 = vmatpush.msra.mxu0 %v1620
        %2151 = vmatpush.msra.mxu0 %v1616
        %2152 = vmatpush.msra.mxu0 %v1612
        %2153 = vmatpush.msra.mxu0 %v1608
        %2154 = vmatpush.msra.mxu0 %v1604
        %2155 = vmatpush.msra.mxu0 %v1600
        %2156 = vmatpush.msra.mxu0 %v1596
        %2157 = vmatpush.msra.mxu0 %v1592
        %2158 = vmatpush.msra.mxu0 %v1588
        %2159 = vmatpush.msra.mxu0 %v1584
        %2160 = vmatpush.msra.mxu0 %v1580
        %2161 = vmatpush.msra.mxu0 %v1576
        %2162 = vmatpush.msra.mxu0 %v1572
        %2163 = vmatmul.f32.gmra.mxu0 %v2101
        %v2164 = vpop.f32.mrf.mxu0
        %v2165 = vadd.f32 0.0, %v2164
        %2166 = vdwg.mxu0
        %2167 = vmatpush.msra.mxu0 %v1633
        %2168 = vmatpush.msra.mxu0 %v1629
        %2169 = vmatpush.msra.mxu0 %v1625
        %2170 = vmatpush.msra.mxu0 %v1621
        %2171 = vmatpush.msra.mxu0 %v1617
        %2172 = vmatpush.msra.mxu0 %v1613
        %2173 = vmatpush.msra.mxu0 %v1609
        %2174 = vmatpush.msra.mxu0 %v1605
        %2175 = vmatpush.msra.mxu0 %v1601
        %2176 = vmatpush.msra.mxu0 %v1597
        %2177 = vmatpush.msra.mxu0 %v1593
        %2178 = vmatpush.msra.mxu0 %v1589
        %2179 = vmatpush.msra.mxu0 %v1585
        %2180 = vmatpush.msra.mxu0 %v1581
        %2181 = vmatpush.msra.mxu0 %v1577
        %2182 = vmatpush.msra.mxu0 %v1573
        %2183 = vmatmul.f32.gmra.mxu0 %v2101
        %v2184 = vpop.f32.mrf.mxu0
        %v2185 = vadd.f32 0.0, %v2184
        %2186 = vdwg.mxu0
        %v2187 = vadd.f32 %v2103, %v2125
        %v2188 = vadd.f32 %v2104, %v2145
        %v2189 = vadd.f32 %v2105, %v2165
        %v2190 = vadd.f32 %v2106, %v2185
        %v2191 = vxor.u32 %v2187, 2147483648
        %v2192 = vmul.f32 %v2191, 1.442695
        %v2193 = vpow.pop %v2192
        %v2194 = vadd.f32 %v2193, 1.0
        %v2195 = vrcp.pop %v2194
        %v2196 = vmul.f32 %v2194, %v2195
        %v2197 = vsub.f32 1.0, %v2196
        %v2198 = vmul.f32 %v2195, %v2197
        %v2199 = vadd.f32 %v2195, %v2198
        %vm2200 = vweird.f32 %v2194
        %vm2201 = vweird.f32 %v2195
        %vm2202 = vmor %vm2200, %vm2201
        %v2203 = vsel %vm2202, %v2195, %v2199
        %v2204 = vand.u32 2147483647, %v2194
        %vm2205 = vcmp.eq.f32.partialorder %v2204, 8.507059e+37
        %v2206 = vand.u32 %v2194, 2147483648
        %v2207 = vor.u32 1.1754944e-38, %v2206
        %v2208 = vsel %vm2205, %v2207, %v2203
        %v2209 = vmul.f32 1.0, %v2208
        %v2210 = vxor.u32 %v2188, 2147483648
        %v2211 = vmul.f32 %v2210, 1.442695
        %v2212 = vpow.pop %v2211
        %v2213 = vadd.f32 %v2212, 1.0
        %v2214 = vrcp.pop %v2213
        %v2215 = vmul.f32 %v2213, %v2214
        %v2216 = vsub.f32 1.0, %v2215
        %v2217 = vmul.f32 %v2214, %v2216
        %v2218 = vadd.f32 %v2214, %v2217
        %vm2219 = vweird.f32 %v2213
        %vm2220 = vweird.f32 %v2214
        %vm2221 = vmor %vm2219, %vm2220
        %v2222 = vsel %vm2221, %v2214, %v2218
        %v2223 = vand.u32 2147483647, %v2213
        %vm2224 = vcmp.eq.f32.partialorder %v2223, 8.507059e+37
        %v2225 = vand.u32 %v2213, 2147483648
        %v2226 = vor.u32 1.1754944e-38, %v2225
        %v2227 = vsel %vm2224, %v2226, %v2222
        %v2228 = vmul.f32 1.0, %v2227
        %v2229 = vtanh.pop %v2189
        %v2230 = vxor.u32 %v2190, 2147483648
        %v2231 = vmul.f32 %v2230, 1.442695
        %v2232 = vpow.pop %v2231
        %v2233 = vadd.f32 %v2232, 1.0
        %v2234 = vrcp.pop %v2233
        %v2235 = vmul.f32 %v2233, %v2234
        %v2236 = vsub.f32 1.0, %v2235
        %v2237 = vmul.f32 %v2234, %v2236
        %v2238 = vadd.f32 %v2234, %v2237
        %vm2239 = vweird.f32 %v2233
        %vm2240 = vweird.f32 %v2234
        %vm2241 = vmor %vm2239, %vm2240
        %v2242 = vsel %vm2241, %v2234, %v2238
        %v2243 = vand.u32 2147483647, %v2233
        %vm2244 = vcmp.eq.f32.partialorder %v2243, 8.507059e+37
        %v2245 = vand.u32 %v2233, 2147483648
        %v2246 = vor.u32 1.1754944e-38, %v2245
        %v2247 = vsel %vm2244, %v2246, %v2242
        %v2248 = vmul.f32 1.0, %v2247
        %v2249 = vmul.f32 %v2228, %v2102
        %v2250 = vmul.f32 %v2209, %v2229
        %v2251 = vadd.f32 %v2249, %v2250
        %v2252 = vtanh.pop %v2251
        %v2253 = vmul.f32 %v2248, %v2252
        %2254 = vst [vmem:[%s1634] sm:$0xff] %v2253
        %2255 = vst [vmem:[%s1636] sm:$0xff] %v2251
        %p2256 = scmp.eq.s32.totalorder %s27, 3
        // Predicated region
        $region89: #{tpu_custom_call.1} parent=55 // pred_check
          %p2257 = pneg %p2256
        $region90: #{tpu_custom_call.1} parent=55 // pred_check_branch
          %2259 = sbr.rel (%p2257) target = $region92
        $region91: #{tpu_custom_call.1} parent=55 // pred_region
          %v2260 = vld [vmem:[%s1634] sm:$0xff]
          %v2261 = vld [vmem:[#allocation17] sm:$0xff]
          %v2262 = vld [vmem:[#allocation17 + $0x8] sm:$0xff]
          %v2263 = vld [vmem:[#allocation17 + $0x10] sm:$0xff]
          %v2264 = vld [vmem:[#allocation17 + $0x18] sm:$0xff]
          %v2265 = vld [vmem:[#allocation17 + $0x20] sm:$0xff]
          %v2266 = vld [vmem:[#allocation17 + $0x28] sm:$0xff]
          %v2267 = vld [vmem:[#allocation17 + $0x30] sm:$0xff]
          %v2268 = vld [vmem:[#allocation17 + $0x38] sm:$0xff]
          %v2269 = vld [vmem:[#allocation17 + $0x40] sm:$0xff]
          %v2270 = vld [vmem:[#allocation17 + $0x48] sm:$0xff]
          %v2271 = vld [vmem:[#allocation17 + $0x50] sm:$0xff]
          %v2272 = vld [vmem:[#allocation17 + $0x58] sm:$0xff]
          %v2273 = vld [vmem:[#allocation17 + $0x60] sm:$0xff]
          %v2274 = vld [vmem:[#allocation17 + $0x68] sm:$0xff]
          %v2275 = vld [vmem:[#allocation17 + $0x70] sm:$0xff]
          %v2276 = vld [vmem:[#allocation17 + $0x78] sm:$0xff]
          %v2277 = vld [vmem:[%s8] sm:$0x1]
          %v2279 = vperm.slane %v2277, 0
          %2281 = vmatpush.msra.mxu0 %v2276
          %2282 = vmatpush.msra.mxu0 %v2275
          %2283 = vmatpush.msra.mxu0 %v2274
          %2284 = vmatpush.msra.mxu0 %v2273
          %2285 = vmatpush.msra.mxu0 %v2272
          %2286 = vmatpush.msra.mxu0 %v2271
          %2287 = vmatpush.msra.mxu0 %v2270
          %2288 = vmatpush.msra.mxu0 %v2269
          %2289 = vmatpush.msra.mxu0 %v2268
          %2290 = vmatpush.msra.mxu0 %v2267
          %2291 = vmatpush.msra.mxu0 %v2266
          %2292 = vmatpush.msra.mxu0 %v2265
          %2293 = vmatpush.msra.mxu0 %v2264
          %2294 = vmatpush.msra.mxu0 %v2263
          %2295 = vmatpush.msra.mxu0 %v2262
          %2296 = vmatpush.msra.mxu0 %v2261
          %2297 = vmatmul.f32.gmra.mxu0 %v2260
          %v2298 = vpop.f32.mrf.mxu0
          %v2299 = vadd.f32 %v2279, %v2298
          %2300 = vdwg.mxu0
          %2301 = vst [vmem:[#allocation18] sm:$0xff] %v2299
        $region92: #{tpu_custom_call.1} parent=55 // pred_fallthru
          _
        // Predicated region
        $region93: #{tpu_custom_call.1} parent=55 // pred_check
          %p2302 = pneg %p234
        $region94: #{tpu_custom_call.1} parent=55 // pred_check_branch
          %2304 = sbr.rel (%p2302) target = $region96
        $region95: #{tpu_custom_call.1} parent=55 // pred_region
          %2306 = vsyncadd [#allocation8], 0
          %s2308 = sshll.u32 [#allocation18], 4
          %s2309 = int_to_ptr.vmem [resolvable:$true] %s2308
          %s2310 = sshll.u32 %s9, 4
          %s2311 = int_to_ptr.hbm [resolvable:$true] %s2310
          %2313 = dma.vmem_to_hbm [thread:$0]  %s2309, 128, %s2311, [#allocation8]
        $region96: #{tpu_custom_call.1} parent=55 // pred_fallthru
          _
        // Predicated region
        $region97: #{tpu_custom_call.1} parent=55 // pred_check
          %p2314 = pneg %p234
        $region98: #{tpu_custom_call.1} parent=55 // pred_check_branch
          %2316 = sbr.rel (%p2314) target = $region100
        $region99: #{tpu_custom_call.1} parent=55 // pred_region
          %2318 = dma.done [#allocation8], 128
        $region100: #{tpu_custom_call.1} parent=55 // pred_fallthru
          _
      $region56: #{tpu_custom_call.1} parent=5 // pred_fallthru
        _
      %p2319 = scmp.le.s32.totalorder 2, %s22
      // Predicated region
      $region101: #{tpu_custom_call.1} parent=5 // pred_check
        %p2320 = pneg %p2319
      $region102: #{tpu_custom_call.1} parent=5 // pred_check_branch
        %2322 = sbr.rel (%p2320) target = $region104
      $region103: #{tpu_custom_call.1} parent=5 // pred_region
        %s2323 = ssub.s32 %s22, 2
      $region104: #{tpu_custom_call.1} parent=5 // pred_fallthru
        _
    $region6: #{tpu_custom_call.1} parent=1 // loop_footer
      %s26 = sadd.s32 1, %s22
    $region7: #{tpu_custom_call.1} parent=1 // loop_footer_branch
      %21 = sbr.rel target = $region3
    $region8: #{tpu_custom_call.1} parent=1 // loop_exit
      _
    %2324 = vsyncpa [#allocation7], 1
    %s2325 = scalar_lea.sflag [#allocation7], 1
    %2326 = vsyncpa %s2325, 1
    %2327 = vsyncpa [#allocation10], 1
    %2328 = vsyncpa [#allocation13], 1
    %2329 = vsyncpa [#allocation16], 1
    %2330 = vsyncpa [#allocation8], 1
    %s2331 = scalar_lea.sflag [#allocation8], 1
    %2332 = vsyncpa %s2331, 1

</llo_original>
